<compile_context>
chip_gen: v5e
topology: v5e:2x2
jax: 0.10.0
libtpu: 0.0.40
codegen_flags: <defaults>
</compile_context>

<pallas_src>
import math
import jax
import jax.numpy as jnp
from jax import lax
from jax.experimental import pallas as pl
from jax.experimental.pallas import tpu as pltpu

# ---------------- small, synthetic hyper-parameters ----------------
B = 2            # batch
N = 8            # num nodes
T_IN = 4         # input timesteps
T_OUT = 4        # prediction horizon (output_fc out dim)
F_FEAT = 9       # raw features: [pa_idx, unused, cxt0, cxt1, time0..time4]
HID = 32         # hid_dim
LATENT = 4       # latend_num (SCConv clusters)
TRAIN_NUM = 4    # labelled nodes
ALPHA = 0.2      # LeakyReLU slope
N_CLASS = 50     # w_pred output size / PA one-hot size
TIME_SIZES = (12, 31, 24, 4, 7)
TRAINING = False  # eval mode

BN = B * N
H2 = 2 * HID
GRU_IN = 2 * HID + N_CLASS + 20   # 134
OUT_PAD = 128                      # lane-dense output slab width


def _leaky(x, alpha=ALPHA):
    return jnp.where(x > 0, x, alpha * x)


# ---------------- in-kernel GAT attention (single head, batched block-diag) --
# TODO(synk): original GAT class body not provided; stand-in single-head GAT
# with masked softmax attention, shape-consistent with SHARE.forward usage.
def _gat_attention(x, w, a_src, a_dst, adj_big):
    """x: (BN,Fin)  w: (Fin,H)  a_src: (H,1)  a_dst: (1,H)  adj_big: (BN,BN)."""
    wh = jnp.dot(x, w, preferred_element_type=jnp.float32)            # (BN,H)
    src = jnp.dot(wh, a_src, preferred_element_type=jnp.float32)      # (BN,1)
    dst = lax.dot_general(a_dst, wh, (((1,), (1,)), ((), ())),
                          preferred_element_type=jnp.float32)         # (1,BN)
    e = _leaky(src + dst)                                             # (BN,BN)
    mask = adj_big > 0
    e = jnp.where(mask, e, jnp.full_like(e, -1e30))
    e = e - jnp.max(e, axis=-1, keepdims=True)
    p = jnp.exp(e) * mask.astype(jnp.float32)
    denom = jnp.sum(p, axis=-1, keepdims=True)
    attn = p * pl.reciprocal(jnp.maximum(denom, 1e-12), approx=True)
    return attn, wh


# ---------------- fused per-sequence kernel ----------------
def _share_kernel(
    xc_ref, xpa_ref, xt_ref, h0_ref, mask_ref,
    adj_ref, adjl_ref, pbig_ref,
    wpred_w_ref, wpred_b_ref,
    prop_w_ref, prop_as_ref, prop_ad_ref,
    cxt_w1_ref, cxt_as1_ref, cxt_ad1_ref,
    cxt_w2_ref, cxt_as2_ref, cxt_ad2_ref,
    sc_w_cxt_ref, sc_w_py_ref, sc_b_ref,
    gru_wih_cxt_ref, gru_wih_py_ref, gru_wih_sc_ref, gru_wih_time_ref,
    gru_whh_ref, gru_bih_ref, gru_bhh_ref,
    out_w_ref, out_b_ref,
    out_ref, loss_ref,
    h_scr,
):
    t = pl.program_id(0)
    is_last = t == pl.num_programs(0) - 1

    @pl.when(t == 0)
    def _():
        h_scr[...] = h0_ref[...]

    h = h_scr[...]                       # (BN, 2H)
    x_cxt = xc_ref[0]                    # (BN, 2)
    x_pa = xpa_ref[0]                    # (BN, 50)
    x_time = xt_ref[0]                   # (BN, 20)
    train_mask = mask_ref[...] > 0.0     # (BN, 1) bool, True on labelled rows

    # --- y_t = softmax(w_pred(h_t)) (exact divide: feeds BCE log(1-p)) ---
    logits = jnp.dot(h, wpred_w_ref[...],
                     preferred_element_type=jnp.float32) + wpred_b_ref[...]
    logits = logits - jnp.max(logits, axis=-1, keepdims=True)
    exps = jnp.exp(logits)
    y_t = exps / jnp.sum(exps, axis=-1, keepdims=True)                # (BN,50)

    # --- PropConv: 1-hop GAT over labelled adjacency, propagates X_pa ---
    attn_p, _ = _gat_attention(x_cxt, prop_w_ref[...], prop_as_ref[...],
                               prop_ad_ref[...], adjl_ref[...])
    y_att = jnp.dot(attn_p, x_pa, preferred_element_type=jnp.float32)  # (BN,50)

    # last-step clamp of the labelled rows (as in the reference forward)
    clamped = jnp.where(y_att < 1.0, y_att, 1.0 - 1e-8)
    y_att = jnp.where(jnp.logical_and(is_last, train_mask), clamped, y_att)

    # --- entropy-weighted pseudo-label fusion ---
    ent_t = jnp.exp(jnp.sum(y_t * jnp.log(jnp.where(y_t > 1e-8, y_t, 1e-8)),
                            axis=-1, keepdims=True))
    ent_a = jnp.exp(jnp.sum(y_att * jnp.log(jnp.where(y_att > 1e-8, y_att, 1e-8)),
                            axis=-1, keepdims=True))
    ent_a = jnp.where(jnp.sum(y_att, axis=-1, keepdims=True) > 1e-8, ent_a, 0.0)
    pseudo_y = (ent_t * y_t + ent_a * y_att) * pl.reciprocal(ent_t + ent_a,
                                                             approx=True)
    if not TRAINING:   # eval branch: labelled rows take ground-truth one-hot
        pseudo_y = jnp.where(train_mask, x_pa, pseudo_y)

    # --- CxtConv: 2-hop GAT over full adjacency ---
    attn1, wh1 = _gat_attention(x_cxt, cxt_w1_ref[...], cxt_as1_ref[...],
                                cxt_ad1_ref[...], adj_ref[...])
    h_cxt = _leaky(jnp.dot(attn1, wh1, preferred_element_type=jnp.float32))
    attn2, wh2 = _gat_attention(h_cxt, cxt_w2_ref[...], cxt_as2_ref[...],
                                cxt_ad2_ref[...], adj_ref[...])
    h_cxt = _leaky(jnp.dot(attn2, wh2, preferred_element_type=jnp.float32))

    # --- SCConv (soft-cluster graph conv stand-in):
    #     h_sc = leaky(P_big @ ([h_cxt|pseudo_y] @ W) + b)
    #     (weights pre-split into row blocks -> no in-kernel lane concat)
    # TODO(synk): original SCConv class body not provided; stand-in semantics.
    xw = (jnp.dot(h_cxt, sc_w_cxt_ref[...], preferred_element_type=jnp.float32)
          + jnp.dot(pseudo_y, sc_w_py_ref[...], preferred_element_type=jnp.float32))
    h_sc = _leaky(jnp.dot(pbig_ref[...], xw,
                          preferred_element_type=jnp.float32) + sc_b_ref[...])

    # --- GRUCell (PyTorch gate order r, z, n), fused gate matmuls ---
    # x-side weight pre-split along rows per input block: no lane concat.
    gi = (jnp.dot(h_cxt, gru_wih_cxt_ref[...], preferred_element_type=jnp.float32)
          + jnp.dot(pseudo_y, gru_wih_py_ref[...], preferred_element_type=jnp.float32)
          + jnp.dot(h_sc, gru_wih_sc_ref[...], preferred_element_type=jnp.float32)
          + jnp.dot(x_time, gru_wih_time_ref[...], preferred_element_type=jnp.float32)
          + gru_bih_ref[...])                                          # (BN,192)
    gh = jnp.dot(h, gru_whh_ref[...],
                 preferred_element_type=jnp.float32) + gru_bhh_ref[...]  # (BN,192)
    i_r, i_z, i_n = gi[:, :H2], gi[:, H2:2 * H2], gi[:, 2 * H2:]
    h_r, h_z, h_n = gh[:, :H2], gh[:, H2:2 * H2], gh[:, 2 * H2:]
    r = jax.nn.sigmoid(i_r + h_r)
    z = jax.nn.sigmoid(i_z + h_z)
    n_g = jnp.tanh(i_n + r * h_n)
    h_new = (1.0 - z) * n_g + z * h
    h_scr[...] = h_new

    # --- last step: BCE loss on labelled rows + sigmoid output head ---
    @pl.when(is_last)
    def _():
        # lane-dense (BN,128) unmasked store; wrapper slices [:, :T_OUT]
        o = jnp.dot(h_new, out_w_ref[...],
                    preferred_element_type=jnp.float32) + out_b_ref[...]
        out_ref[...] = jax.nn.sigmoid(o)

        count = jnp.float32(B * TRAIN_NUM * N_CLASS)

        def masked_bce(pred):
            # F.binary_cross_entropy (mean), PyTorch log clamp at -100
            logp = jnp.maximum(jnp.log(pred), -100.0)
            log1mp = jnp.maximum(jnp.log(1.0 - pred), -100.0)
            term = -(x_pa * logp + (1.0 - x_pa) * log1mp)
            term = jnp.where(train_mask, term, 0.0)
            return jnp.sum(term) / count

        ce = masked_bce(y_t) + masked_bce(y_att)
        loss_ref[...] = jnp.broadcast_to(ce, (1, 128)).astype(jnp.float32)


# ---------------- parameters ----------------
def xavier_uniform(key, shape, gain=math.sqrt(2.0)):
    fan_in = shape[-2] if len(shape) > 1 else 1
    fan_out = shape[-1]
    bound = gain * math.sqrt(6.0 / (fan_in + fan_out))
    return jax.random.uniform(key, shape, jnp.float32, -bound, bound)


def init_params(key):
    keys = iter(jax.random.split(key, 40))
    p = {}
    p["time_emb"] = [xavier_uniform(next(keys), (s, 4)) for s in TIME_SIZES]
    p["w_pred_w"] = xavier_uniform(next(keys), (H2, N_CLASS))
    p["w_pred_b"] = jnp.zeros((1, N_CLASS), jnp.float32)
    p["out_w"] = xavier_uniform(next(keys), (H2, T_OUT))
    p["out_b"] = jnp.zeros((1, T_OUT), jnp.float32)
    # CxtConv: 2-hop GAT  (2 -> HID -> HID); attention vectors pre-shaped for matmul
    p["cxt_w1"] = xavier_uniform(next(keys), (2, HID))
    p["cxt_a_src1"] = xavier_uniform(next(keys), (HID, 1))
    p["cxt_a_dst1"] = xavier_uniform(next(keys), (1, HID))
    p["cxt_w2"] = xavier_uniform(next(keys), (HID, HID))
    p["cxt_a_src2"] = xavier_uniform(next(keys), (HID, 1))
    p["cxt_a_dst2"] = xavier_uniform(next(keys), (1, HID))
    # PropConv: 1-hop GAT over labelled adjacency
    p["prop_w"] = xavier_uniform(next(keys), (2, HID))
    p["prop_a_src"] = xavier_uniform(next(keys), (HID, 1))
    p["prop_a_dst"] = xavier_uniform(next(keys), (1, HID))
    # SCConv: (HID + 50) -> HID
    p["sc_w"] = xavier_uniform(next(keys), (HID + N_CLASS, HID))
    p["sc_b"] = jnp.zeros((1, HID), jnp.float32)
    # GRUCell: gates concatenated column-wise (r|z|n)
    p["gru_wih"] = xavier_uniform(next(keys), (GRU_IN, 3 * H2))
    p["gru_whh"] = xavier_uniform(next(keys), (H2, 3 * H2))
    p["gru_bih"] = jnp.zeros((1, 3 * H2), jnp.float32)
    p["gru_bhh"] = jnp.zeros((1, 3 * H2), jnp.float32)
    return p


# ---------------- SHARE forward (single fused pallas_call) ----------------
def share_forward(params, adjs, X, h_t, pa_onehot):
    adj, adj_label, adj_dense = adjs
    b, n, t, _ = X.shape
    bn = b * n

    # FeatureEmb (embedding gathers / one-hot scatter are glue; plain JAX)
    X_time = jnp.concatenate(
        [jnp.take(tab, X[..., i + 4].astype(jnp.int32), axis=0)
         for i, tab in enumerate(params["time_emb"])], axis=-1)          # (B,N,T,20)
    X_cxt = X[..., 2:4]                                                  # (B,N,T,2)
    onehot = jax.nn.one_hot(X[..., 0].astype(jnp.int32), N_CLASS, dtype=jnp.float32)
    X_pa = pa_onehot * (1.0 - onehot) + onehot                           # scatter_(-1, idx, 1.0)

    # time-major, batch-flattened layouts for the fused kernel
    def to_tbn(a):
        return jnp.transpose(a, (2, 0, 1, 3)).reshape(t, bn, a.shape[-1])
    xc = to_tbn(X_cxt)       # (T, BN, 2)
    xpa = to_tbn(X_pa)       # (T, BN, 50)
    xt = to_tbn(X_time)      # (T, BN, 20)

    # constant graph operators, block-diagonal over the batch (shared graph),
    # hoisted out of the time loop
    eye_b = jnp.eye(b, dtype=jnp.float32)
    adj_big = jnp.kron(eye_b, adj)                                       # (BN,BN)
    adjl_big = jnp.kron(eye_b, adj_label)                                # (BN,BN)
    p_big = jnp.kron(eye_b, jnp.dot(adj_dense, adj_dense.T))             # (BN,BN)
    train_mask = jnp.tile(
        (jnp.arange(n) < TRAIN_NUM).astype(jnp.float32), (b,)).reshape(bn, 1)

    h0 = h_t.reshape(bn, H2)

    # pre-split weights (wrapper-side, zero runtime cost in-kernel)
    sc_w_cxt = params["sc_w"][:HID]                                      # (32, 32)
    sc_w_py = params["sc_w"][HID:]                                       # (50, 32)
    wih = params["gru_wih"]
    gru_wih_cxt = wih[:HID]                                              # (32, 192)
    gru_wih_py = wih[HID:HID + N_CLASS]                                  # (50, 192)
    gru_wih_sc = wih[HID + N_CLASS:HID + N_CLASS + HID]                  # (32, 192)
    gru_wih_time = wih[HID + N_CLASS + HID:]                             # (20, 192)
    # lane-dense output head (pad to 128 columns, slice after the call)
    out_w_pad = jnp.concatenate(
        [params["out_w"], jnp.zeros((H2, OUT_PAD - T_OUT), jnp.float32)], axis=1)
    out_b_pad = jnp.concatenate(
        [params["out_b"], jnp.zeros((1, OUT_PAD - T_OUT), jnp.float32)], axis=1)

    inputs = (
        xc, xpa, xt, h0, train_mask, adj_big, adjl_big, p_big,
        params["w_pred_w"], params["w_pred_b"],
        params["prop_w"], params["prop_a_src"], params["prop_a_dst"],
        params["cxt_w1"], params["cxt_a_src1"], params["cxt_a_dst1"],
        params["cxt_w2"], params["cxt_a_src2"], params["cxt_a_dst2"],
        sc_w_cxt, sc_w_py, params["sc_b"],
        gru_wih_cxt, gru_wih_py, gru_wih_sc, gru_wih_time,
        params["gru_whh"], params["gru_bih"], params["gru_bhh"],
        out_w_pad, out_b_pad,
    )

    def tspec(d):
        return pl.BlockSpec((1, bn, d), lambda i: (i, 0, 0))

    def cspec(arr):
        return pl.BlockSpec(arr.shape, lambda i: (0, 0))

    in_specs = [tspec(2), tspec(N_CLASS), tspec(20)] + [cspec(a) for a in inputs[3:]]

    out_specs = (
        pl.BlockSpec((bn, OUT_PAD), lambda i: (0, 0)),
        pl.BlockSpec((1, 128), lambda i: (0, 0)),
    )
    out_shapes = (
        jax.ShapeDtypeStruct((bn, OUT_PAD), jnp.float32),
        jax.ShapeDtypeStruct((1, 128), jnp.float32),
    )

    out_pad, loss = pl.pallas_call(
        _share_kernel,
        grid_spec=pltpu.PrefetchScalarGridSpec(
            num_scalar_prefetch=0,
            grid=(t,),
            in_specs=in_specs,
            out_specs=out_specs,
            scratch_shapes=[pltpu.VMEM((bn, H2), jnp.float32)],
        ),
        out_shape=out_shapes,
        compiler_params=pltpu.CompilerParams(
            dimension_semantics=("arbitrary",)),   # h_t carries across T
    )(*inputs)

    out = out_pad[:, :T_OUT].reshape(b, n, T_OUT)
    return out, loss[0, 0]


# ---------------- driver ----------------
if __name__ == "__main__":
    key = jax.random.PRNGKey(0)
    k_par, k_x, k_cxt, k_adj, k_assign, k_h = jax.random.split(key, 6)
    params = init_params(k_par)

    ks = jax.random.split(k_x, 8)
    pa_idx = jax.random.randint(ks[0], (B, N, T_IN, 1), 0, N_CLASS).astype(jnp.float32)
    unused = jnp.zeros((B, N, T_IN, 1), jnp.float32)
    cxt = jax.random.normal(k_cxt, (B, N, T_IN, 2), jnp.float32)
    times = [jax.random.randint(ks[i + 1], (B, N, T_IN, 1), 0,
                                TIME_SIZES[i]).astype(jnp.float32) for i in range(5)]
    X = jnp.concatenate([pa_idx, unused, cxt] + times, axis=-1)          # (B, N, T, 9)

    pa_onehot = jnp.zeros((B, N, T_IN, N_CLASS), jnp.float32)
    h_t = 0.1 * jax.random.normal(k_h, (B, N, H2), jnp.float32)

    rand_adj = jax.random.uniform(k_adj, (N, N))
    adj = jnp.maximum((rand_adj > 0.5).astype(jnp.float32),
                      jnp.eye(N, dtype=jnp.float32))                     # self loops
    label_mask = (jnp.arange(N) < TRAIN_NUM).astype(jnp.float32)
    adj_label = adj * label_mask[None, :]                                # edges into labelled nodes only
    adj_dense = jax.nn.softmax(jax.random.normal(k_assign, (N, LATENT)), axis=-1)

    fwd = jax.jit(share_forward)
    out, ce = fwd(params, (adj, adj_label, adj_dense), X, h_t, pa_onehot)
    jax.block_until_ready((out, ce))
    assert out.shape == (B, N, T_OUT) and ce.shape == ()
    assert bool(jnp.all(jnp.isfinite(out))) and bool(jnp.isfinite(ce))
    print("KERNEL_OK")
</pallas_src>

<mosaic_0001>
module attributes {stable_mosaic.version = 11 : i64} {
  func.func @_share_kernel(%arg0: i32, %arg1: memref<1x16x2xf32, #tpu.memory_space<vmem>>, %arg2: memref<1x16x50xf32, #tpu.memory_space<vmem>>, %arg3: memref<1x16x20xf32, #tpu.memory_space<vmem>>, %arg4: memref<16x64xf32, #tpu.memory_space<vmem>>, %arg5: memref<16x1xf32, #tpu.memory_space<vmem>>, %arg6: memref<16x16xf32, #tpu.memory_space<vmem>>, %arg7: memref<16x16xf32, #tpu.memory_space<vmem>>, %arg8: memref<16x16xf32, #tpu.memory_space<vmem>>, %arg9: memref<64x50xf32, #tpu.memory_space<vmem>>, %arg10: memref<1x50xf32, #tpu.memory_space<vmem>>, %arg11: memref<2x32xf32, #tpu.memory_space<vmem>>, %arg12: memref<32x1xf32, #tpu.memory_space<vmem>>, %arg13: memref<1x32xf32, #tpu.memory_space<vmem>>, %arg14: memref<2x32xf32, #tpu.memory_space<vmem>>, %arg15: memref<32x1xf32, #tpu.memory_space<vmem>>, %arg16: memref<1x32xf32, #tpu.memory_space<vmem>>, %arg17: memref<32x32xf32, #tpu.memory_space<vmem>>, %arg18: memref<32x1xf32, #tpu.memory_space<vmem>>, %arg19: memref<1x32xf32, #tpu.memory_space<vmem>>, %arg20: memref<32x32xf32, #tpu.memory_space<vmem>>, %arg21: memref<50x32xf32, #tpu.memory_space<vmem>>, %arg22: memref<1x32xf32, #tpu.memory_space<vmem>>, %arg23: memref<32x192xf32, #tpu.memory_space<vmem>>, %arg24: memref<50x192xf32, #tpu.memory_space<vmem>>, %arg25: memref<32x192xf32, #tpu.memory_space<vmem>>, %arg26: memref<20x192xf32, #tpu.memory_space<vmem>>, %arg27: memref<64x192xf32, #tpu.memory_space<vmem>>, %arg28: memref<1x192xf32, #tpu.memory_space<vmem>>, %arg29: memref<1x192xf32, #tpu.memory_space<vmem>>, %arg30: memref<64x128xf32, #tpu.memory_space<vmem>>, %arg31: memref<1x128xf32, #tpu.memory_space<vmem>>, %arg32: memref<16x128xf32, #tpu.memory_space<vmem>>, %arg33: memref<1x128xf32, #tpu.memory_space<vmem>>, %arg34: memref<16x64xf32, #tpu.memory_space<vmem>>) attributes {dimension_semantics = [#tpu.dimension_semantics<arbitrary>], iteration_bounds = array<i64: 4>, scalar_prefetch = 0 : i64, scratch_operands = 1 : i64, tpu.core_type = #tpu.core_type<tc>, window_params = [{transform_indices = @transform_0, window_bounds = array<i64: 1, 16, 2>}, {transform_indices = @transform_1, window_bounds = array<i64: 1, 16, 50>}, {transform_indices = @transform_2, window_bounds = array<i64: 1, 16, 20>}, {pipeline_mode = #tpu.pipeline_mode<synchronous>, transform_indices = @transform_3, window_bounds = array<i64: 16, 64>}, {pipeline_mode = #tpu.pipeline_mode<synchronous>, transform_indices = @transform_4, window_bounds = array<i64: 16, 1>}, {pipeline_mode = #tpu.pipeline_mode<synchronous>, transform_indices = @transform_5, window_bounds = array<i64: 16, 16>}, {pipeline_mode = #tpu.pipeline_mode<synchronous>, transform_indices = @transform_6, window_bounds = array<i64: 16, 16>}, {pipeline_mode = #tpu.pipeline_mode<synchronous>, transform_indices = @transform_7, window_bounds = array<i64: 16, 16>}, {pipeline_mode = #tpu.pipeline_mode<synchronous>, transform_indices = @transform_8, window_bounds = array<i64: 64, 50>}, {pipeline_mode = #tpu.pipeline_mode<synchronous>, transform_indices = @transform_9, window_bounds = array<i64: 1, 50>}, {pipeline_mode = #tpu.pipeline_mode<synchronous>, transform_indices = @transform_10, window_bounds = array<i64: 2, 32>}, {pipeline_mode = #tpu.pipeline_mode<synchronous>, transform_indices = @transform_11, window_bounds = array<i64: 32, 1>}, {pipeline_mode = #tpu.pipeline_mode<synchronous>, transform_indices = @transform_12, window_bounds = array<i64: 1, 32>}, {pipeline_mode = #tpu.pipeline_mode<synchronous>, transform_indices = @transform_13, window_bounds = array<i64: 2, 32>}, {pipeline_mode = #tpu.pipeline_mode<synchronous>, transform_indices = @transform_14, window_bounds = array<i64: 32, 1>}, {pipeline_mode = #tpu.pipeline_mode<synchronous>, transform_indices = @transform_15, window_bounds = array<i64: 1, 32>}, {pipeline_mode = #tpu.pipeline_mode<synchronous>, transform_indices = @transform_16, window_bounds = array<i64: 32, 32>}, {pipeline_mode = #tpu.pipeline_mode<synchronous>, transform_indices = @transform_17, window_bounds = array<i64: 32, 1>}, {pipeline_mode = #tpu.pipeline_mode<synchronous>, transform_indices = @transform_18, window_bounds = array<i64: 1, 32>}, {pipeline_mode = #tpu.pipeline_mode<synchronous>, transform_indices = @transform_19, window_bounds = array<i64: 32, 32>}, {pipeline_mode = #tpu.pipeline_mode<synchronous>, transform_indices = @transform_20, window_bounds = array<i64: 50, 32>}, {pipeline_mode = #tpu.pipeline_mode<synchronous>, transform_indices = @transform_21, window_bounds = array<i64: 1, 32>}, {pipeline_mode = #tpu.pipeline_mode<synchronous>, transform_indices = @transform_22, window_bounds = array<i64: 32, 192>}, {pipeline_mode = #tpu.pipeline_mode<synchronous>, transform_indices = @transform_23, window_bounds = array<i64: 50, 192>}, {pipeline_mode = #tpu.pipeline_mode<synchronous>, transform_indices = @transform_24, window_bounds = array<i64: 32, 192>}, {pipeline_mode = #tpu.pipeline_mode<synchronous>, transform_indices = @transform_25, window_bounds = array<i64: 20, 192>}, {pipeline_mode = #tpu.pipeline_mode<synchronous>, transform_indices = @transform_26, window_bounds = array<i64: 64, 192>}, {pipeline_mode = #tpu.pipeline_mode<synchronous>, transform_indices = @transform_27, window_bounds = array<i64: 1, 192>}, {pipeline_mode = #tpu.pipeline_mode<synchronous>, transform_indices = @transform_28, window_bounds = array<i64: 1, 192>}, {pipeline_mode = #tpu.pipeline_mode<synchronous>, transform_indices = @transform_29, window_bounds = array<i64: 64, 128>}, {pipeline_mode = #tpu.pipeline_mode<synchronous>, transform_indices = @transform_30, window_bounds = array<i64: 1, 128>}, {pipeline_mode = #tpu.pipeline_mode<synchronous>, transform_indices = @transform_31, window_bounds = array<i64: 16, 128>}, {pipeline_mode = #tpu.pipeline_mode<synchronous>, transform_indices = @transform_32, window_bounds = array<i64: 1, 128>}]} {
    %c3_i32 = arith.constant 3 : i32
    %0 = arith.cmpi eq, %arg0, %c3_i32 : i32
    %c0_i32 = arith.constant 0 : i32
    %1 = arith.cmpi eq, %arg0, %c0_i32 : i32
    %2 = arith.extui %1 : i1 to i32
    %c0_i32_0 = arith.constant 0 : i32
    %3 = arith.cmpi ne, %2, %c0_i32_0 : i32
    scf.if %3 {
      %c0_130 = arith.constant 0 : index
      %c0_131 = arith.constant 0 : index
      %251 = vector.load %arg4[%c0_130, %c0_131] : memref<16x64xf32, #tpu.memory_space<vmem>>, vector<16x64xf32>
      %c0_132 = arith.constant 0 : index
      %c0_133 = arith.constant 0 : index
      %252 = vector.load %arg34[%c0_132, %c0_133] : memref<16x64xf32, #tpu.memory_space<vmem>>, vector<16x64xf32>
      tpu.vector_store %arg34[%c0_132, %c0_133], %251 {strides = array<i32>} : memref<16x64xf32, #tpu.memory_space<vmem>>, vector<16x64xf32>,
    } else {
    }
    %c0 = arith.constant 0 : index
    %c0_1 = arith.constant 0 : index
    %4 = vector.load %arg34[%c0, %c0_1] : memref<16x64xf32, #tpu.memory_space<vmem>>, vector<16x64xf32>
    %c0_2 = arith.constant 0 : index
    %c0_3 = arith.constant 0 : index
    %c0_4 = arith.constant 0 : index
    %5 = vector.load %arg1[%c0_2, %c0_3, %c0_4] : memref<1x16x2xf32, #tpu.memory_space<vmem>>, vector<1x16x2xf32>
    %6 = vector.shape_cast %5 : vector<1x16x2xf32> to vector<16x2xf32>
    %c0_5 = arith.constant 0 : index
    %c0_6 = arith.constant 0 : index
    %c0_7 = arith.constant 0 : index
    %7 = vector.load %arg2[%c0_5, %c0_6, %c0_7] : memref<1x16x50xf32, #tpu.memory_space<vmem>>, vector<1x16x50xf32>
    %8 = vector.shape_cast %7 : vector<1x16x50xf32> to vector<16x50xf32>
    %c0_8 = arith.constant 0 : index
    %c0_9 = arith.constant 0 : index
    %c0_10 = arith.constant 0 : index
    %9 = vector.load %arg3[%c0_8, %c0_9, %c0_10] : memref<1x16x20xf32, #tpu.memory_space<vmem>>, vector<1x16x20xf32>
    %10 = vector.shape_cast %9 : vector<1x16x20xf32> to vector<16x20xf32>
    %c0_11 = arith.constant 0 : index
    %c0_12 = arith.constant 0 : index
    %11 = vector.load %arg5[%c0_11, %c0_12] : memref<16x1xf32, #tpu.memory_space<vmem>>, vector<16x1xf32>
    %cst = arith.constant 0.000000e+00 : f32
    %12 = vector.broadcast %cst : f32 to vector<16x1xf32>
    %13 = arith.cmpf ogt, %11, %12 : vector<16x1xf32>
    %c0_13 = arith.constant 0 : index
    %c0_14 = arith.constant 0 : index
    %14 = vector.load %arg9[%c0_13, %c0_14] : memref<64x50xf32, #tpu.memory_space<vmem>>, vector<64x50xf32>
    %cst_15 = arith.constant dense<0.000000e+00> : vector<16x50xf32>
    %15 = tpu.matmul %4, %14, %cst_15 {dimension_numbers = #tpu.dot_dimension_numbers<[1], [0], [0], [1], [0, 0, 1, 1], [], []>} : vector<16x64xf32>, vector<64x50xf32>, vector<16x50xf32> -> vector<16x50xf32>
    %c0_16 = arith.constant 0 : index
    %c0_17 = arith.constant 0 : index
    %16 = vector.load %arg10[%c0_16, %c0_17] : memref<1x50xf32, #tpu.memory_space<vmem>>, vector<1x50xf32>
    %17 = vector.broadcast %16 : vector<1x50xf32> to vector<16x50xf32>
    %18 = arith.addf %15, %17 : vector<16x50xf32>
    %cst_18 = arith.constant dense<0xFF800000> : vector<16xf32>
    %19 = vector.multi_reduction <maximumf>, %18, %cst_18 [1] : vector<16x50xf32> to vector<16xf32>
    %20 = vector.shape_cast %19 : vector<16xf32> to vector<16x1xf32>
    %21 = vector.broadcast %20 : vector<16x1xf32> to vector<16x50xf32>
    %22 = arith.subf %18, %21 : vector<16x50xf32>
    %23 = math.exp %22 : vector<16x50xf32>
    %cst_19 = arith.constant dense<0.000000e+00> : vector<16xf32>
    %24 = vector.multi_reduction <add>, %23, %cst_19 [1] : vector<16x50xf32> to vector<16xf32>
    %25 = vector.shape_cast %24 : vector<16xf32> to vector<16x1xf32>
    %26 = vector.broadcast %25 : vector<16x1xf32> to vector<16x50xf32>
    %27 = arith.divf %23, %26 : vector<16x50xf32>
    %c0_20 = arith.constant 0 : index
    %c0_21 = arith.constant 0 : index
    %28 = vector.load %arg11[%c0_20, %c0_21] : memref<2x32xf32, #tpu.memory_space<vmem>>, vector<2x32xf32>
    %c0_22 = arith.constant 0 : index
    %c0_23 = arith.constant 0 : index
    %29 = vector.load %arg12[%c0_22, %c0_23] : memref<32x1xf32, #tpu.memory_space<vmem>>, vector<32x1xf32>
    %c0_24 = arith.constant 0 : index
    %c0_25 = arith.constant 0 : index
    %30 = vector.load %arg13[%c0_24, %c0_25] : memref<1x32xf32, #tpu.memory_space<vmem>>, vector<1x32xf32>
    %c0_26 = arith.constant 0 : index
    %c0_27 = arith.constant 0 : index
    %31 = vector.load %arg7[%c0_26, %c0_27] : memref<16x16xf32, #tpu.memory_space<vmem>>, vector<16x16xf32>
    %cst_28 = arith.constant dense<0.000000e+00> : vector<16x32xf32>
    %32 = tpu.matmul %6, %28, %cst_28 {dimension_numbers = #tpu.dot_dimension_numbers<[1], [0], [0], [1], [0, 0, 1, 1], [], []>} : vector<16x2xf32>, vector<2x32xf32>, vector<16x32xf32> -> vector<16x32xf32>
    %cst_29 = arith.constant dense<0.000000e+00> : vector<16x1xf32>
    %33 = tpu.matmul %32, %29, %cst_29 {dimension_numbers = #tpu.dot_dimension_numbers<[1], [0], [0], [1], [0, 0, 1, 1], [], []>} : vector<16x32xf32>, vector<32x1xf32>, vector<16x1xf32> -> vector<16x1xf32>
    %cst_30 = arith.constant dense<0.000000e+00> : vector<1x16xf32>
    %34 = tpu.matmul %30, %32, %cst_30 {dimension_numbers = #tpu.dot_dimension_numbers<[1], [1], [0], [0], [0, 0, 1, 0], [], []>} : vector<1x32xf32>, vector<16x32xf32>, vector<1x16xf32> -> vector<1x16xf32>
    %35 = vector.broadcast %33 : vector<16x1xf32> to vector<16x16xf32>
    %36 = vector.broadcast %34 : vector<1x16xf32> to vector<16x16xf32>
    %37 = arith.addf %35, %36 : vector<16x16xf32>
    %cst_31 = arith.constant 0.000000e+00 : f32
    %38 = vector.broadcast %cst_31 : f32 to vector<16x16xf32>
    %39 = arith.cmpf ogt, %37, %38 : vector<16x16xf32>
    %cst_32 = arith.constant 2.000000e-01 : f32
    %40 = vector.broadcast %cst_32 : f32 to vector<16x16xf32>
    %41 = arith.mulf %40, %37 : vector<16x16xf32>
    %42 = arith.select %39, %37, %41 : vector<16x16xi1>, vector<16x16xf32>
    %cst_33 = arith.constant 0.000000e+00 : f32
    %43 = vector.broadcast %cst_33 : f32 to vector<16x16xf32>
    %44 = arith.cmpf ogt, %31, %43 : vector<16x16xf32>
    %cst_34 = arith.constant -1.000000e+30 : f32
    %45 = vector.broadcast %cst_34 : f32 to vector<16x16xf32>
    %46 = arith.select %44, %42, %45 : vector<16x16xi1>, vector<16x16xf32>
    %cst_35 = arith.constant dense<0xFF800000> : vector<16xf32>
    %47 = vector.multi_reduction <maximumf>, %46, %cst_35 [1] : vector<16x16xf32> to vector<16xf32>
    %48 = vector.shape_cast %47 : vector<16xf32> to vector<16x1xf32>
    %49 = vector.broadcast %48 : vector<16x1xf32> to vector<16x16xf32>
    %50 = arith.subf %46, %49 : vector<16x16xf32>
    %51 = math.exp %50 : vector<16x16xf32>
    %52 = arith.extui %44 : vector<16x16xi1> to vector<16x16xi32>
    %53 = arith.sitofp %52 : vector<16x16xi32> to vector<16x16xf32>
    %54 = arith.mulf %51, %53 : vector<16x16xf32>
    %cst_36 = arith.constant dense<0.000000e+00> : vector<16xf32>
    %55 = vector.multi_reduction <add>, %54, %cst_36 [1] : vector<16x16xf32> to vector<16xf32>
    %56 = vector.shape_cast %55 : vector<16xf32> to vector<16x1xf32>
    %cst_37 = arith.constant 9.99999996E-13 : f32
    %57 = vector.broadcast %cst_37 : f32 to vector<16x1xf32>
    %58 = arith.maximumf %56, %57 : vector<16x1xf32>
    %59 = tpu.reciprocal %58 {approx = true} : vector<16x1xf32> -> vector<16x1xf32>
    %60 = vector.broadcast %59 : vector<16x1xf32> to vector<16x16xf32>
    %61 = arith.mulf %54, %60 : vector<16x16xf32>
    %cst_38 = arith.constant dense<0.000000e+00> : vector<16x50xf32>
    %62 = tpu.matmul %61, %8, %cst_38 {dimension_numbers = #tpu.dot_dimension_numbers<[1], [0], [0], [1], [0, 0, 1, 1], [], []>} : vector<16x16xf32>, vector<16x50xf32>, vector<16x50xf32> -> vector<16x50xf32>
    %cst_39 = arith.constant 1.000000e+00 : f32
    %63 = vector.broadcast %cst_39 : f32 to vector<16x50xf32>
    %64 = arith.cmpf olt, %62, %63 : vector<16x50xf32>
    %cst_40 = arith.constant 1.000000e+00 : f32
    %65 = vector.broadcast %cst_40 : f32 to vector<16x50xf32>
    %66 = arith.select %64, %62, %65 : vector<16x50xi1>, vector<16x50xf32>
    %67 = vector.broadcast %0 : i1 to vector<16x1xi1>
    %68 = arith.andi %67, %13 : vector<16x1xi1>
    %69 = vector.shape_cast %68 : vector<16x1xi1> to vector<16x1xi1>
    %70 = vector.broadcast %69 : vector<16x1xi1> to vector<16x50xi1>
    %71 = arith.select %70, %66, %62 : vector<16x50xi1>, vector<16x50xf32>
    %cst_41 = arith.constant 9.99999993E-9 : f32
    %72 = vector.broadcast %cst_41 : f32 to vector<16x50xf32>
    %73 = arith.cmpf ogt, %27, %72 : vector<16x50xf32>
    %cst_42 = arith.constant 9.99999993E-9 : f32
    %74 = vector.broadcast %cst_42 : f32 to vector<16x50xf32>
    %75 = arith.select %73, %27, %74 : vector<16x50xi1>, vector<16x50xf32>
    %76 = math.log %75 : vector<16x50xf32>
    %77 = arith.mulf %27, %76 : vector<16x50xf32>
    %cst_43 = arith.constant dense<0.000000e+00> : vector<16xf32>
    %78 = vector.multi_reduction <add>, %77, %cst_43 [1] : vector<16x50xf32> to vector<16xf32>
    %79 = vector.shape_cast %78 : vector<16xf32> to vector<16x1xf32>
    %80 = math.exp %79 : vector<16x1xf32>
    %cst_44 = arith.constant 9.99999993E-9 : f32
    %81 = vector.broadcast %cst_44 : f32 to vector<16x50xf32>
    %82 = arith.cmpf ogt, %71, %81 : vector<16x50xf32>
    %cst_45 = arith.constant 9.99999993E-9 : f32
    %83 = vector.broadcast %cst_45 : f32 to vector<16x50xf32>
    %84 = arith.select %82, %71, %83 : vector<16x50xi1>, vector<16x50xf32>
    %85 = math.log %84 : vector<16x50xf32>
    %86 = arith.mulf %71, %85 : vector<16x50xf32>
    %cst_46 = arith.constant dense<0.000000e+00> : vector<16xf32>
    %87 = vector.multi_reduction <add>, %86, %cst_46 [1] : vector<16x50xf32> to vector<16xf32>
    %88 = vector.shape_cast %87 : vector<16xf32> to vector<16x1xf32>
    %89 = math.exp %88 : vector<16x1xf32>
    %cst_47 = arith.constant dense<0.000000e+00> : vector<16xf32>
    %90 = vector.multi_reduction <add>, %71, %cst_47 [1] : vector<16x50xf32> to vector<16xf32>
    %91 = vector.shape_cast %90 : vector<16xf32> to vector<16x1xf32>
    %cst_48 = arith.constant 9.99999993E-9 : f32
    %92 = vector.broadcast %cst_48 : f32 to vector<16x1xf32>
    %93 = arith.cmpf ogt, %91, %92 : vector<16x1xf32>
    %cst_49 = arith.constant 0.000000e+00 : f32
    %94 = vector.broadcast %cst_49 : f32 to vector<16x1xf32>
    %95 = arith.select %93, %89, %94 : vector<16x1xi1>, vector<16x1xf32>
    %96 = vector.broadcast %80 : vector<16x1xf32> to vector<16x50xf32>
    %97 = arith.mulf %96, %27 : vector<16x50xf32>
    %98 = vector.broadcast %95 : vector<16x1xf32> to vector<16x50xf32>
    %99 = arith.mulf %98, %71 : vector<16x50xf32>
    %100 = arith.addf %97, %99 : vector<16x50xf32>
    %101 = arith.addf %80, %95 : vector<16x1xf32>
    %102 = tpu.reciprocal %101 {approx = true} : vector<16x1xf32> -> vector<16x1xf32>
    %103 = vector.broadcast %102 : vector<16x1xf32> to vector<16x50xf32>
    %104 = arith.mulf %100, %103 : vector<16x50xf32>
    %105 = vector.shape_cast %13 : vector<16x1xi1> to vector<16x1xi1>
    %106 = vector.broadcast %105 : vector<16x1xi1> to vector<16x50xi1>
    %107 = arith.select %106, %8, %104 : vector<16x50xi1>, vector<16x50xf32>
    %c0_50 = arith.constant 0 : index
    %c0_51 = arith.constant 0 : index
    %108 = vector.load %arg14[%c0_50, %c0_51] : memref<2x32xf32, #tpu.memory_space<vmem>>, vector<2x32xf32>
    %c0_52 = arith.constant 0 : index
    %c0_53 = arith.constant 0 : index
    %109 = vector.load %arg15[%c0_52, %c0_53] : memref<32x1xf32, #tpu.memory_space<vmem>>, vector<32x1xf32>
    %c0_54 = arith.constant 0 : index
    %c0_55 = arith.constant 0 : index
    %110 = vector.load %arg16[%c0_54, %c0_55] : memref<1x32xf32, #tpu.memory_space<vmem>>, vector<1x32xf32>
    %c0_56 = arith.constant 0 : index
    %c0_57 = arith.constant 0 : index
    %111 = vector.load %arg6[%c0_56, %c0_57] : memref<16x16xf32, #tpu.memory_space<vmem>>, vector<16x16xf32>
    %cst_58 = arith.constant dense<0.000000e+00> : vector<16x32xf32>
    %112 = tpu.matmul %6, %108, %cst_58 {dimension_numbers = #tpu.dot_dimension_numbers<[1], [0], [0], [1], [0, 0, 1, 1], [], []>} : vector<16x2xf32>, vector<2x32xf32>, vector<16x32xf32> -> vector<16x32xf32>
    %cst_59 = arith.constant dense<0.000000e+00> : vector<16x1xf32>
    %113 = tpu.matmul %112, %109, %cst_59 {dimension_numbers = #tpu.dot_dimension_numbers<[1], [0], [0], [1], [0, 0, 1, 1], [], []>} : vector<16x32xf32>, vector<32x1xf32>, vector<16x1xf32> -> vector<16x1xf32>
    %cst_60 = arith.constant dense<0.000000e+00> : vector<1x16xf32>
    %114 = tpu.matmul %110, %112, %cst_60 {dimension_numbers = #tpu.dot_dimension_numbers<[1], [1], [0], [0], [0, 0, 1, 0], [], []>} : vector<1x32xf32>, vector<16x32xf32>, vector<1x16xf32> -> vector<1x16xf32>
    %115 = vector.broadcast %113 : vector<16x1xf32> to vector<16x16xf32>
    %116 = vector.broadcast %114 : vector<1x16xf32> to vector<16x16xf32>
    %117 = arith.addf %115, %116 : vector<16x16xf32>
    %cst_61 = arith.constant 0.000000e+00 : f32
    %118 = vector.broadcast %cst_61 : f32 to vector<16x16xf32>
    %119 = arith.cmpf ogt, %117, %118 : vector<16x16xf32>
    %cst_62 = arith.constant 2.000000e-01 : f32
    %120 = vector.broadcast %cst_62 : f32 to vector<16x16xf32>
    %121 = arith.mulf %120, %117 : vector<16x16xf32>
    %122 = arith.select %119, %117, %121 : vector<16x16xi1>, vector<16x16xf32>
    %cst_63 = arith.constant 0.000000e+00 : f32
    %123 = vector.broadcast %cst_63 : f32 to vector<16x16xf32>
    %124 = arith.cmpf ogt, %111, %123 : vector<16x16xf32>
    %cst_64 = arith.constant -1.000000e+30 : f32
    %125 = vector.broadcast %cst_64 : f32 to vector<16x16xf32>
    %126 = arith.select %124, %122, %125 : vector<16x16xi1>, vector<16x16xf32>
    %cst_65 = arith.constant dense<0xFF800000> : vector<16xf32>
    %127 = vector.multi_reduction <maximumf>, %126, %cst_65 [1] : vector<16x16xf32> to vector<16xf32>
    %128 = vector.shape_cast %127 : vector<16xf32> to vector<16x1xf32>
    %129 = vector.broadcast %128 : vector<16x1xf32> to vector<16x16xf32>
    %130 = arith.subf %126, %129 : vector<16x16xf32>
    %131 = math.exp %130 : vector<16x16xf32>
    %132 = arith.extui %124 : vector<16x16xi1> to vector<16x16xi32>
    %133 = arith.sitofp %132 : vector<16x16xi32> to vector<16x16xf32>
    %134 = arith.mulf %131, %133 : vector<16x16xf32>
    %cst_66 = arith.constant dense<0.000000e+00> : vector<16xf32>
    %135 = vector.multi_reduction <add>, %134, %cst_66 [1] : vector<16x16xf32> to vector<16xf32>
    %136 = vector.shape_cast %135 : vector<16xf32> to vector<16x1xf32>
    %cst_67 = arith.constant 9.99999996E-13 : f32
    %137 = vector.broadcast %cst_67 : f32 to vector<16x1xf32>
    %138 = arith.maximumf %136, %137 : vector<16x1xf32>
    %139 = tpu.reciprocal %138 {approx = true} : vector<16x1xf32> -> vector<16x1xf32>
    %140 = vector.broadcast %139 : vector<16x1xf32> to vector<16x16xf32>
    %141 = arith.mulf %134, %140 : vector<16x16xf32>
    %cst_68 = arith.constant dense<0.000000e+00> : vector<16x32xf32>
    %142 = tpu.matmul %141, %112, %cst_68 {dimension_numbers = #tpu.dot_dimension_numbers<[1], [0], [0], [1], [0, 0, 1, 1], [], []>} : vector<16x16xf32>, vector<16x32xf32>, vector<16x32xf32> -> vector<16x32xf32>
    %cst_69 = arith.constant 0.000000e+00 : f32
    %143 = vector.broadcast %cst_69 : f32 to vector<16x32xf32>
    %144 = arith.cmpf ogt, %142, %143 : vector<16x32xf32>
    %cst_70 = arith.constant 2.000000e-01 : f32
    %145 = vector.broadcast %cst_70 : f32 to vector<16x32xf32>
    %146 = arith.mulf %145, %142 : vector<16x32xf32>
    %147 = arith.select %144, %142, %146 : vector<16x32xi1>, vector<16x32xf32>
    %c0_71 = arith.constant 0 : index
    %c0_72 = arith.constant 0 : index
    %148 = vector.load %arg17[%c0_71, %c0_72] : memref<32x32xf32, #tpu.memory_space<vmem>>, vector<32x32xf32>
    %c0_73 = arith.constant 0 : index
    %c0_74 = arith.constant 0 : index
    %149 = vector.load %arg18[%c0_73, %c0_74] : memref<32x1xf32, #tpu.memory_space<vmem>>, vector<32x1xf32>
    %c0_75 = arith.constant 0 : index
    %c0_76 = arith.constant 0 : index
    %150 = vector.load %arg19[%c0_75, %c0_76] : memref<1x32xf32, #tpu.memory_space<vmem>>, vector<1x32xf32>
    %c0_77 = arith.constant 0 : index
    %c0_78 = arith.constant 0 : index
    %151 = vector.load %arg6[%c0_77, %c0_78] : memref<16x16xf32, #tpu.memory_space<vmem>>, vector<16x16xf32>
    %cst_79 = arith.constant dense<0.000000e+00> : vector<16x32xf32>
    %152 = tpu.matmul %147, %148, %cst_79 {dimension_numbers = #tpu.dot_dimension_numbers<[1], [0], [0], [1], [0, 0, 1, 1], [], []>} : vector<16x32xf32>, vector<32x32xf32>, vector<16x32xf32> -> vector<16x32xf32>
    %cst_80 = arith.constant dense<0.000000e+00> : vector<16x1xf32>
    %153 = tpu.matmul %152, %149, %cst_80 {dimension_numbers = #tpu.dot_dimension_numbers<[1], [0], [0], [1], [0, 0, 1, 1], [], []>} : vector<16x32xf32>, vector<32x1xf32>, vector<16x1xf32> -> vector<16x1xf32>
    %cst_81 = arith.constant dense<0.000000e+00> : vector<1x16xf32>
    %154 = tpu.matmul %150, %152, %cst_81 {dimension_numbers = #tpu.dot_dimension_numbers<[1], [1], [0], [0], [0, 0, 1, 0], [], []>} : vector<1x32xf32>, vector<16x32xf32>, vector<1x16xf32> -> vector<1x16xf32>
    %155 = vector.broadcast %153 : vector<16x1xf32> to vector<16x16xf32>
    %156 = vector.broadcast %154 : vector<1x16xf32> to vector<16x16xf32>
    %157 = arith.addf %155, %156 : vector<16x16xf32>
    %cst_82 = arith.constant 0.000000e+00 : f32
    %158 = vector.broadcast %cst_82 : f32 to vector<16x16xf32>
    %159 = arith.cmpf ogt, %157, %158 : vector<16x16xf32>
    %cst_83 = arith.constant 2.000000e-01 : f32
    %160 = vector.broadcast %cst_83 : f32 to vector<16x16xf32>
    %161 = arith.mulf %160, %157 : vector<16x16xf32>
    %162 = arith.select %159, %157, %161 : vector<16x16xi1>, vector<16x16xf32>
    %cst_84 = arith.constant 0.000000e+00 : f32
    %163 = vector.broadcast %cst_84 : f32 to vector<16x16xf32>
    %164 = arith.cmpf ogt, %151, %163 : vector<16x16xf32>
    %cst_85 = arith.constant -1.000000e+30 : f32
    %165 = vector.broadcast %cst_85 : f32 to vector<16x16xf32>
    %166 = arith.select %164, %162, %165 : vector<16x16xi1>, vector<16x16xf32>
    %cst_86 = arith.constant dense<0xFF800000> : vector<16xf32>
    %167 = vector.multi_reduction <maximumf>, %166, %cst_86 [1] : vector<16x16xf32> to vector<16xf32>
    %168 = vector.shape_cast %167 : vector<16xf32> to vector<16x1xf32>
    %169 = vector.broadcast %168 : vector<16x1xf32> to vector<16x16xf32>
    %170 = arith.subf %166, %169 : vector<16x16xf32>
    %171 = math.exp %170 : vector<16x16xf32>
    %172 = arith.extui %164 : vector<16x16xi1> to vector<16x16xi32>
    %173 = arith.sitofp %172 : vector<16x16xi32> to vector<16x16xf32>
    %174 = arith.mulf %171, %173 : vector<16x16xf32>
    %cst_87 = arith.constant dense<0.000000e+00> : vector<16xf32>
    %175 = vector.multi_reduction <add>, %174, %cst_87 [1] : vector<16x16xf32> to vector<16xf32>
    %176 = vector.shape_cast %175 : vector<16xf32> to vector<16x1xf32>
    %cst_88 = arith.constant 9.99999996E-13 : f32
    %177 = vector.broadcast %cst_88 : f32 to vector<16x1xf32>
    %178 = arith.maximumf %176, %177 : vector<16x1xf32>
    %179 = tpu.reciprocal %178 {approx = true} : vector<16x1xf32> -> vector<16x1xf32>
    %180 = vector.broadcast %179 : vector<16x1xf32> to vector<16x16xf32>
    %181 = arith.mulf %174, %180 : vector<16x16xf32>
    %cst_89 = arith.constant dense<0.000000e+00> : vector<16x32xf32>
    %182 = tpu.matmul %181, %152, %cst_89 {dimension_numbers = #tpu.dot_dimension_numbers<[1], [0], [0], [1], [0, 0, 1, 1], [], []>} : vector<16x16xf32>, vector<16x32xf32>, vector<16x32xf32> -> vector<16x32xf32>
    %cst_90 = arith.constant 0.000000e+00 : f32
    %183 = vector.broadcast %cst_90 : f32 to vector<16x32xf32>
    %184 = arith.cmpf ogt, %182, %183 : vector<16x32xf32>
    %cst_91 = arith.constant 2.000000e-01 : f32
    %185 = vector.broadcast %cst_91 : f32 to vector<16x32xf32>
    %186 = arith.mulf %185, %182 : vector<16x32xf32>
    %187 = arith.select %184, %182, %186 : vector<16x32xi1>, vector<16x32xf32>
    %c0_92 = arith.constant 0 : index
    %c0_93 = arith.constant 0 : index
    %188 = vector.load %arg20[%c0_92, %c0_93] : memref<32x32xf32, #tpu.memory_space<vmem>>, vector<32x32xf32>
    %cst_94 = arith.constant dense<0.000000e+00> : vector<16x32xf32>
    %189 = tpu.matmul %187, %188, %cst_94 {dimension_numbers = #tpu.dot_dimension_numbers<[1], [0], [0], [1], [0, 0, 1, 1], [], []>} : vector<16x32xf32>, vector<32x32xf32>, vector<16x32xf32> -> vector<16x32xf32>
    %c0_95 = arith.constant 0 : index
    %c0_96 = arith.constant 0 : index
    %190 = vector.load %arg21[%c0_95, %c0_96] : memref<50x32xf32, #tpu.memory_space<vmem>>, vector<50x32xf32>
    %cst_97 = arith.constant dense<0.000000e+00> : vector<16x32xf32>
    %191 = tpu.matmul %107, %190, %cst_97 {dimension_numbers = #tpu.dot_dimension_numbers<[1], [0], [0], [1], [0, 0, 1, 1], [], []>} : vector<16x50xf32>, vector<50x32xf32>, vector<16x32xf32> -> vector<16x32xf32>
    %192 = arith.addf %189, %191 : vector<16x32xf32>
    %c0_98 = arith.constant 0 : index
    %c0_99 = arith.constant 0 : index
    %193 = vector.load %arg8[%c0_98, %c0_99] : memref<16x16xf32, #tpu.memory_space<vmem>>, vector<16x16xf32>
    %cst_100 = arith.constant dense<0.000000e+00> : vector<16x32xf32>
    %194 = tpu.matmul %193, %192, %cst_100 {dimension_numbers = #tpu.dot_dimension_numbers<[1], [0], [0], [1], [0, 0, 1, 1], [], []>} : vector<16x16xf32>, vector<16x32xf32>, vector<16x32xf32> -> vector<16x32xf32>
    %c0_101 = arith.constant 0 : index
    %c0_102 = arith.constant 0 : index
    %195 = vector.load %arg22[%c0_101, %c0_102] : memref<1x32xf32, #tpu.memory_space<vmem>>, vector<1x32xf32>
    %196 = vector.broadcast %195 : vector<1x32xf32> to vector<16x32xf32>
    %197 = arith.addf %194, %196 : vector<16x32xf32>
    %cst_103 = arith.constant 0.000000e+00 : f32
    %198 = vector.broadcast %cst_103 : f32 to vector<16x32xf32>
    %199 = arith.cmpf ogt, %197, %198 : vector<16x32xf32>
    %cst_104 = arith.constant 2.000000e-01 : f32
    %200 = vector.broadcast %cst_104 : f32 to vector<16x32xf32>
    %201 = arith.mulf %200, %197 : vector<16x32xf32>
    %202 = arith.select %199, %197, %201 : vector<16x32xi1>, vector<16x32xf32>
    %c0_105 = arith.constant 0 : index
    %c0_106 = arith.constant 0 : index
    %203 = vector.load %arg23[%c0_105, %c0_106] : memref<32x192xf32, #tpu.memory_space<vmem>>, vector<32x192xf32>
    %cst_107 = arith.constant dense<0.000000e+00> : vector<16x192xf32>
    %204 = tpu.matmul %187, %203, %cst_107 {dimension_numbers = #tpu.dot_dimension_numbers<[1], [0], [0], [1], [0, 0, 1, 1], [], []>} : vector<16x32xf32>, vector<32x192xf32>, vector<16x192xf32> -> vector<16x192xf32>
    %c0_108 = arith.constant 0 : index
    %c0_109 = arith.constant 0 : index
    %205 = vector.load %arg24[%c0_108, %c0_109] : memref<50x192xf32, #tpu.memory_space<vmem>>, vector<50x192xf32>
    %cst_110 = arith.constant dense<0.000000e+00> : vector<16x192xf32>
    %206 = tpu.matmul %107, %205, %cst_110 {dimension_numbers = #tpu.dot_dimension_numbers<[1], [0], [0], [1], [0, 0, 1, 1], [], []>} : vector<16x50xf32>, vector<50x192xf32>, vector<16x192xf32> -> vector<16x192xf32>
    %207 = arith.addf %204, %206 : vector<16x192xf32>
    %c0_111 = arith.constant 0 : index
    %c0_112 = arith.constant 0 : index
    %208 = vector.load %arg25[%c0_111, %c0_112] : memref<32x192xf32, #tpu.memory_space<vmem>>, vector<32x192xf32>
    %cst_113 = arith.constant dense<0.000000e+00> : vector<16x192xf32>
    %209 = tpu.matmul %202, %208, %cst_113 {dimension_numbers = #tpu.dot_dimension_numbers<[1], [0], [0], [1], [0, 0, 1, 1], [], []>} : vector<16x32xf32>, vector<32x192xf32>, vector<16x192xf32> -> vector<16x192xf32>
    %210 = arith.addf %207, %209 : vector<16x192xf32>
    %c0_114 = arith.constant 0 : index
    %c0_115 = arith.constant 0 : index
    %211 = vector.load %arg26[%c0_114, %c0_115] : memref<20x192xf32, #tpu.memory_space<vmem>>, vector<20x192xf32>
    %cst_116 = arith.constant dense<0.000000e+00> : vector<16x192xf32>
    %212 = tpu.matmul %10, %211, %cst_116 {dimension_numbers = #tpu.dot_dimension_numbers<[1], [0], [0], [1], [0, 0, 1, 1], [], []>} : vector<16x20xf32>, vector<20x192xf32>, vector<16x192xf32> -> vector<16x192xf32>
    %213 = arith.addf %210, %212 : vector<16x192xf32>
    %c0_117 = arith.constant 0 : index
    %c0_118 = arith.constant 0 : index
    %214 = vector.load %arg28[%c0_117, %c0_118] : memref<1x192xf32, #tpu.memory_space<vmem>>, vector<1x192xf32>
    %215 = vector.broadcast %214 : vector<1x192xf32> to vector<16x192xf32>
    %216 = arith.addf %213, %215 : vector<16x192xf32>
    %c0_119 = arith.constant 0 : index
    %c0_120 = arith.constant 0 : index
    %217 = vector.load %arg27[%c0_119, %c0_120] : memref<64x192xf32, #tpu.memory_space<vmem>>, vector<64x192xf32>
    %cst_121 = arith.constant dense<0.000000e+00> : vector<16x192xf32>
    %218 = tpu.matmul %4, %217, %cst_121 {dimension_numbers = #tpu.dot_dimension_numbers<[1], [0], [0], [1], [0, 0, 1, 1], [], []>} : vector<16x64xf32>, vector<64x192xf32>, vector<16x192xf32> -> vector<16x192xf32>
    %c0_122 = arith.constant 0 : index
    %c0_123 = arith.constant 0 : index
    %219 = vector.load %arg29[%c0_122, %c0_123] : memref<1x192xf32, #tpu.memory_space<vmem>>, vector<1x192xf32>
    %220 = vector.broadcast %219 : vector<1x192xf32> to vector<16x192xf32>
    %221 = arith.addf %218, %220 : vector<16x192xf32>
    %222 = vector.extract_strided_slice %216 {offsets = [0, 0], sizes = [16, 64], strides = [1, 1]} : vector<16x192xf32> to vector<16x64xf32>
    %223 = vector.extract_strided_slice %216 {offsets = [0, 64], sizes = [16, 64], strides = [1, 1]} : vector<16x192xf32> to vector<16x64xf32>
    %224 = vector.extract_strided_slice %216 {offsets = [0, 128], sizes = [16, 64], strides = [1, 1]} : vector<16x192xf32> to vector<16x64xf32>
    %225 = vector.extract_strided_slice %221 {offsets = [0, 0], sizes = [16, 64], strides = [1, 1]} : vector<16x192xf32> to vector<16x64xf32>
    %226 = vector.extract_strided_slice %221 {offsets = [0, 64], sizes = [16, 64], strides = [1, 1]} : vector<16x192xf32> to vector<16x64xf32>
    %227 = vector.extract_strided_slice %221 {offsets = [0, 128], sizes = [16, 64], strides = [1, 1]} : vector<16x192xf32> to vector<16x64xf32>
    %228 = arith.addf %222, %225 : vector<16x64xf32>
    %229 = arith.negf %228 : vector<16x64xf32>
    %230 = math.exp %229 : vector<16x64xf32>
    %cst_124 = arith.constant 1.000000e+00 : f32
    %231 = vector.broadcast %cst_124 : f32 to vector<16x64xf32>
    %232 = arith.addf %231, %230 : vector<16x64xf32>
    %233 = arith.divf %231, %232 : vector<16x64xf32>
    %234 = arith.addf %223, %226 : vector<16x64xf32>
    %235 = arith.negf %234 : vector<16x64xf32>
    %236 = math.exp %235 : vector<16x64xf32>
    %cst_125 = arith.constant 1.000000e+00 : f32
    %237 = vector.broadcast %cst_125 : f32 to vector<16x64xf32>
    %238 = arith.addf %237, %236 : vector<16x64xf32>
    %239 = arith.divf %237, %238 : vector<16x64xf32>
    %240 = arith.mulf %233, %227 : vector<16x64xf32>
    %241 = arith.addf %224, %240 : vector<16x64xf32>
    %242 = math.tanh %241 : vector<16x64xf32>
    %cst_126 = arith.constant 1.000000e+00 : f32
    %243 = vector.broadcast %cst_126 : f32 to vector<16x64xf32>
    %244 = arith.subf %243, %239 : vector<16x64xf32>
    %245 = arith.mulf %244, %242 : vector<16x64xf32>
    %246 = arith.mulf %239, %4 : vector<16x64xf32>
    %247 = arith.addf %245, %246 : vector<16x64xf32>
    %c0_127 = arith.constant 0 : index
    %c0_128 = arith.constant 0 : index
    %248 = vector.load %arg34[%c0_127, %c0_128] : memref<16x64xf32, #tpu.memory_space<vmem>>, vector<16x64xf32>
    tpu.vector_store %arg34[%c0_127, %c0_128], %247 {strides = array<i32>} : memref<16x64xf32, #tpu.memory_space<vmem>>, vector<16x64xf32>,
    %249 = arith.extui %0 : i1 to i32
    %c0_i32_129 = arith.constant 0 : i32
    %250 = arith.cmpi ne, %249, %c0_i32_129 : i32
    scf.if %250 {
      %c0_130 = arith.constant 0 : index
      %c0_131 = arith.constant 0 : index
      %251 = vector.load %arg30[%c0_130, %c0_131] : memref<64x128xf32, #tpu.memory_space<vmem>>, vector<64x128xf32>
      %cst_132 = arith.constant dense<0.000000e+00> : vector<16x128xf32>
      %252 = tpu.matmul %247, %251, %cst_132 {dimension_numbers = #tpu.dot_dimension_numbers<[1], [0], [0], [1], [0, 0, 1, 1], [], []>} : vector<16x64xf32>, vector<64x128xf32>, vector<16x128xf32> -> vector<16x128xf32>
      %c0_133 = arith.constant 0 : index
      %c0_134 = arith.constant 0 : index
      %253 = vector.load %arg31[%c0_133, %c0_134] : memref<1x128xf32, #tpu.memory_space<vmem>>, vector<1x128xf32>
      %254 = vector.broadcast %253 : vector<1x128xf32> to vector<16x128xf32>
      %255 = arith.addf %252, %254 : vector<16x128xf32>
      %256 = arith.negf %255 : vector<16x128xf32>
      %257 = math.exp %256 : vector<16x128xf32>
      %cst_135 = arith.constant 1.000000e+00 : f32
      %258 = vector.broadcast %cst_135 : f32 to vector<16x128xf32>
      %259 = arith.addf %258, %257 : vector<16x128xf32>
      %260 = arith.divf %258, %259 : vector<16x128xf32>
      %c0_136 = arith.constant 0 : index
      %c0_137 = arith.constant 0 : index
      %261 = vector.load %arg32[%c0_136, %c0_137] : memref<16x128xf32, #tpu.memory_space<vmem>>, vector<16x128xf32>
      tpu.vector_store %arg32[%c0_136, %c0_137], %260 {strides = array<i32>} : memref<16x128xf32, #tpu.memory_space<vmem>>, vector<16x128xf32>,
      %262 = math.log %27 : vector<16x50xf32>
      %cst_138 = arith.constant -1.000000e+02 : f32
      %263 = vector.broadcast %cst_138 : f32 to vector<16x50xf32>
      %264 = arith.maximumf %262, %263 : vector<16x50xf32>
      %cst_139 = arith.constant 1.000000e+00 : f32
      %265 = vector.broadcast %cst_139 : f32 to vector<16x50xf32>
      %266 = arith.subf %265, %27 : vector<16x50xf32>
      %267 = math.log %266 : vector<16x50xf32>
      %cst_140 = arith.constant -1.000000e+02 : f32
      %268 = vector.broadcast %cst_140 : f32 to vector<16x50xf32>
      %269 = arith.maximumf %267, %268 : vector<16x50xf32>
      %270 = arith.mulf %8, %264 : vector<16x50xf32>
      %cst_141 = arith.constant 1.000000e+00 : f32
      %271 = vector.broadcast %cst_141 : f32 to vector<16x50xf32>
      %272 = arith.subf %271, %8 : vector<16x50xf32>
      %273 = arith.mulf %272, %269 : vector<16x50xf32>
      %274 = arith.addf %270, %273 : vector<16x50xf32>
      %cst_142 = arith.constant 0.000000e+00 : f32
      %275 = vector.broadcast %cst_142 : f32 to vector<16x50xf32>
      %276 = arith.subf %275, %274 : vector<16x50xf32>
      %cst_143 = arith.constant 0.000000e+00 : f32
      %277 = vector.shape_cast %13 : vector<16x1xi1> to vector<16x1xi1>
      %278 = vector.broadcast %277 : vector<16x1xi1> to vector<16x50xi1>
      %279 = vector.broadcast %cst_143 : f32 to vector<16x50xf32>
      %280 = arith.select %278, %276, %279 : vector<16x50xi1>, vector<16x50xf32>
      %281 = vector.shape_cast %280 : vector<16x50xf32> to vector<1x16x50xf32>
      %cst_144 = arith.constant dense<0.000000e+00> : vector<1xf32>
      %282 = vector.multi_reduction <add>, %281, %cst_144 [1, 2] : vector<1x16x50xf32> to vector<1xf32>
      %283 = vector.shape_cast %282 : vector<1xf32> to vector<1x1x1xf32>
      %284 = vector.extract %283[0, 0, 0] : f32 from vector<1x1x1xf32>
      %cst_145 = arith.constant 4.000000e+02 : f32
      %285 = arith.divf %284, %cst_145 : f32
      %286 = math.log %71 : vector<16x50xf32>
      %cst_146 = arith.constant -1.000000e+02 : f32
      %287 = vector.broadcast %cst_146 : f32 to vector<16x50xf32>
      %288 = arith.maximumf %286, %287 : vector<16x50xf32>
      %cst_147 = arith.constant 1.000000e+00 : f32
      %289 = vector.broadcast %cst_147 : f32 to vector<16x50xf32>
      %290 = arith.subf %289, %71 : vector<16x50xf32>
      %291 = math.log %290 : vector<16x50xf32>
      %cst_148 = arith.constant -1.000000e+02 : f32
      %292 = vector.broadcast %cst_148 : f32 to vector<16x50xf32>
      %293 = arith.maximumf %291, %292 : vector<16x50xf32>
      %294 = arith.mulf %8, %288 : vector<16x50xf32>
      %cst_149 = arith.constant 1.000000e+00 : f32
      %295 = vector.broadcast %cst_149 : f32 to vector<16x50xf32>
      %296 = arith.subf %295, %8 : vector<16x50xf32>
      %297 = arith.mulf %296, %293 : vector<16x50xf32>
      %298 = arith.addf %294, %297 : vector<16x50xf32>
      %cst_150 = arith.constant 0.000000e+00 : f32
      %299 = vector.broadcast %cst_150 : f32 to vector<16x50xf32>
      %300 = arith.subf %299, %298 : vector<16x50xf32>
      %cst_151 = arith.constant 0.000000e+00 : f32
      %301 = vector.shape_cast %13 : vector<16x1xi1> to vector<16x1xi1>
      %302 = vector.broadcast %301 : vector<16x1xi1> to vector<16x50xi1>
      %303 = vector.broadcast %cst_151 : f32 to vector<16x50xf32>
      %304 = arith.select %302, %300, %303 : vector<16x50xi1>, vector<16x50xf32>
      %305 = vector.shape_cast %304 : vector<16x50xf32> to vector<1x16x50xf32>
      %cst_152 = arith.constant dense<0.000000e+00> : vector<1xf32>
      %306 = vector.multi_reduction <add>, %305, %cst_152 [1, 2] : vector<1x16x50xf32> to vector<1xf32>
      %307 = vector.shape_cast %306 : vector<1xf32> to vector<1x1x1xf32>
      %308 = vector.extract %307[0, 0, 0] : f32 from vector<1x1x1xf32>
      %cst_153 = arith.constant 4.000000e+02 : f32
      %309 = arith.divf %308, %cst_153 : f32
      %310 = arith.addf %285, %309 : f32
      %311 = vector.broadcast %310 : f32 to vector<1x128xf32>
      %c0_154 = arith.constant 0 : index
      %c0_155 = arith.constant 0 : index
      %312 = vector.load %arg33[%c0_154, %c0_155] : memref<1x128xf32, #tpu.memory_space<vmem>>, vector<1x128xf32>
      tpu.vector_store %arg33[%c0_154, %c0_155], %311 {strides = array<i32>} : memref<1x128xf32, #tpu.memory_space<vmem>>, vector<1x128xf32>,
    } else {
    }
    return
  }
  func.func @transform_0(%arg0: i32) -> (i32, i32, i32) {
    %c0_i32 = arith.constant 0 : i32
    %c0_i32_0 = arith.constant 0 : i32
    %c0_i32_1 = arith.constant 0 : i32
    return %arg0, %c0_i32, %c0_i32_0 : i32, i32, i32
  }
  func.func @transform_1(%arg0: i32) -> (i32, i32, i32) {
    %c0_i32 = arith.constant 0 : i32
    %c0_i32_0 = arith.constant 0 : i32
    %c0_i32_1 = arith.constant 0 : i32
    return %arg0, %c0_i32, %c0_i32_0 : i32, i32, i32
  }
  func.func @transform_2(%arg0: i32) -> (i32, i32, i32) {
    %c0_i32 = arith.constant 0 : i32
    %c0_i32_0 = arith.constant 0 : i32
    %c0_i32_1 = arith.constant 0 : i32
    return %arg0, %c0_i32, %c0_i32_0 : i32, i32, i32
  }
  func.func @transform_3(%arg0: i32) -> (i32, i32) {
    %c0_i32 = arith.constant 0 : i32
    %c0_i32_0 = arith.constant 0 : i32
    %c0_i32_1 = arith.constant 0 : i32
    return %c0_i32, %c0_i32_0 : i32, i32
  }
  func.func @transform_4(%arg0: i32) -> (i32, i32) {
    %c0_i32 = arith.constant 0 : i32
    %c0_i32_0 = arith.constant 0 : i32
    %c0_i32_1 = arith.constant 0 : i32
    return %c0_i32, %c0_i32_0 : i32, i32
  }
  func.func @transform_5(%arg0: i32) -> (i32, i32) {
    %c0_i32 = arith.constant 0 : i32
    %c0_i32_0 = arith.constant 0 : i32
    %c0_i32_1 = arith.constant 0 : i32
    return %c0_i32, %c0_i32_0 : i32, i32
  }
  func.func @transform_6(%arg0: i32) -> (i32, i32) {
    %c0_i32 = arith.constant 0 : i32
    %c0_i32_0 = arith.constant 0 : i32
    %c0_i32_1 = arith.constant 0 : i32
    return %c0_i32, %c0_i32_0 : i32, i32
  }
  func.func @transform_7(%arg0: i32) -> (i32, i32) {
    %c0_i32 = arith.constant 0 : i32
    %c0_i32_0 = arith.constant 0 : i32
    %c0_i32_1 = arith.constant 0 : i32
    return %c0_i32, %c0_i32_0 : i32, i32
  }
  func.func @transform_8(%arg0: i32) -> (i32, i32) {
    %c0_i32 = arith.constant 0 : i32
    %c0_i32_0 = arith.constant 0 : i32
    %c0_i32_1 = arith.constant 0 : i32
    return %c0_i32, %c0_i32_0 : i32, i32
  }
  func.func @transform_9(%arg0: i32) -> (i32, i32) {
    %c0_i32 = arith.constant 0 : i32
    %c0_i32_0 = arith.constant 0 : i32
    %c0_i32_1 = arith.constant 0 : i32
    return %c0_i32, %c0_i32_0 : i32, i32
  }
  func.func @transform_10(%arg0: i32) -> (i32, i32) {
    %c0_i32 = arith.constant 0 : i32
    %c0_i32_0 = arith.constant 0 : i32
    %c0_i32_1 = arith.constant 0 : i32
    return %c0_i32, %c0_i32_0 : i32, i32
  }
  func.func @transform_11(%arg0: i32) -> (i32, i32) {
    %c0_i32 = arith.constant 0 : i32
    %c0_i32_0 = arith.constant 0 : i32
    %c0_i32_1 = arith.constant 0 : i32
    return %c0_i32, %c0_i32_0 : i32, i32
  }
  func.func @transform_12(%arg0: i32) -> (i32, i32) {
    %c0_i32 = arith.constant 0 : i32
    %c0_i32_0 = arith.constant 0 : i32
    %c0_i32_1 = arith.constant 0 : i32
    return %c0_i32, %c0_i32_0 : i32, i32
  }
  func.func @transform_13(%arg0: i32) -> (i32, i32) {
    %c0_i32 = arith.constant 0 : i32
    %c0_i32_0 = arith.constant 0 : i32
    %c0_i32_1 = arith.constant 0 : i32
    return %c0_i32, %c0_i32_0 : i32, i32
  }
  func.func @transform_14(%arg0: i32) -> (i32, i32) {
    %c0_i32 = arith.constant 0 : i32
    %c0_i32_0 = arith.constant 0 : i32
    %c0_i32_1 = arith.constant 0 : i32
    return %c0_i32, %c0_i32_0 : i32, i32
  }
  func.func @transform_15(%arg0: i32) -> (i32, i32) {
    %c0_i32 = arith.constant 0 : i32
    %c0_i32_0 = arith.constant 0 : i32
    %c0_i32_1 = arith.constant 0 : i32
    return %c0_i32, %c0_i32_0 : i32, i32
  }
  func.func @transform_16(%arg0: i32) -> (i32, i32) {
    %c0_i32 = arith.constant 0 : i32
    %c0_i32_0 = arith.constant 0 : i32
    %c0_i32_1 = arith.constant 0 : i32
    return %c0_i32, %c0_i32_0 : i32, i32
  }
  func.func @transform_17(%arg0: i32) -> (i32, i32) {
    %c0_i32 = arith.constant 0 : i32
    %c0_i32_0 = arith.constant 0 : i32
    %c0_i32_1 = arith.constant 0 : i32
    return %c0_i32, %c0_i32_0 : i32, i32
  }
  func.func @transform_18(%arg0: i32) -> (i32, i32) {
    %c0_i32 = arith.constant 0 : i32
    %c0_i32_0 = arith.constant 0 : i32
    %c0_i32_1 = arith.constant 0 : i32
    return %c0_i32, %c0_i32_0 : i32, i32
  }
  func.func @transform_19(%arg0: i32) -> (i32, i32) {
    %c0_i32 = arith.constant 0 : i32
    %c0_i32_0 = arith.constant 0 : i32
    %c0_i32_1 = arith.constant 0 : i32
    return %c0_i32, %c0_i32_0 : i32, i32
  }
  func.func @transform_20(%arg0: i32) -> (i32, i32) {
    %c0_i32 = arith.constant 0 : i32
    %c0_i32_0 = arith.constant 0 : i32
    %c0_i32_1 = arith.constant 0 : i32
    return %c0_i32, %c0_i32_0 : i32, i32
  }
  func.func @transform_21(%arg0: i32) -> (i32, i32) {
    %c0_i32 = arith.constant 0 : i32
    %c0_i32_0 = arith.constant 0 : i32
    %c0_i32_1 = arith.constant 0 : i32
    return %c0_i32, %c0_i32_0 : i32, i32
  }
  func.func @transform_22(%arg0: i32) -> (i32, i32) {
    %c0_i32 = arith.constant 0 : i32
    %c0_i32_0 = arith.constant 0 : i32
    %c0_i32_1 = arith.constant 0 : i32
    return %c0_i32, %c0_i32_0 : i32, i32
  }
  func.func @transform_23(%arg0: i32) -> (i32, i32) {
    %c0_i32 = arith.constant 0 : i32
    %c0_i32_0 = arith.constant 0 : i32
    %c0_i32_1 = arith.constant 0 : i32
    return %c0_i32, %c0_i32_0 : i32, i32
  }
  func.func @transform_24(%arg0: i32) -> (i32, i32) {
    %c0_i32 = arith.constant 0 : i32
    %c0_i32_0 = arith.constant 0 : i32
    %c0_i32_1 = arith.constant 0 : i32
    return %c0_i32, %c0_i32_0 : i32, i32
  }
  func.func @transform_25(%arg0: i32) -> (i32, i32) {
    %c0_i32 = arith.constant 0 : i32
    %c0_i32_0 = arith.constant 0 : i32
    %c0_i32_1 = arith.constant 0 : i32
    return %c0_i32, %c0_i32_0 : i32, i32
  }
  func.func @transform_26(%arg0: i32) -> (i32, i32) {
    %c0_i32 = arith.constant 0 : i32
    %c0_i32_0 = arith.constant 0 : i32
    %c0_i32_1 = arith.constant 0 : i32
    return %c0_i32, %c0_i32_0 : i32, i32
  }
  func.func @transform_27(%arg0: i32) -> (i32, i32) {
    %c0_i32 = arith.constant 0 : i32
    %c0_i32_0 = arith.constant 0 : i32
    %c0_i32_1 = arith.constant 0 : i32
    return %c0_i32, %c0_i32_0 : i32, i32
  }
  func.func @transform_28(%arg0: i32) -> (i32, i32) {
    %c0_i32 = arith.constant 0 : i32
    %c0_i32_0 = arith.constant 0 : i32
    %c0_i32_1 = arith.constant 0 : i32
    return %c0_i32, %c0_i32_0 : i32, i32
  }
  func.func @transform_29(%arg0: i32) -> (i32, i32) {
    %c0_i32 = arith.constant 0 : i32
    %c0_i32_0 = arith.constant 0 : i32
    %c0_i32_1 = arith.constant 0 : i32
    return %c0_i32, %c0_i32_0 : i32, i32
  }
  func.func @transform_30(%arg0: i32) -> (i32, i32) {
    %c0_i32 = arith.constant 0 : i32
    %c0_i32_0 = arith.constant 0 : i32
    %c0_i32_1 = arith.constant 0 : i32
    return %c0_i32, %c0_i32_0 : i32, i32
  }
  func.func @transform_31(%arg0: i32) -> (i32, i32) {
    %c0_i32 = arith.constant 0 : i32
    %c0_i32_0 = arith.constant 0 : i32
    %c0_i32_1 = arith.constant 0 : i32
    return %c0_i32, %c0_i32_0 : i32, i32
  }
  func.func @transform_32(%arg0: i32) -> (i32, i32) {
    %c0_i32 = arith.constant 0 : i32
    %c0_i32_0 = arith.constant 0 : i32
    %c0_i32_1 = arith.constant 0 : i32
    return %c0_i32, %c0_i32_0 : i32, i32
  }
}

</mosaic_0001>

<llo_original>
// kernel: tile.8
$region0: #{tile.8}
  #allocation0 [shape = 's32[1]{0}', space=sflag, size = 0x4, scoped, tag = 'scoped memory for tile.8']
  %s0 = inlined_call_operand.vmem [shape: f32[8], index: 0, kind: input, shape index: {}]
  %s1 = inlined_call_operand.vmem [shape: f32[2,8], index: 1, kind: output, shape index: {}]
  // Predicated region
  $region2: #{tile.8} parent=0 // pred_check
    _
  $region3: #{tile.8} parent=0 // pred_check_branch
    %3 = sbr.rel (0) target = $region5
  $region4: #{tile.8} parent=0 // pred_region
    _
  $region5: #{tile.8} parent=0 // pred_fallthru
    _
  %v4 = vld [vmem:[%s0] ss:$0 sm:$0xff]
  %5 = vst [vmem:[%s1] sm:$0x3] %v4

// kernel: tile.0
$region0: #{tile.0}
  %s0 = inlined_call_operand.vmem [shape: f32[2,8], index: 0, kind: input, shape index: {}]
  %s1 = inlined_call_operand.vmem [shape: f32[16,1], index: 1, kind: output, shape index: {}]
  $region1: #{tile.0} parent=0
    #allocation0 [shape = 'u8[4096]{0}', space=vmem, size = 0x1000, scoped, tag = 'scoped mem for input reshape']
    %s3 = ssub.s32 4, 1
    %v4 = vld [vmem:[%s0] sm:%s3]
    %5 = vst [vmem:[#allocation0] sm:%s3] %v4
    %v6 = vld [vmem:[#allocation0] sm:$0x3]
    %vm7 = vcmask 7168
    %8 = vst.msk [vmem:[%s1] ss:$8 sm:$0x3] %vm7, %v6
    %v9 = vld [vmem:[#allocation0] sm:$0x3]
    %10 = vrot.lane.b32.xlu0 %v9, 127
    %v11 = vpop.permute.xlu0 %10
    %vm12 = vcmask 7168
    %s13 = scalar_lea.vmem %s1, 1
    %14 = vst.msk [vmem:[%s13] ss:$8 sm:$0x3] %vm12, %v11
    %v15 = vld [vmem:[#allocation0] sm:$0x3]
    %16 = vrot.lane.b32.xlu0 %v15, 126
    %v17 = vpop.permute.xlu0 %16
    %vm18 = vcmask 7168
    %s19 = scalar_lea.vmem %s1, 2
    %20 = vst.msk [vmem:[%s19] ss:$8 sm:$0x3] %vm18, %v17
    %v21 = vld [vmem:[#allocation0] sm:$0x3]
    %22 = vrot.lane.b32.xlu0 %v21, 125
    %v23 = vpop.permute.xlu0 %22
    %vm24 = vcmask 7168
    %s25 = scalar_lea.vmem %s1, 3
    %26 = vst.msk [vmem:[%s25] ss:$8 sm:$0x3] %vm24, %v23
    %v27 = vld [vmem:[#allocation0] sm:$0x3]
    %28 = vrot.lane.b32.xlu0 %v27, 124
    %v29 = vpop.permute.xlu0 %28
    %vm30 = vcmask 7168
    %s31 = scalar_lea.vmem %s1, 4
    %32 = vst.msk [vmem:[%s31] ss:$8 sm:$0x3] %vm30, %v29
    %v33 = vld [vmem:[#allocation0] sm:$0x3]
    %34 = vrot.lane.b32.xlu0 %v33, 123
    %v35 = vpop.permute.xlu0 %34
    %vm36 = vcmask 7168
    %s37 = scalar_lea.vmem %s1, 5
    %38 = vst.msk [vmem:[%s37] ss:$8 sm:$0x3] %vm36, %v35
    %v39 = vld [vmem:[#allocation0] sm:$0x3]
    %40 = vrot.lane.b32.xlu0 %v39, 122
    %v41 = vpop.permute.xlu0 %40
    %vm42 = vcmask 7168
    %s43 = scalar_lea.vmem %s1, 6
    %44 = vst.msk [vmem:[%s43] ss:$8 sm:$0x3] %vm42, %v41
    %v45 = vld [vmem:[#allocation0] sm:$0x3]
    %46 = vrot.lane.b32.xlu0 %v45, 121
    %v47 = vpop.permute.xlu0 %46
    %vm48 = vcmask 7168
    %s49 = scalar_lea.vmem %s1, 7
    %50 = vst.msk [vmem:[%s49] ss:$8 sm:$0x3] %vm48, %v47

// kernel: share_forward.1
$region0: #{share_forward.1}
  #allocation0 [shape = 'u32[]', space=smem, size = 0x4, offset = 0x4, fixed_abs, tag = 'smem constant byte address 0x4 - core index']
  #allocation1 [shape = 'u32[72,128]{1,0:T(1,128)}', space=vmem, size = 0x9000, scoped, tag = 'internal scratch']
  #allocation2 [shape = 'f32[16,64]{1,0:T(8,128)}', space=vmem, size = 0x2000, scoped, tag = 'scratch operand']
  %s0 = inlined_call_operand.smem [shape: u32[33], index: -1, kind: input, shape index: {}]
  %s1 = sld [smem:[%s0]]
  %s2 = scalar_lea.smem %s0, 1
  %s3 = sld [smem:[%s2]]
  %s4 = scalar_lea.smem %s0, 2
  %s5 = sld [smem:[%s4]]
  %s6 = scalar_lea.smem %s0, 3
  %s7 = sld [smem:[%s6]]
  %s8 = scalar_lea.smem %s0, 4
  %s9 = sld [smem:[%s8]]
  %s10 = scalar_lea.smem %s0, 5
  %s11 = sld [smem:[%s10]]
  %s12 = scalar_lea.smem %s0, 6
  %s13 = sld [smem:[%s12]]
  %s14 = scalar_lea.smem %s0, 7
  %s15 = sld [smem:[%s14]]
  %s16 = scalar_lea.smem %s0, 8
  %s17 = sld [smem:[%s16]]
  %s18 = scalar_lea.smem %s0, 9
  %s19 = sld [smem:[%s18]]
  %s20 = scalar_lea.smem %s0, 10
  %s21 = sld [smem:[%s20]]
  %s22 = scalar_lea.smem %s0, 11
  %s23 = sld [smem:[%s22]]
  %s24 = scalar_lea.smem %s0, 12
  %s25 = sld [smem:[%s24]]
  %s26 = scalar_lea.smem %s0, 13
  %s27 = sld [smem:[%s26]]
  %s28 = scalar_lea.smem %s0, 14
  %s29 = sld [smem:[%s28]]
  %s30 = scalar_lea.smem %s0, 15
  %s31 = sld [smem:[%s30]]
  %s32 = scalar_lea.smem %s0, 16
  %s33 = sld [smem:[%s32]]
  %s34 = scalar_lea.smem %s0, 17
  %s35 = sld [smem:[%s34]]
  %s36 = scalar_lea.smem %s0, 18
  %s37 = sld [smem:[%s36]]
  %s38 = scalar_lea.smem %s0, 19
  %s39 = sld [smem:[%s38]]
  %s40 = scalar_lea.smem %s0, 20
  %s41 = sld [smem:[%s40]]
  %s42 = scalar_lea.smem %s0, 21
  %s43 = sld [smem:[%s42]]
  %s44 = scalar_lea.smem %s0, 22
  %s45 = sld [smem:[%s44]]
  %s46 = scalar_lea.smem %s0, 23
  %s47 = sld [smem:[%s46]]
  %s48 = scalar_lea.smem %s0, 24
  %s49 = sld [smem:[%s48]]
  %s50 = scalar_lea.smem %s0, 25
  %s51 = sld [smem:[%s50]]
  %s52 = scalar_lea.smem %s0, 26
  %s53 = sld [smem:[%s52]]
  %s54 = scalar_lea.smem %s0, 27
  %s55 = sld [smem:[%s54]]
  %s56 = scalar_lea.smem %s0, 28
  %s57 = sld [smem:[%s56]]
  %s58 = scalar_lea.smem %s0, 29
  %s59 = sld [smem:[%s58]]
  %s60 = scalar_lea.smem %s0, 30
  %s61 = sld [smem:[%s60]]
  %s62 = scalar_lea.smem %s0, 31
  %s63 = sld [smem:[%s62]]
  %s64 = scalar_lea.smem %s0, 32
  %s65 = sld [smem:[%s64]]
  %66 = xla_tuple %s63, %s65
  %s67 = sld [smem:[#allocation0]]
  $region173: #{share_forward.1} parent=0
    _
  %s69 = ssub.s32 1, %s67
  %s70 = scalar_select 0, %s69, %s67
  $region1: #{share_forward.1} parent=0
    #allocation3 [shape = 'u8[512]{0}', space=vmem, size = 0x400, scoped, tag = 'output window, operand 1, single buffered']
    #allocation4 [shape = 's32[2]{0}', space=sflag, size = 0x8, scoped, tag = 'scoped memory for share_forward.1']
    %71 = vsyncpa [#allocation4], 0
    loop: start=0, step=1, limit=6
    $region2: #{share_forward.1} parent=1 // loop_pre_header
      _
    $region3: #{share_forward.1} parent=1 // loop_header
      %s73 = sphi 0, %s77
      %p74 = scmp.ge.s32.totalorder %s73, 6
      %s83 = sphi 0, %s85
      %s86 = sphi 0, %s83
      %s87 = sphi 0, %s86
      %s103 = sphi 0, %s87
      %s109 = sphi 0, %s111
      %s112 = sphi 0, %s109
      %s113 = sphi 0, %s112
      %s129 = sphi 0, %s113
      %s135 = sphi 0, %s137
      %s138 = sphi 0, %s135
      %s139 = sphi 0, %s138
      %s155 = sphi 0, %s139
      %s159 = sphi 0, %s159
      %s161 = sphi 0, %s159
      %s162 = sphi 0, %s161
      %s176 = sphi 0, %s162
      %s180 = sphi 0, %s180
      %s182 = sphi 0, %s180
      %s183 = sphi 0, %s182
      %s197 = sphi 0, %s183
      %s201 = sphi 0, %s201
      %s203 = sphi 0, %s201
      %s204 = sphi 0, %s203
      %s218 = sphi 0, %s204
      %s222 = sphi 0, %s222
      %s224 = sphi 0, %s222
      %s225 = sphi 0, %s224
      %s239 = sphi 0, %s225
      %s243 = sphi 0, %s243
      %s245 = sphi 0, %s243
      %s246 = sphi 0, %s245
      %s260 = sphi 0, %s246
      %s264 = sphi 0, %s264
      %s266 = sphi 0, %s264
      %s267 = sphi 0, %s266
      %s281 = sphi 0, %s267
      %s285 = sphi 0, %s285
      %s287 = sphi 0, %s285
      %s288 = sphi 0, %s287
      %s302 = sphi 0, %s288
      %s306 = sphi 0, %s306
      %s308 = sphi 0, %s306
      %s309 = sphi 0, %s308
      %s323 = sphi 0, %s309
      %s327 = sphi 0, %s327
      %s329 = sphi 0, %s327
      %s330 = sphi 0, %s329
      %s344 = sphi 0, %s330
      %s348 = sphi 0, %s348
      %s350 = sphi 0, %s348
      %s351 = sphi 0, %s350
      %s365 = sphi 0, %s351
      %s369 = sphi 0, %s369
      %s371 = sphi 0, %s369
      %s372 = sphi 0, %s371
      %s386 = sphi 0, %s372
      %s390 = sphi 0, %s390
      %s392 = sphi 0, %s390
      %s393 = sphi 0, %s392
      %s407 = sphi 0, %s393
      %s411 = sphi 0, %s411
      %s413 = sphi 0, %s411
      %s414 = sphi 0, %s413
      %s428 = sphi 0, %s414
      %s432 = sphi 0, %s432
      %s434 = sphi 0, %s432
      %s435 = sphi 0, %s434
      %s449 = sphi 0, %s435
      %s453 = sphi 0, %s453
      %s455 = sphi 0, %s453
      %s456 = sphi 0, %s455
      %s470 = sphi 0, %s456
      %s474 = sphi 0, %s474
      %s476 = sphi 0, %s474
      %s477 = sphi 0, %s476
      %s491 = sphi 0, %s477
      %s495 = sphi 0, %s495
      %s497 = sphi 0, %s495
      %s498 = sphi 0, %s497
      %s512 = sphi 0, %s498
      %s516 = sphi 0, %s516
      %s518 = sphi 0, %s516
      %s519 = sphi 0, %s518
      %s533 = sphi 0, %s519
      %s537 = sphi 0, %s537
      %s539 = sphi 0, %s537
      %s540 = sphi 0, %s539
      %s554 = sphi 0, %s540
      %s558 = sphi 0, %s558
      %s560 = sphi 0, %s558
      %s561 = sphi 0, %s560
      %s575 = sphi 0, %s561
      %s579 = sphi 0, %s579
      %s581 = sphi 0, %s579
      %s582 = sphi 0, %s581
      %s596 = sphi 0, %s582
      %s600 = sphi 0, %s600
      %s602 = sphi 0, %s600
      %s603 = sphi 0, %s602
      %s617 = sphi 0, %s603
      %s621 = sphi 0, %s621
      %s623 = sphi 0, %s621
      %s624 = sphi 0, %s623
      %s638 = sphi 0, %s624
      %s642 = sphi 0, %s642
      %s644 = sphi 0, %s642
      %s645 = sphi 0, %s644
      %s659 = sphi 0, %s645
      %s663 = sphi 0, %s663
      %s665 = sphi 0, %s663
      %s666 = sphi 0, %s665
      %s680 = sphi 0, %s666
      %s684 = sphi 0, %s684
      %s686 = sphi 0, %s684
      %s687 = sphi 0, %s686
      %s701 = sphi 0, %s687
      %s705 = sphi 0, %s705
      %s707 = sphi 0, %s705
      %s708 = sphi 0, %s707
      %s722 = sphi 0, %s708
      %s726 = sphi 0, %s726
      %s728 = sphi 0, %s726
      %s729 = sphi 0, %s728
      %s743 = sphi 0, %s729
      %s747 = sphi 0, %s747
      %s749 = sphi 0, %s747
      %s750 = sphi 0, %s749
      %s764 = sphi 0, %s750
      %s768 = sphi 0, %s768
      %s770 = sphi 0, %s768
      %s771 = sphi 0, %s770
      %s785 = sphi 0, %s771
    $region4: #{share_forward.1} parent=1 // loop_header_branch
      %76 = sbr.rel (%p74) target = $region8
    $region5: #{share_forward.1} parent=1 // loop_body
      %s78 = ssub.s32 %s73, 1
      %s79 = ssub.s32 %s73, 2
      %s80 = sadd.s32 %s73, 1
      %s81 = ssub.s32 %s73, %s80
      %p82 = scmp.eq.s32.totalorder %s81, 0
      %s84 = sadd.s32 %s83, 1
      %s85 = scalar_select %p82, %s83, %s84
      %p88 = pneg %p82
      %p89 = scmp.eq.s32.totalorder %s73, 3
      %p90 = por %p88, %p89
      %p91 = scmp.ne.s32.totalorder %s83, %s86
      %p92 = scmp.eq.s32.totalorder %s73, 0
      %p93 = por %p91, %p92
      %p94 = scmp.ne.s32.totalorder %s83, %s86
      %p95 = scmp.eq.s32.totalorder %s78, 3
      %p96 = por %p94, %p95
      %p97 = scmp.ne.s32.totalorder %s86, %s87
      %p98 = scmp.eq.s32.totalorder %s78, 0
      %p99 = por %p97, %p98
      %p100 = scmp.ne.s32.totalorder %s86, %s87
      %p101 = scmp.eq.s32.totalorder %s79, 3
      %p102 = por %p100, %p101
      %p104 = scmp.ne.s32.totalorder %s87, %s103
      %p105 = scmp.eq.s32.totalorder %s79, 0
      %p106 = por %p104, %p105
      %s107 = ssub.s32 %s73, %s80
      %p108 = scmp.eq.s32.totalorder %s107, 0
      %s110 = sadd.s32 %s109, 1
      %s111 = scalar_select %p108, %s109, %s110
      %p114 = pneg %p108
      %p115 = scmp.eq.s32.totalorder %s73, 3
      %p116 = por %p114, %p115
      %p117 = scmp.ne.s32.totalorder %s109, %s112
      %p118 = scmp.eq.s32.totalorder %s73, 0
      %p119 = por %p117, %p118
      %p120 = scmp.ne.s32.totalorder %s109, %s112
      %p121 = scmp.eq.s32.totalorder %s78, 3
      %p122 = por %p120, %p121
      %p123 = scmp.ne.s32.totalorder %s112, %s113
      %p124 = scmp.eq.s32.totalorder %s78, 0
      %p125 = por %p123, %p124
      %p126 = scmp.ne.s32.totalorder %s112, %s113
      %p127 = scmp.eq.s32.totalorder %s79, 3
      %p128 = por %p126, %p127
      %p130 = scmp.ne.s32.totalorder %s113, %s129
      %p131 = scmp.eq.s32.totalorder %s79, 0
      %p132 = por %p130, %p131
      %s133 = ssub.s32 %s73, %s80
      %p134 = scmp.eq.s32.totalorder %s133, 0
      %s136 = sadd.s32 %s135, 1
      %s137 = scalar_select %p134, %s135, %s136
      %p140 = pneg %p134
      %p141 = scmp.eq.s32.totalorder %s73, 3
      %p142 = por %p140, %p141
      %p143 = scmp.ne.s32.totalorder %s135, %s138
      %p144 = scmp.eq.s32.totalorder %s73, 0
      %p145 = por %p143, %p144
      %p146 = scmp.ne.s32.totalorder %s135, %s138
      %p147 = scmp.eq.s32.totalorder %s78, 3
      %p148 = por %p146, %p147
      %p149 = scmp.ne.s32.totalorder %s138, %s139
      %p150 = scmp.eq.s32.totalorder %s78, 0
      %p151 = por %p149, %p150
      %p152 = scmp.ne.s32.totalorder %s138, %s139
      %p153 = scmp.eq.s32.totalorder %s79, 3
      %p154 = por %p152, %p153
      %p156 = scmp.ne.s32.totalorder %s139, %s155
      %p157 = scmp.eq.s32.totalorder %s79, 0
      %p158 = por %p156, %p157
      %s160 = sadd.s32 %s159, 1
      %p163 = scmp.eq.s32.totalorder %s73, 3
      %p164 = scmp.ne.s32.totalorder %s159, %s161
      %p165 = scmp.eq.s32.totalorder %s73, 0
      %p166 = por %p164, %p165
      %p167 = scmp.ne.s32.totalorder %s159, %s161
      %p168 = scmp.eq.s32.totalorder %s78, 3
      %p169 = por %p167, %p168
      %p170 = scmp.ne.s32.totalorder %s161, %s162
      %p171 = scmp.eq.s32.totalorder %s78, 0
      %p172 = por %p170, %p171
      %p173 = scmp.ne.s32.totalorder %s161, %s162
      %p174 = scmp.eq.s32.totalorder %s79, 3
      %p175 = por %p173, %p174
      %p177 = scmp.ne.s32.totalorder %s162, %s176
      %p178 = scmp.eq.s32.totalorder %s79, 0
      %p179 = por %p177, %p178
      %s181 = sadd.s32 %s180, 1
      %p184 = scmp.eq.s32.totalorder %s73, 3
      %p185 = scmp.ne.s32.totalorder %s180, %s182
      %p186 = scmp.eq.s32.totalorder %s73, 0
      %p187 = por %p185, %p186
      %p188 = scmp.ne.s32.totalorder %s180, %s182
      %p189 = scmp.eq.s32.totalorder %s78, 3
      %p190 = por %p188, %p189
      %p191 = scmp.ne.s32.totalorder %s182, %s183
      %p192 = scmp.eq.s32.totalorder %s78, 0
      %p193 = por %p191, %p192
      %p194 = scmp.ne.s32.totalorder %s182, %s183
      %p195 = scmp.eq.s32.totalorder %s79, 3
      %p196 = por %p194, %p195
      %p198 = scmp.ne.s32.totalorder %s183, %s197
      %p199 = scmp.eq.s32.totalorder %s79, 0
      %p200 = por %p198, %p199
      %s202 = sadd.s32 %s201, 1
      %p205 = scmp.eq.s32.totalorder %s73, 3
      %p206 = scmp.ne.s32.totalorder %s201, %s203
      %p207 = scmp.eq.s32.totalorder %s73, 0
      %p208 = por %p206, %p207
      %p209 = scmp.ne.s32.totalorder %s201, %s203
      %p210 = scmp.eq.s32.totalorder %s78, 3
      %p211 = por %p209, %p210
      %p212 = scmp.ne.s32.totalorder %s203, %s204
      %p213 = scmp.eq.s32.totalorder %s78, 0
      %p214 = por %p212, %p213
      %p215 = scmp.ne.s32.totalorder %s203, %s204
      %p216 = scmp.eq.s32.totalorder %s79, 3
      %p217 = por %p215, %p216
      %p219 = scmp.ne.s32.totalorder %s204, %s218
      %p220 = scmp.eq.s32.totalorder %s79, 0
      %p221 = por %p219, %p220
      %s223 = sadd.s32 %s222, 1
      %p226 = scmp.eq.s32.totalorder %s73, 3
      %p227 = scmp.ne.s32.totalorder %s222, %s224
      %p228 = scmp.eq.s32.totalorder %s73, 0
      %p229 = por %p227, %p228
      %p230 = scmp.ne.s32.totalorder %s222, %s224
      %p231 = scmp.eq.s32.totalorder %s78, 3
      %p232 = por %p230, %p231
      %p233 = scmp.ne.s32.totalorder %s224, %s225
      %p234 = scmp.eq.s32.totalorder %s78, 0
      %p235 = por %p233, %p234
      %p236 = scmp.ne.s32.totalorder %s224, %s225
      %p237 = scmp.eq.s32.totalorder %s79, 3
      %p238 = por %p236, %p237
      %p240 = scmp.ne.s32.totalorder %s225, %s239
      %p241 = scmp.eq.s32.totalorder %s79, 0
      %p242 = por %p240, %p241
      %s244 = sadd.s32 %s243, 1
      %p247 = scmp.eq.s32.totalorder %s73, 3
      %p248 = scmp.ne.s32.totalorder %s243, %s245
      %p249 = scmp.eq.s32.totalorder %s73, 0
      %p250 = por %p248, %p249
      %p251 = scmp.ne.s32.totalorder %s243, %s245
      %p252 = scmp.eq.s32.totalorder %s78, 3
      %p253 = por %p251, %p252
      %p254 = scmp.ne.s32.totalorder %s245, %s246
      %p255 = scmp.eq.s32.totalorder %s78, 0
      %p256 = por %p254, %p255
      %p257 = scmp.ne.s32.totalorder %s245, %s246
      %p258 = scmp.eq.s32.totalorder %s79, 3
      %p259 = por %p257, %p258
      %p261 = scmp.ne.s32.totalorder %s246, %s260
      %p262 = scmp.eq.s32.totalorder %s79, 0
      %p263 = por %p261, %p262
      %s265 = sadd.s32 %s264, 1
      %p268 = scmp.eq.s32.totalorder %s73, 3
      %p269 = scmp.ne.s32.totalorder %s264, %s266
      %p270 = scmp.eq.s32.totalorder %s73, 0
      %p271 = por %p269, %p270
      %p272 = scmp.ne.s32.totalorder %s264, %s266
      %p273 = scmp.eq.s32.totalorder %s78, 3
      %p274 = por %p272, %p273
      %p275 = scmp.ne.s32.totalorder %s266, %s267
      %p276 = scmp.eq.s32.totalorder %s78, 0
      %p277 = por %p275, %p276
      %p278 = scmp.ne.s32.totalorder %s266, %s267
      %p279 = scmp.eq.s32.totalorder %s79, 3
      %p280 = por %p278, %p279
      %p282 = scmp.ne.s32.totalorder %s267, %s281
      %p283 = scmp.eq.s32.totalorder %s79, 0
      %p284 = por %p282, %p283
      %s286 = sadd.s32 %s285, 1
      %p289 = scmp.eq.s32.totalorder %s73, 3
      %p290 = scmp.ne.s32.totalorder %s285, %s287
      %p291 = scmp.eq.s32.totalorder %s73, 0
      %p292 = por %p290, %p291
      %p293 = scmp.ne.s32.totalorder %s285, %s287
      %p294 = scmp.eq.s32.totalorder %s78, 3
      %p295 = por %p293, %p294
      %p296 = scmp.ne.s32.totalorder %s287, %s288
      %p297 = scmp.eq.s32.totalorder %s78, 0
      %p298 = por %p296, %p297
      %p299 = scmp.ne.s32.totalorder %s287, %s288
      %p300 = scmp.eq.s32.totalorder %s79, 3
      %p301 = por %p299, %p300
      %p303 = scmp.ne.s32.totalorder %s288, %s302
      %p304 = scmp.eq.s32.totalorder %s79, 0
      %p305 = por %p303, %p304
      %s307 = sadd.s32 %s306, 1
      %p310 = scmp.eq.s32.totalorder %s73, 3
      %p311 = scmp.ne.s32.totalorder %s306, %s308
      %p312 = scmp.eq.s32.totalorder %s73, 0
      %p313 = por %p311, %p312
      %p314 = scmp.ne.s32.totalorder %s306, %s308
      %p315 = scmp.eq.s32.totalorder %s78, 3
      %p316 = por %p314, %p315
      %p317 = scmp.ne.s32.totalorder %s308, %s309
      %p318 = scmp.eq.s32.totalorder %s78, 0
      %p319 = por %p317, %p318
      %p320 = scmp.ne.s32.totalorder %s308, %s309
      %p321 = scmp.eq.s32.totalorder %s79, 3
      %p322 = por %p320, %p321
      %p324 = scmp.ne.s32.totalorder %s309, %s323
      %p325 = scmp.eq.s32.totalorder %s79, 0
      %p326 = por %p324, %p325
      %s328 = sadd.s32 %s327, 1
      %p331 = scmp.eq.s32.totalorder %s73, 3
      %p332 = scmp.ne.s32.totalorder %s327, %s329
      %p333 = scmp.eq.s32.totalorder %s73, 0
      %p334 = por %p332, %p333
      %p335 = scmp.ne.s32.totalorder %s327, %s329
      %p336 = scmp.eq.s32.totalorder %s78, 3
      %p337 = por %p335, %p336
      %p338 = scmp.ne.s32.totalorder %s329, %s330
      %p339 = scmp.eq.s32.totalorder %s78, 0
      %p340 = por %p338, %p339
      %p341 = scmp.ne.s32.totalorder %s329, %s330
      %p342 = scmp.eq.s32.totalorder %s79, 3
      %p343 = por %p341, %p342
      %p345 = scmp.ne.s32.totalorder %s330, %s344
      %p346 = scmp.eq.s32.totalorder %s79, 0
      %p347 = por %p345, %p346
      %s349 = sadd.s32 %s348, 1
      %p352 = scmp.eq.s32.totalorder %s73, 3
      %p353 = scmp.ne.s32.totalorder %s348, %s350
      %p354 = scmp.eq.s32.totalorder %s73, 0
      %p355 = por %p353, %p354
      %p356 = scmp.ne.s32.totalorder %s348, %s350
      %p357 = scmp.eq.s32.totalorder %s78, 3
      %p358 = por %p356, %p357
      %p359 = scmp.ne.s32.totalorder %s350, %s351
      %p360 = scmp.eq.s32.totalorder %s78, 0
      %p361 = por %p359, %p360
      %p362 = scmp.ne.s32.totalorder %s350, %s351
      %p363 = scmp.eq.s32.totalorder %s79, 3
      %p364 = por %p362, %p363
      %p366 = scmp.ne.s32.totalorder %s351, %s365
      %p367 = scmp.eq.s32.totalorder %s79, 0
      %p368 = por %p366, %p367
      %s370 = sadd.s32 %s369, 1
      %p373 = scmp.eq.s32.totalorder %s73, 3
      %p374 = scmp.ne.s32.totalorder %s369, %s371
      %p375 = scmp.eq.s32.totalorder %s73, 0
      %p376 = por %p374, %p375
      %p377 = scmp.ne.s32.totalorder %s369, %s371
      %p378 = scmp.eq.s32.totalorder %s78, 3
      %p379 = por %p377, %p378
      %p380 = scmp.ne.s32.totalorder %s371, %s372
      %p381 = scmp.eq.s32.totalorder %s78, 0
      %p382 = por %p380, %p381
      %p383 = scmp.ne.s32.totalorder %s371, %s372
      %p384 = scmp.eq.s32.totalorder %s79, 3
      %p385 = por %p383, %p384
      %p387 = scmp.ne.s32.totalorder %s372, %s386
      %p388 = scmp.eq.s32.totalorder %s79, 0
      %p389 = por %p387, %p388
      %s391 = sadd.s32 %s390, 1
      %p394 = scmp.eq.s32.totalorder %s73, 3
      %p395 = scmp.ne.s32.totalorder %s390, %s392
      %p396 = scmp.eq.s32.totalorder %s73, 0
      %p397 = por %p395, %p396
      %p398 = scmp.ne.s32.totalorder %s390, %s392
      %p399 = scmp.eq.s32.totalorder %s78, 3
      %p400 = por %p398, %p399
      %p401 = scmp.ne.s32.totalorder %s392, %s393
      %p402 = scmp.eq.s32.totalorder %s78, 0
      %p403 = por %p401, %p402
      %p404 = scmp.ne.s32.totalorder %s392, %s393
      %p405 = scmp.eq.s32.totalorder %s79, 3
      %p406 = por %p404, %p405
      %p408 = scmp.ne.s32.totalorder %s393, %s407
      %p409 = scmp.eq.s32.totalorder %s79, 0
      %p410 = por %p408, %p409
      %s412 = sadd.s32 %s411, 1
      %p415 = scmp.eq.s32.totalorder %s73, 3
      %p416 = scmp.ne.s32.totalorder %s411, %s413
      %p417 = scmp.eq.s32.totalorder %s73, 0
      %p418 = por %p416, %p417
      %p419 = scmp.ne.s32.totalorder %s411, %s413
      %p420 = scmp.eq.s32.totalorder %s78, 3
      %p421 = por %p419, %p420
      %p422 = scmp.ne.s32.totalorder %s413, %s414
      %p423 = scmp.eq.s32.totalorder %s78, 0
      %p424 = por %p422, %p423
      %p425 = scmp.ne.s32.totalorder %s413, %s414
      %p426 = scmp.eq.s32.totalorder %s79, 3
      %p427 = por %p425, %p426
      %p429 = scmp.ne.s32.totalorder %s414, %s428
      %p430 = scmp.eq.s32.totalorder %s79, 0
      %p431 = por %p429, %p430
      %s433 = sadd.s32 %s432, 1
      %p436 = scmp.eq.s32.totalorder %s73, 3
      %p437 = scmp.ne.s32.totalorder %s432, %s434
      %p438 = scmp.eq.s32.totalorder %s73, 0
      %p439 = por %p437, %p438
      %p440 = scmp.ne.s32.totalorder %s432, %s434
      %p441 = scmp.eq.s32.totalorder %s78, 3
      %p442 = por %p440, %p441
      %p443 = scmp.ne.s32.totalorder %s434, %s435
      %p444 = scmp.eq.s32.totalorder %s78, 0
      %p445 = por %p443, %p444
      %p446 = scmp.ne.s32.totalorder %s434, %s435
      %p447 = scmp.eq.s32.totalorder %s79, 3
      %p448 = por %p446, %p447
      %p450 = scmp.ne.s32.totalorder %s435, %s449
      %p451 = scmp.eq.s32.totalorder %s79, 0
      %p452 = por %p450, %p451
      %s454 = sadd.s32 %s453, 1
      %p457 = scmp.eq.s32.totalorder %s73, 3
      %p458 = scmp.ne.s32.totalorder %s453, %s455
      %p459 = scmp.eq.s32.totalorder %s73, 0
      %p460 = por %p458, %p459
      %p461 = scmp.ne.s32.totalorder %s453, %s455
      %p462 = scmp.eq.s32.totalorder %s78, 3
      %p463 = por %p461, %p462
      %p464 = scmp.ne.s32.totalorder %s455, %s456
      %p465 = scmp.eq.s32.totalorder %s78, 0
      %p466 = por %p464, %p465
      %p467 = scmp.ne.s32.totalorder %s455, %s456
      %p468 = scmp.eq.s32.totalorder %s79, 3
      %p469 = por %p467, %p468
      %p471 = scmp.ne.s32.totalorder %s456, %s470
      %p472 = scmp.eq.s32.totalorder %s79, 0
      %p473 = por %p471, %p472
      %s475 = sadd.s32 %s474, 1
      %p478 = scmp.eq.s32.totalorder %s73, 3
      %p479 = scmp.ne.s32.totalorder %s474, %s476
      %p480 = scmp.eq.s32.totalorder %s73, 0
      %p481 = por %p479, %p480
      %p482 = scmp.ne.s32.totalorder %s474, %s476
      %p483 = scmp.eq.s32.totalorder %s78, 3
      %p484 = por %p482, %p483
      %p485 = scmp.ne.s32.totalorder %s476, %s477
      %p486 = scmp.eq.s32.totalorder %s78, 0
      %p487 = por %p485, %p486
      %p488 = scmp.ne.s32.totalorder %s476, %s477
      %p489 = scmp.eq.s32.totalorder %s79, 3
      %p490 = por %p488, %p489
      %p492 = scmp.ne.s32.totalorder %s477, %s491
      %p493 = scmp.eq.s32.totalorder %s79, 0
      %p494 = por %p492, %p493
      %s496 = sadd.s32 %s495, 1
      %p499 = scmp.eq.s32.totalorder %s73, 3
      %p500 = scmp.ne.s32.totalorder %s495, %s497
      %p501 = scmp.eq.s32.totalorder %s73, 0
      %p502 = por %p500, %p501
      %p503 = scmp.ne.s32.totalorder %s495, %s497
      %p504 = scmp.eq.s32.totalorder %s78, 3
      %p505 = por %p503, %p504
      %p506 = scmp.ne.s32.totalorder %s497, %s498
      %p507 = scmp.eq.s32.totalorder %s78, 0
      %p508 = por %p506, %p507
      %p509 = scmp.ne.s32.totalorder %s497, %s498
      %p510 = scmp.eq.s32.totalorder %s79, 3
      %p511 = por %p509, %p510
      %p513 = scmp.ne.s32.totalorder %s498, %s512
      %p514 = scmp.eq.s32.totalorder %s79, 0
      %p515 = por %p513, %p514
      %s517 = sadd.s32 %s516, 1
      %p520 = scmp.eq.s32.totalorder %s73, 3
      %p521 = scmp.ne.s32.totalorder %s516, %s518
      %p522 = scmp.eq.s32.totalorder %s73, 0
      %p523 = por %p521, %p522
      %p524 = scmp.ne.s32.totalorder %s516, %s518
      %p525 = scmp.eq.s32.totalorder %s78, 3
      %p526 = por %p524, %p525
      %p527 = scmp.ne.s32.totalorder %s518, %s519
      %p528 = scmp.eq.s32.totalorder %s78, 0
      %p529 = por %p527, %p528
      %p530 = scmp.ne.s32.totalorder %s518, %s519
      %p531 = scmp.eq.s32.totalorder %s79, 3
      %p532 = por %p530, %p531
      %p534 = scmp.ne.s32.totalorder %s519, %s533
      %p535 = scmp.eq.s32.totalorder %s79, 0
      %p536 = por %p534, %p535
      %s538 = sadd.s32 %s537, 1
      %p541 = scmp.eq.s32.totalorder %s73, 3
      %p542 = scmp.ne.s32.totalorder %s537, %s539
      %p543 = scmp.eq.s32.totalorder %s73, 0
      %p544 = por %p542, %p543
      %p545 = scmp.ne.s32.totalorder %s537, %s539
      %p546 = scmp.eq.s32.totalorder %s78, 3
      %p547 = por %p545, %p546
      %p548 = scmp.ne.s32.totalorder %s539, %s540
      %p549 = scmp.eq.s32.totalorder %s78, 0
      %p550 = por %p548, %p549
      %p551 = scmp.ne.s32.totalorder %s539, %s540
      %p552 = scmp.eq.s32.totalorder %s79, 3
      %p553 = por %p551, %p552
      %p555 = scmp.ne.s32.totalorder %s540, %s554
      %p556 = scmp.eq.s32.totalorder %s79, 0
      %p557 = por %p555, %p556
      %s559 = sadd.s32 %s558, 1
      %p562 = scmp.eq.s32.totalorder %s73, 3
      %p563 = scmp.ne.s32.totalorder %s558, %s560
      %p564 = scmp.eq.s32.totalorder %s73, 0
      %p565 = por %p563, %p564
      %p566 = scmp.ne.s32.totalorder %s558, %s560
      %p567 = scmp.eq.s32.totalorder %s78, 3
      %p568 = por %p566, %p567
      %p569 = scmp.ne.s32.totalorder %s560, %s561
      %p570 = scmp.eq.s32.totalorder %s78, 0
      %p571 = por %p569, %p570
      %p572 = scmp.ne.s32.totalorder %s560, %s561
      %p573 = scmp.eq.s32.totalorder %s79, 3
      %p574 = por %p572, %p573
      %p576 = scmp.ne.s32.totalorder %s561, %s575
      %p577 = scmp.eq.s32.totalorder %s79, 0
      %p578 = por %p576, %p577
      %s580 = sadd.s32 %s579, 1
      %p583 = scmp.eq.s32.totalorder %s73, 3
      %p584 = scmp.ne.s32.totalorder %s579, %s581
      %p585 = scmp.eq.s32.totalorder %s73, 0
      %p586 = por %p584, %p585
      %p587 = scmp.ne.s32.totalorder %s579, %s581
      %p588 = scmp.eq.s32.totalorder %s78, 3
      %p589 = por %p587, %p588
      %p590 = scmp.ne.s32.totalorder %s581, %s582
      %p591 = scmp.eq.s32.totalorder %s78, 0
      %p592 = por %p590, %p591
      %p593 = scmp.ne.s32.totalorder %s581, %s582
      %p594 = scmp.eq.s32.totalorder %s79, 3
      %p595 = por %p593, %p594
      %p597 = scmp.ne.s32.totalorder %s582, %s596
      %p598 = scmp.eq.s32.totalorder %s79, 0
      %p599 = por %p597, %p598
      %s601 = sadd.s32 %s600, 1
      %p604 = scmp.eq.s32.totalorder %s73, 3
      %p605 = scmp.ne.s32.totalorder %s600, %s602
      %p606 = scmp.eq.s32.totalorder %s73, 0
      %p607 = por %p605, %p606
      %p608 = scmp.ne.s32.totalorder %s600, %s602
      %p609 = scmp.eq.s32.totalorder %s78, 3
      %p610 = por %p608, %p609
      %p611 = scmp.ne.s32.totalorder %s602, %s603
      %p612 = scmp.eq.s32.totalorder %s78, 0
      %p613 = por %p611, %p612
      %p614 = scmp.ne.s32.totalorder %s602, %s603
      %p615 = scmp.eq.s32.totalorder %s79, 3
      %p616 = por %p614, %p615
      %p618 = scmp.ne.s32.totalorder %s603, %s617
      %p619 = scmp.eq.s32.totalorder %s79, 0
      %p620 = por %p618, %p619
      %s622 = sadd.s32 %s621, 1
      %p625 = scmp.eq.s32.totalorder %s73, 3
      %p626 = scmp.ne.s32.totalorder %s621, %s623
      %p627 = scmp.eq.s32.totalorder %s73, 0
      %p628 = por %p626, %p627
      %p629 = scmp.ne.s32.totalorder %s621, %s623
      %p630 = scmp.eq.s32.totalorder %s78, 3
      %p631 = por %p629, %p630
      %p632 = scmp.ne.s32.totalorder %s623, %s624
      %p633 = scmp.eq.s32.totalorder %s78, 0
      %p634 = por %p632, %p633
      %p635 = scmp.ne.s32.totalorder %s623, %s624
      %p636 = scmp.eq.s32.totalorder %s79, 3
      %p637 = por %p635, %p636
      %p639 = scmp.ne.s32.totalorder %s624, %s638
      %p640 = scmp.eq.s32.totalorder %s79, 0
      %p641 = por %p639, %p640
      %s643 = sadd.s32 %s642, 1
      %p646 = scmp.eq.s32.totalorder %s73, 3
      %p647 = scmp.ne.s32.totalorder %s642, %s644
      %p648 = scmp.eq.s32.totalorder %s73, 0
      %p649 = por %p647, %p648
      %p650 = scmp.ne.s32.totalorder %s642, %s644
      %p651 = scmp.eq.s32.totalorder %s78, 3
      %p652 = por %p650, %p651
      %p653 = scmp.ne.s32.totalorder %s644, %s645
      %p654 = scmp.eq.s32.totalorder %s78, 0
      %p655 = por %p653, %p654
      %p656 = scmp.ne.s32.totalorder %s644, %s645
      %p657 = scmp.eq.s32.totalorder %s79, 3
      %p658 = por %p656, %p657
      %p660 = scmp.ne.s32.totalorder %s645, %s659
      %p661 = scmp.eq.s32.totalorder %s79, 0
      %p662 = por %p660, %p661
      %s664 = sadd.s32 %s663, 1
      %p667 = scmp.eq.s32.totalorder %s73, 3
      %p668 = scmp.ne.s32.totalorder %s663, %s665
      %p669 = scmp.eq.s32.totalorder %s73, 0
      %p670 = por %p668, %p669
      %p671 = scmp.ne.s32.totalorder %s663, %s665
      %p672 = scmp.eq.s32.totalorder %s78, 3
      %p673 = por %p671, %p672
      %p674 = scmp.ne.s32.totalorder %s665, %s666
      %p675 = scmp.eq.s32.totalorder %s78, 0
      %p676 = por %p674, %p675
      %p677 = scmp.ne.s32.totalorder %s665, %s666
      %p678 = scmp.eq.s32.totalorder %s79, 3
      %p679 = por %p677, %p678
      %p681 = scmp.ne.s32.totalorder %s666, %s680
      %p682 = scmp.eq.s32.totalorder %s79, 0
      %p683 = por %p681, %p682
      %s685 = sadd.s32 %s684, 1
      %p688 = scmp.eq.s32.totalorder %s73, 3
      %p689 = scmp.ne.s32.totalorder %s684, %s686
      %p690 = scmp.eq.s32.totalorder %s73, 0
      %p691 = por %p689, %p690
      %p692 = scmp.ne.s32.totalorder %s684, %s686
      %p693 = scmp.eq.s32.totalorder %s78, 3
      %p694 = por %p692, %p693
      %p695 = scmp.ne.s32.totalorder %s686, %s687
      %p696 = scmp.eq.s32.totalorder %s78, 0
      %p697 = por %p695, %p696
      %p698 = scmp.ne.s32.totalorder %s686, %s687
      %p699 = scmp.eq.s32.totalorder %s79, 3
      %p700 = por %p698, %p699
      %p702 = scmp.ne.s32.totalorder %s687, %s701
      %p703 = scmp.eq.s32.totalorder %s79, 0
      %p704 = por %p702, %p703
      %s706 = sadd.s32 %s705, 1
      %p709 = scmp.eq.s32.totalorder %s73, 3
      %p710 = scmp.ne.s32.totalorder %s705, %s707
      %p711 = scmp.eq.s32.totalorder %s73, 0
      %p712 = por %p710, %p711
      %p713 = scmp.ne.s32.totalorder %s705, %s707
      %p714 = scmp.eq.s32.totalorder %s78, 3
      %p715 = por %p713, %p714
      %p716 = scmp.ne.s32.totalorder %s707, %s708
      %p717 = scmp.eq.s32.totalorder %s78, 0
      %p718 = por %p716, %p717
      %p719 = scmp.ne.s32.totalorder %s707, %s708
      %p720 = scmp.eq.s32.totalorder %s79, 3
      %p721 = por %p719, %p720
      %p723 = scmp.ne.s32.totalorder %s708, %s722
      %p724 = scmp.eq.s32.totalorder %s79, 0
      %p725 = por %p723, %p724
      %s727 = sadd.s32 %s726, 1
      %p730 = scmp.eq.s32.totalorder %s73, 3
      %p731 = scmp.ne.s32.totalorder %s726, %s728
      %p732 = scmp.eq.s32.totalorder %s73, 0
      %p733 = por %p731, %p732
      %p734 = scmp.ne.s32.totalorder %s726, %s728
      %p735 = scmp.eq.s32.totalorder %s78, 3
      %p736 = por %p734, %p735
      %p737 = scmp.ne.s32.totalorder %s728, %s729
      %p738 = scmp.eq.s32.totalorder %s78, 0
      %p739 = por %p737, %p738
      %p740 = scmp.ne.s32.totalorder %s728, %s729
      %p741 = scmp.eq.s32.totalorder %s79, 3
      %p742 = por %p740, %p741
      %p744 = scmp.ne.s32.totalorder %s729, %s743
      %p745 = scmp.eq.s32.totalorder %s79, 0
      %p746 = por %p744, %p745
      %s748 = sadd.s32 %s747, 1
      %p751 = scmp.eq.s32.totalorder %s73, 3
      %p752 = scmp.ne.s32.totalorder %s747, %s749
      %p753 = scmp.eq.s32.totalorder %s73, 0
      %p754 = por %p752, %p753
      %p755 = scmp.ne.s32.totalorder %s747, %s749
      %p756 = scmp.eq.s32.totalorder %s78, 3
      %p757 = por %p755, %p756
      %p758 = scmp.ne.s32.totalorder %s749, %s750
      %p759 = scmp.eq.s32.totalorder %s78, 0
      %p760 = por %p758, %p759
      %p761 = scmp.ne.s32.totalorder %s749, %s750
      %p762 = scmp.eq.s32.totalorder %s79, 3
      %p763 = por %p761, %p762
      %p765 = scmp.ne.s32.totalorder %s750, %s764
      %p766 = scmp.eq.s32.totalorder %s79, 0
      %p767 = por %p765, %p766
      %s769 = sadd.s32 %s768, 1
      %p772 = scmp.eq.s32.totalorder %s73, 3
      %p773 = scmp.ne.s32.totalorder %s768, %s770
      %p774 = scmp.eq.s32.totalorder %s73, 0
      %p775 = por %p773, %p774
      %p776 = scmp.ne.s32.totalorder %s768, %s770
      %p777 = scmp.eq.s32.totalorder %s78, 3
      %p778 = por %p776, %p777
      %p779 = scmp.ne.s32.totalorder %s770, %s771
      %p780 = scmp.eq.s32.totalorder %s78, 0
      %p781 = por %p779, %p780
      %p782 = scmp.ne.s32.totalorder %s770, %s771
      %p783 = scmp.eq.s32.totalorder %s79, 3
      %p784 = por %p782, %p783
      %p786 = scmp.ne.s32.totalorder %s771, %s785
      %p787 = scmp.eq.s32.totalorder %s79, 0
      %p788 = por %p786, %p787
      %p789 = scmp.le.s32.totalorder 1, %s73
      %p790 = scmp.lt.s32.totalorder %s73, 5
      %p791 = pnand %p789, %p790
      %p792 = pneg %p791
      // Predicated region
      $region9: #{share_forward.1} parent=5 // pred_check
        _
      $region10: #{share_forward.1} parent=5 // pred_check_branch
        %794 = sbr.rel (%p791) target = $region12
      $region11: #{share_forward.1} parent=5 // pred_region
        %s795 = ssub.s32 %s73, 1
        // Predicated region
        $region13: #{share_forward.1} parent=11 // pred_check
          %p796 = pneg %p172
        $region14: #{share_forward.1} parent=11 // pred_check_branch
          %798 = sbr.rel (%p796) target = $region16
        $region15: #{share_forward.1} parent=11 // pred_region
          _
        $region16: #{share_forward.1} parent=11 // pred_fallthru
          _
        // Predicated region
        $region17: #{share_forward.1} parent=11 // pred_check
          %p799 = pneg %p193
        $region18: #{share_forward.1} parent=11 // pred_check_branch
          %801 = sbr.rel (%p799) target = $region20
        $region19: #{share_forward.1} parent=11 // pred_region
          _
        $region20: #{share_forward.1} parent=11 // pred_fallthru
          _
        // Predicated region
        $region21: #{share_forward.1} parent=11 // pred_check
          %p802 = pneg %p214
        $region22: #{share_forward.1} parent=11 // pred_check_branch
          %804 = sbr.rel (%p802) target = $region24
        $region23: #{share_forward.1} parent=11 // pred_region
          _
        $region24: #{share_forward.1} parent=11 // pred_fallthru
          _
        // Predicated region
        $region25: #{share_forward.1} parent=11 // pred_check
          %p805 = pneg %p235
        $region26: #{share_forward.1} parent=11 // pred_check_branch
          %807 = sbr.rel (%p805) target = $region28
        $region27: #{share_forward.1} parent=11 // pred_region
          _
        $region28: #{share_forward.1} parent=11 // pred_fallthru
          _
        // Predicated region
        $region29: #{share_forward.1} parent=11 // pred_check
          %p808 = pneg %p256
        $region30: #{share_forward.1} parent=11 // pred_check_branch
          %810 = sbr.rel (%p808) target = $region32
        $region31: #{share_forward.1} parent=11 // pred_region
          _
        $region32: #{share_forward.1} parent=11 // pred_fallthru
          _
        // Predicated region
        $region33: #{share_forward.1} parent=11 // pred_check
          %p811 = pneg %p277
        $region34: #{share_forward.1} parent=11 // pred_check_branch
          %813 = sbr.rel (%p811) target = $region36
        $region35: #{share_forward.1} parent=11 // pred_region
          _
        $region36: #{share_forward.1} parent=11 // pred_fallthru
          _
        // Predicated region
        $region37: #{share_forward.1} parent=11 // pred_check
          %p814 = pneg %p298
        $region38: #{share_forward.1} parent=11 // pred_check_branch
          %816 = sbr.rel (%p814) target = $region40
        $region39: #{share_forward.1} parent=11 // pred_region
          _
        $region40: #{share_forward.1} parent=11 // pred_fallthru
          _
        // Predicated region
        $region41: #{share_forward.1} parent=11 // pred_check
          %p817 = pneg %p319
        $region42: #{share_forward.1} parent=11 // pred_check_branch
          %819 = sbr.rel (%p817) target = $region44
        $region43: #{share_forward.1} parent=11 // pred_region
          _
        $region44: #{share_forward.1} parent=11 // pred_fallthru
          _
        // Predicated region
        $region45: #{share_forward.1} parent=11 // pred_check
          %p820 = pneg %p340
        $region46: #{share_forward.1} parent=11 // pred_check_branch
          %822 = sbr.rel (%p820) target = $region48
        $region47: #{share_forward.1} parent=11 // pred_region
          _
        $region48: #{share_forward.1} parent=11 // pred_fallthru
          _
        // Predicated region
        $region49: #{share_forward.1} parent=11 // pred_check
          %p823 = pneg %p361
        $region50: #{share_forward.1} parent=11 // pred_check_branch
          %825 = sbr.rel (%p823) target = $region52
        $region51: #{share_forward.1} parent=11 // pred_region
          _
        $region52: #{share_forward.1} parent=11 // pred_fallthru
          _
        // Predicated region
        $region53: #{share_forward.1} parent=11 // pred_check
          %p826 = pneg %p382
        $region54: #{share_forward.1} parent=11 // pred_check_branch
          %828 = sbr.rel (%p826) target = $region56
        $region55: #{share_forward.1} parent=11 // pred_region
          _
        $region56: #{share_forward.1} parent=11 // pred_fallthru
          _
        // Predicated region
        $region57: #{share_forward.1} parent=11 // pred_check
          %p829 = pneg %p403
        $region58: #{share_forward.1} parent=11 // pred_check_branch
          %831 = sbr.rel (%p829) target = $region60
        $region59: #{share_forward.1} parent=11 // pred_region
          _
        $region60: #{share_forward.1} parent=11 // pred_fallthru
          _
        // Predicated region
        $region61: #{share_forward.1} parent=11 // pred_check
          %p832 = pneg %p424
        $region62: #{share_forward.1} parent=11 // pred_check_branch
          %834 = sbr.rel (%p832) target = $region64
        $region63: #{share_forward.1} parent=11 // pred_region
          _
        $region64: #{share_forward.1} parent=11 // pred_fallthru
          _
        // Predicated region
        $region65: #{share_forward.1} parent=11 // pred_check
          %p835 = pneg %p445
        $region66: #{share_forward.1} parent=11 // pred_check_branch
          %837 = sbr.rel (%p835) target = $region68
        $region67: #{share_forward.1} parent=11 // pred_region
          _
        $region68: #{share_forward.1} parent=11 // pred_fallthru
          _
        // Predicated region
        $region69: #{share_forward.1} parent=11 // pred_check
          %p838 = pneg %p466
        $region70: #{share_forward.1} parent=11 // pred_check_branch
          %840 = sbr.rel (%p838) target = $region72
        $region71: #{share_forward.1} parent=11 // pred_region
          _
        $region72: #{share_forward.1} parent=11 // pred_fallthru
          _
        // Predicated region
        $region73: #{share_forward.1} parent=11 // pred_check
          %p841 = pneg %p487
        $region74: #{share_forward.1} parent=11 // pred_check_branch
          %843 = sbr.rel (%p841) target = $region76
        $region75: #{share_forward.1} parent=11 // pred_region
          _
        $region76: #{share_forward.1} parent=11 // pred_fallthru
          _
        // Predicated region
        $region77: #{share_forward.1} parent=11 // pred_check
          %p844 = pneg %p508
        $region78: #{share_forward.1} parent=11 // pred_check_branch
          %846 = sbr.rel (%p844) target = $region80
        $region79: #{share_forward.1} parent=11 // pred_region
          _
        $region80: #{share_forward.1} parent=11 // pred_fallthru
          _
        // Predicated region
        $region81: #{share_forward.1} parent=11 // pred_check
          %p847 = pneg %p529
        $region82: #{share_forward.1} parent=11 // pred_check_branch
          %849 = sbr.rel (%p847) target = $region84
        $region83: #{share_forward.1} parent=11 // pred_region
          _
        $region84: #{share_forward.1} parent=11 // pred_fallthru
          _
        // Predicated region
        $region85: #{share_forward.1} parent=11 // pred_check
          %p850 = pneg %p550
        $region86: #{share_forward.1} parent=11 // pred_check_branch
          %852 = sbr.rel (%p850) target = $region88
        $region87: #{share_forward.1} parent=11 // pred_region
          _
        $region88: #{share_forward.1} parent=11 // pred_fallthru
          _
        // Predicated region
        $region89: #{share_forward.1} parent=11 // pred_check
          %p853 = pneg %p571
        $region90: #{share_forward.1} parent=11 // pred_check_branch
          %855 = sbr.rel (%p853) target = $region92
        $region91: #{share_forward.1} parent=11 // pred_region
          _
        $region92: #{share_forward.1} parent=11 // pred_fallthru
          _
        // Predicated region
        $region93: #{share_forward.1} parent=11 // pred_check
          %p856 = pneg %p592
        $region94: #{share_forward.1} parent=11 // pred_check_branch
          %858 = sbr.rel (%p856) target = $region96
        $region95: #{share_forward.1} parent=11 // pred_region
          _
        $region96: #{share_forward.1} parent=11 // pred_fallthru
          _
        // Predicated region
        $region97: #{share_forward.1} parent=11 // pred_check
          %p859 = pneg %p613
        $region98: #{share_forward.1} parent=11 // pred_check_branch
          %861 = sbr.rel (%p859) target = $region100
        $region99: #{share_forward.1} parent=11 // pred_region
          _
        $region100: #{share_forward.1} parent=11 // pred_fallthru
          _
        // Predicated region
        $region101: #{share_forward.1} parent=11 // pred_check
          %p862 = pneg %p634
        $region102: #{share_forward.1} parent=11 // pred_check_branch
          %864 = sbr.rel (%p862) target = $region104
        $region103: #{share_forward.1} parent=11 // pred_region
          _
        $region104: #{share_forward.1} parent=11 // pred_fallthru
          _
        // Predicated region
        $region105: #{share_forward.1} parent=11 // pred_check
          %p865 = pneg %p655
        $region106: #{share_forward.1} parent=11 // pred_check_branch
          %867 = sbr.rel (%p865) target = $region108
        $region107: #{share_forward.1} parent=11 // pred_region
          _
        $region108: #{share_forward.1} parent=11 // pred_fallthru
          _
        // Predicated region
        $region109: #{share_forward.1} parent=11 // pred_check
          %p868 = pneg %p676
        $region110: #{share_forward.1} parent=11 // pred_check_branch
          %870 = sbr.rel (%p868) target = $region112
        $region111: #{share_forward.1} parent=11 // pred_region
          _
        $region112: #{share_forward.1} parent=11 // pred_fallthru
          _
        // Predicated region
        $region113: #{share_forward.1} parent=11 // pred_check
          %p871 = pneg %p697
        $region114: #{share_forward.1} parent=11 // pred_check_branch
          %873 = sbr.rel (%p871) target = $region116
        $region115: #{share_forward.1} parent=11 // pred_region
          _
        $region116: #{share_forward.1} parent=11 // pred_fallthru
          _
        // Predicated region
        $region117: #{share_forward.1} parent=11 // pred_check
          %p874 = pneg %p718
        $region118: #{share_forward.1} parent=11 // pred_check_branch
          %876 = sbr.rel (%p874) target = $region120
        $region119: #{share_forward.1} parent=11 // pred_region
          _
        $region120: #{share_forward.1} parent=11 // pred_fallthru
          _
        // Predicated region
        $region121: #{share_forward.1} parent=11 // pred_check
          %p877 = pneg %p739
        $region122: #{share_forward.1} parent=11 // pred_check_branch
          %879 = sbr.rel (%p877) target = $region124
        $region123: #{share_forward.1} parent=11 // pred_region
          _
        $region124: #{share_forward.1} parent=11 // pred_fallthru
          _
      $region12: #{share_forward.1} parent=5 // pred_fallthru
        _
      %p880 = scmp.lt.s32.totalorder %s73, 4
      // Predicated region
      $region125: #{share_forward.1} parent=5 // pred_check
        %p881 = pneg %p880
      $region126: #{share_forward.1} parent=5 // pred_check_branch
        %883 = sbr.rel (%p881) target = $region128
      $region127: #{share_forward.1} parent=5 // pred_region
        // Predicated region
        $region129: #{share_forward.1} parent=127 // pred_check
          %p884 = pneg %p93
        $region130: #{share_forward.1} parent=127 // pred_check_branch
          %886 = sbr.rel (%p884) target = $region132
        $region131: #{share_forward.1} parent=127 // pred_region
          %p887 = scmp.lt.s32.totalorder %s73, 3
          %s888 = scalar_select %p887, %s73, 3
          %s889 = smul.addr %s888, 2
          %s890 = smul.addr %s889, 8
          %s891 = scalar_lea.vmem %s1, %s890
        $region132: #{share_forward.1} parent=127 // pred_fallthru
          _
        // Predicated region
        $region133: #{share_forward.1} parent=127 // pred_check
          %p892 = pneg %p119
        $region134: #{share_forward.1} parent=127 // pred_check_branch
          %894 = sbr.rel (%p892) target = $region136
        $region135: #{share_forward.1} parent=127 // pred_region
          %p895 = scmp.lt.s32.totalorder %s73, 3
          %s896 = scalar_select %p895, %s73, 3
          %s897 = smul.addr %s896, 2
          %s898 = smul.addr %s897, 8
          %s899 = scalar_lea.vmem %s3, %s898
        $region136: #{share_forward.1} parent=127 // pred_fallthru
          _
        // Predicated region
        $region137: #{share_forward.1} parent=127 // pred_check
          %p900 = pneg %p145
        $region138: #{share_forward.1} parent=127 // pred_check_branch
          %902 = sbr.rel (%p900) target = $region140
        $region139: #{share_forward.1} parent=127 // pred_region
          %p903 = scmp.lt.s32.totalorder %s73, 3
          %s904 = scalar_select %p903, %s73, 3
          %s905 = smul.addr %s904, 2
          %s906 = smul.addr %s905, 8
          %s907 = scalar_lea.vmem %s5, %s906
        $region140: #{share_forward.1} parent=127 // pred_fallthru
          _
      $region128: #{share_forward.1} parent=5 // pred_fallthru
        _
      %p908 = scmp.le.s32.totalorder 1, %s73
      %p909 = scmp.lt.s32.totalorder %s73, 5
      %p910 = pnand %p908, %p909
      %p911 = pneg %p910
      // Predicated region
      $region141: #{share_forward.1} parent=5 // pred_check
        _
      $region142: #{share_forward.1} parent=5 // pred_check_branch
        %913 = sbr.rel (%p910) target = $region144
      $region143: #{share_forward.1} parent=5 // pred_region
        %s914 = ssub.s32 %s73, 1
        %p915 = scmp.lt.s32.totalorder %s78, 3
        %s916 = scalar_select %p915, %s78, 3
        %s917 = smul.addr %s916, 2
        %s918 = smul.addr %s917, 8
        %s919 = scalar_lea.vmem %s1, %s918
        %p920 = pneg %p99
        %p921 = pneg %p96
        %p922 = scmp.lt.s32.totalorder %s78, 3
        %s923 = scalar_select %p922, %s78, 3
        %s924 = smul.addr %s923, 2
        %s925 = smul.addr %s924, 8
        %s926 = scalar_lea.vmem %s3, %s925
        %p927 = pneg %p125
        %p928 = pneg %p122
        %p929 = scmp.lt.s32.totalorder %s78, 3
        %s930 = scalar_select %p929, %s78, 3
        %s931 = smul.addr %s930, 2
        %s932 = smul.addr %s931, 8
        %s933 = scalar_lea.vmem %s5, %s932
        %p934 = pneg %p151
        %p935 = pneg %p148
        %p936 = pneg %p172
        %p937 = pneg %p169
        %p938 = pneg %p193
        %p939 = pneg %p190
        %p940 = pneg %p214
        %p941 = pneg %p211
        %p942 = pneg %p235
        %p943 = pneg %p232
        %p944 = pneg %p256
        %p945 = pneg %p253
        %p946 = pneg %p277
        %p947 = pneg %p274
        %p948 = pneg %p298
        %p949 = pneg %p295
        %p950 = pneg %p319
        %p951 = pneg %p316
        %p952 = pneg %p340
        %p953 = pneg %p337
        %p954 = pneg %p361
        %p955 = pneg %p358
        %p956 = pneg %p382
        %p957 = pneg %p379
        %p958 = pneg %p403
        %p959 = pneg %p400
        %p960 = pneg %p424
        %p961 = pneg %p421
        %p962 = pneg %p445
        %p963 = pneg %p442
        %p964 = pneg %p466
        %p965 = pneg %p463
        %p966 = pneg %p487
        %p967 = pneg %p484
        %p968 = pneg %p508
        %p969 = pneg %p505
        %p970 = pneg %p529
        %p971 = pneg %p526
        %p972 = pneg %p550
        %p973 = pneg %p547
        %p974 = pneg %p571
        %p975 = pneg %p568
        %p976 = pneg %p592
        %p977 = pneg %p589
        %p978 = pneg %p613
        %p979 = pneg %p610
        %p980 = pneg %p634
        %p981 = pneg %p631
        %p982 = pneg %p655
        %p983 = pneg %p652
        %p984 = pneg %p676
        %p985 = pneg %p673
        %p986 = pneg %p697
        %p987 = pneg %p694
        %p988 = pneg %p718
        %p989 = pneg %p715
        %p990 = pneg %p739
        %p991 = pneg %p736
        %p992 = pneg %p760
        %p993 = pneg %p757
        %p994 = pneg %p781
        %p995 = pneg %p778
        %p996 = scmp.lt.s32.totalorder %s78, 3
        %s997 = scalar_select %p996, %s78, 3
        %s998 = smul.addr %s997, 2
        %s999 = smul.addr %s998, 8
        %s1000 = scalar_lea.vmem %s1, %s999
        %p1001 = scmp.lt.s32.totalorder %s78, 3
        %s1002 = scalar_select %p1001, %s78, 3
        %s1003 = smul.addr %s1002, 2
        %s1004 = smul.addr %s1003, 8
        %s1005 = scalar_lea.vmem %s3, %s1004
        %p1006 = scmp.lt.s32.totalorder %s78, 3
        %s1007 = scalar_select %p1006, %s78, 3
        %s1008 = smul.addr %s1007, 2
        %s1009 = smul.addr %s1008, 8
        %s1010 = scalar_lea.vmem %s5, %s1009
        %p1011 = scmp.eq.s32.totalorder %s78, 3
        %p1012 = scmp.eq.s32.totalorder %s78, 0
        // Predicated region
        $region145: #{share_forward.1} parent=143 // pred_check
          %p1013 = pneg %p1012
        $region146: #{share_forward.1} parent=143 // pred_check_branch
          %1015 = sbr.rel (%p1013) target = $region148
        $region147: #{share_forward.1} parent=143 // pred_region
          %v1016 = vld [vmem:[%s7] sm:$0xff]
          %v1017 = vld [vmem:[%s7 + $0x8] sm:$0xff]
          %vm1018 = vcmask 523264
          %1019 = vst.msk [vmem:[#allocation2] sm:$0xff] %vm1018, %v1016
          %1020 = vst.msk [vmem:[#allocation2 + $0x8] sm:$0xff] %vm1018, %v1017
        $region148: #{share_forward.1} parent=143 // pred_fallthru
          _
        %v1021 = vld [vmem:[#allocation2] sm:$0xff]
        %v1022 = vld [vmem:[#allocation2 + $0x8] sm:$0xff]
        %v1023 = vld [vmem:[%s1000] sm:$0xff]
        %v1024 = vld [vmem:[%s1000 + $0x8] sm:$0xff]
        %v1025 = vld [vmem:[%s1005] sm:$0xff]
        %v1026 = vld [vmem:[%s1005 + $0x8] sm:$0xff]
        %v1027 = vld [vmem:[%s1010] sm:$0xff]
        %v1028 = vld [vmem:[%s1010 + $0x8] sm:$0xff]
        %v1029 = vld [vmem:[%s9] sm:$0xff]
        %v1030 = vld [vmem:[%s9 + $0x8] sm:$0xff]
        %vm1031 = vcmp.gt.f32.partialorder %v1029, 0.0
        %vm1032 = vcmp.gt.f32.partialorder %v1030, 0.0
        %v1033 = vld [vmem:[%s17] sm:$0xff]
        %v1034 = vld [vmem:[%s17 + $0x8] sm:$0xff]
        %v1035 = vld [vmem:[%s17 + $0x10] sm:$0xff]
        %v1036 = vld [vmem:[%s17 + $0x18] sm:$0xff]
        %v1037 = vld [vmem:[%s17 + $0x20] sm:$0xff]
        %v1038 = vld [vmem:[%s17 + $0x28] sm:$0xff]
        %v1039 = vld [vmem:[%s17 + $0x30] sm:$0xff]
        %v1040 = vld [vmem:[%s17 + $0x38] sm:$0xff]
        %v1041 = vld [vmem:[%s19] sm:$0x1]
        %v1043 = vperm.slane %v1041, 0
        %vm1045 = vcmask 523264
        %v1047 = vsel %vm1045, %v1021, 0
        %v1050 = vsel %vm1045, %v1022, 0
        %1052 = vmatpush.msra.mxu0 0.0
        %1053 = vmatpush.msra.mxu0 0.0
        %1054 = vmatpush.msra.mxu0 0.0
        %1055 = vmatpush.msra.mxu0 0.0
        %1056 = vmatpush.msra.mxu0 0.0
        %1057 = vmatpush.msra.mxu0 0.0
        %1058 = vmatpush.msra.mxu0 0.0
        %1059 = vmatpush.msra.mxu0 0.0
        %1060 = vmatpush.msra.mxu0 %v1040
        %1061 = vmatpush.msra.mxu0 %v1039
        %1062 = vmatpush.msra.mxu0 %v1038
        %1063 = vmatpush.msra.mxu0 %v1037
        %1064 = vmatpush.msra.mxu0 %v1036
        %1065 = vmatpush.msra.mxu0 %v1035
        %1066 = vmatpush.msra.mxu0 %v1034
        %1067 = vmatpush.msra.mxu0 %v1033
        %1068 = vmatmul.f32.gmra.mxu0 %v1047
        %v1069 = vpop.f32.mrf.mxu0
        %v1070 = vadd.f32 %v1043, %v1069
        %1071 = vmatmul.f32.gmra.mxu0 %v1050
        %v1072 = vpop.f32.mrf.mxu0
        %v1073 = vadd.f32 %v1043, %v1072
        %1074 = vdwg.mxu0
        %vm1075 = vcmask 408576
        %v1076 = vsel %vm1075, %v1070, -inf
        %1077 = vmax.xlane.f32.xlu0 %v1076
        %v1078 = vpop.xlane.xlu0 %1077
        %v1079 = vsel %vm1075, %v1073, -inf
        %1080 = vmax.xlane.f32.xlu0 %v1079
        %v1081 = vpop.xlane.xlu0 %1080
        %v1082 = vsub.f32 %v1070, %v1078
        %v1083 = vsub.f32 %v1073, %v1081
        %v1084 = vmul.f32 %v1082, 1.442695
        %v1085 = vpow.pop %v1084
        %v1086 = vmul.f32 %v1083, 1.442695
        %v1087 = vpow.pop %v1086
        %v1088 = vsel %vm1075, %v1085, 0.0
        %1089 = vadd.xlane.f32.xlu0 %v1088
        %v1090 = vpop.xlane.xlu0 %1089
        %v1091 = vsel %vm1075, %v1087, 0.0
        %1092 = vadd.xlane.f32.xlu0 %v1091
        %v1093 = vpop.xlane.xlu0 %1092
        %v1094 = vrcp.pop %v1090
        %v1095 = vmul.f32 %v1090, %v1094
        %v1096 = vsub.f32 1.0, %v1095
        %v1097 = vmul.f32 %v1094, %v1096
        %v1098 = vadd.f32 %v1094, %v1097
        %vm1099 = vweird.f32 %v1090
        %vm1100 = vweird.f32 %v1094
        %vm1101 = vmor %vm1099, %vm1100
        %v1102 = vsel %vm1101, %v1094, %v1098
        %v1103 = vand.u32 2147483647, %v1090
        %vm1104 = vcmp.eq.f32.partialorder %v1103, 8.507059e+37
        %v1105 = vand.u32 %v1090, 2147483648
        %v1106 = vor.u32 1.1754944e-38, %v1105
        %v1107 = vsel %vm1104, %v1106, %v1102
        %v1108 = vmul.f32 %v1085, %v1107
        %v1109 = vrcp.pop %v1093
        %v1110 = vmul.f32 %v1093, %v1109
        %v1111 = vsub.f32 1.0, %v1110
        %v1112 = vmul.f32 %v1109, %v1111
        %v1113 = vadd.f32 %v1109, %v1112
        %vm1114 = vweird.f32 %v1093
        %vm1115 = vweird.f32 %v1109
        %vm1116 = vmor %vm1114, %vm1115
        %v1117 = vsel %vm1116, %v1109, %v1113
        %v1118 = vand.u32 2147483647, %v1093
        %vm1119 = vcmp.eq.f32.partialorder %v1118, 8.507059e+37
        %v1120 = vand.u32 %v1093, 2147483648
        %v1121 = vor.u32 1.1754944e-38, %v1120
        %v1122 = vsel %vm1119, %v1121, %v1117
        %v1123 = vmul.f32 %v1087, %v1122
        %v1124 = vld [vmem:[%s21] sm:$0x3]
        %v1125 = vld [vmem:[%s23] sm:$0xff]
        %v1126 = vld [vmem:[%s23 + $0x8] sm:$0xff]
        %v1127 = vld [vmem:[%s23 + $0x10] sm:$0xff]
        %v1128 = vld [vmem:[%s23 + $0x18] sm:$0xff]
        %v1129 = vld [vmem:[%s25] sm:$0x1]
        %v1130 = vld [vmem:[%s13] sm:$0xff]
        %v1131 = vld [vmem:[%s13 + $0x8] sm:$0xff]
        %vm1132 = vcmask 15360
        %v1134 = vsel %vm1132, %v1023, 0
        %v1137 = vsel %vm1132, %v1024, 0
        %vm1139 = vcmask 1041408
        %v1141 = vsel %vm1139, %v1124, 0
        %1143 = vmatpush.msra.mxu0 0.0
        %1144 = vmatpush.msra.mxu0 0.0
        %1145 = vmatpush.msra.mxu0 0.0
        %1146 = vmatpush.msra.mxu0 0.0
        %1147 = vmatpush.msra.mxu0 0.0
        %1148 = vmatpush.msra.mxu0 0.0
        %1149 = vmatpush.msra.mxu0 0.0
        %1150 = vmatpush.msra.mxu0 0.0
        %1151 = vmatpush.msra.mxu0 0.0
        %1152 = vmatpush.msra.mxu0 0.0
        %1153 = vmatpush.msra.mxu0 0.0
        %1154 = vmatpush.msra.mxu0 0.0
        %1155 = vmatpush.msra.mxu0 0.0
        %1156 = vmatpush.msra.mxu0 0.0
        %1157 = vmatpush.msra.mxu0 0.0
        %1158 = vmatpush.msra.mxu0 %v1141
        %1159 = vmatmul.f32.gmra.mxu0 %v1134
        %v1160 = vpop.f32.mrf.mxu0
        %v1161 = vadd.f32 0.0, %v1160
        %1162 = vmatmul.f32.gmra.mxu0 %v1137
        %v1163 = vpop.f32.mrf.mxu0
        %v1164 = vadd.f32 0.0, %v1163
        %1165 = vdwg.mxu0
        %vm1166 = vcmask 261120
        %v1168 = vsel %vm1166, %v1161, 0
        %v1171 = vsel %vm1166, %v1164, 0
        %1173 = vmatpush.msra.mxu0 0.0
        %1174 = vmatpush.msra.mxu0 0.0
        %1175 = vmatpush.msra.mxu0 0.0
        %1176 = vmatpush.msra.mxu0 0.0
        %1177 = vmatpush.msra.mxu0 0.0
        %1178 = vmatpush.msra.mxu0 0.0
        %1179 = vmatpush.msra.mxu0 0.0
        %1180 = vmatpush.msra.mxu0 0.0
        %1181 = vmatpush.msra.mxu0 0.0
        %1182 = vmatpush.msra.mxu0 0.0
        %1183 = vmatpush.msra.mxu0 0.0
        %1184 = vmatpush.msra.mxu0 0.0
        %1185 = vmatpush.msra.mxu0 %v1128
        %1186 = vmatpush.msra.mxu0 %v1127
        %1187 = vmatpush.msra.mxu0 %v1126
        %1188 = vmatpush.msra.mxu0 %v1125
        %1189 = vmatmul.f32.gmra.mxu0 %v1168
        %v1190 = vpop.f32.mrf.mxu0
        %v1191 = vadd.f32 0.0, %v1190
        %1192 = vmatmul.f32.gmra.mxu0 %v1171
        %v1193 = vpop.f32.mrf.mxu0
        %v1194 = vadd.f32 0.0, %v1193
        %1195 = vdwg.mxu0
        %v1197 = vsel %vm1166, %v1129, 0
        %1199 = vmatpush.xpose.msra.mxu0 0.0
        %1200 = vmatpush.xpose.msra.mxu0 0.0
        %1201 = vmatpush.xpose.msra.mxu0 0.0
        %1202 = vmatpush.xpose.msra.mxu0 0.0
        %1203 = vmatpush.xpose.msra.mxu0 0.0
        %1204 = vmatpush.xpose.msra.mxu0 0.0
        %1205 = vmatpush.xpose.msra.mxu0 0.0
        %1206 = vmatpush.xpose.msra.mxu0 0.0
        %1207 = vmatpush.xpose.msra.mxu0 0.0
        %1208 = vmatpush.xpose.msra.mxu0 0.0
        %1209 = vmatpush.xpose.msra.mxu0 0.0
        %1210 = vmatpush.xpose.msra.mxu0 0.0
        %1211 = vmatpush.xpose.msra.mxu0 0.0
        %1212 = vmatpush.xpose.msra.mxu0 0.0
        %1213 = vmatpush.xpose.msra.mxu0 %v1171
        %1214 = vmatpush.xpose.msra.mxu0 %v1168
        %1215 = vmatmul.f32.gmra.mxu0 %v1197
        %v1216 = vpop.f32.mrf.mxu0
        %v1217 = vadd.f32 0.0, %v1216
        %1218 = vdwg.mxu0
        %1220 = vset.pattern.permute.xlu0 0
        %1221 = vperm.xlu0 %1220, %v1191
        %v1222 = vpop.permute.xlu0 %1221
        %1225 = vset.pattern.permute.xlu0 0
        %1226 = vperm.xlu0 %1225, %v1194
        %v1227 = vpop.permute.xlu0 %1226
        %v1229 = vperm.slane %v1217, 0
        %v1230 = vadd.f32 %v1222, %v1229
        %v1231 = vadd.f32 %v1227, %v1229
        %vm1232 = vcmp.gt.f32.partialorder %v1230, 0.0
        %vm1233 = vcmp.gt.f32.partialorder %v1231, 0.0
        %v1234 = vmul.f32 %v1230, 0.2
        %v1235 = vmul.f32 %v1231, 0.2
        %v1236 = vsel %vm1232, %v1230, %v1234
        %v1237 = vsel %vm1233, %v1231, %v1235
        %vm1238 = vcmp.gt.f32.partialorder %v1130, 0.0
        %vm1239 = vcmp.gt.f32.partialorder %v1131, 0.0
        %v1240 = vsel %vm1238, %v1236, -1e+30
        %v1241 = vsel %vm1239, %v1237, -1e+30
        %vm1242 = vcmask 130048
        %v1243 = vsel %vm1242, %v1240, -inf
        %1244 = vmax.xlane.f32.xlu0 %v1243
        %v1245 = vpop.xlane.xlu0 %1244
        %v1246 = vsel %vm1242, %v1241, -inf
        %1247 = vmax.xlane.f32.xlu0 %v1246
        %v1248 = vpop.xlane.xlu0 %1247
        %v1249 = vsub.f32 %v1240, %v1245
        %v1250 = vsub.f32 %v1241, %v1248
        %v1251 = vmul.f32 %v1249, 1.442695
        %v1252 = vpow.pop %v1251
        %v1253 = vmul.f32 %v1250, 1.442695
        %v1254 = vpow.pop %v1253
        %v1255 = vsel %vm1238, 1, 0
        %v1256 = vsel %vm1239, 1, 0
        %v1257 = vcvt.s32.f32 %v1255
        %v1258 = vcvt.s32.f32 %v1256
        %v1259 = vmul.f32 %v1252, %v1257
        %v1260 = vmul.f32 %v1254, %v1258
        %v1261 = vsel %vm1242, %v1259, 0.0
        %1262 = vadd.xlane.f32.xlu0 %v1261
        %v1263 = vpop.xlane.xlu0 %1262
        %v1264 = vsel %vm1242, %v1260, 0.0
        %1265 = vadd.xlane.f32.xlu0 %v1264
        %v1266 = vpop.xlane.xlu0 %1265
        %v1267 = vmax.f32 %v1263, 1e-12
        %v1268 = vmax.f32 %v1266, 1e-12
        %v1269 = vrcp.pop %v1267
        %v1270 = vrcp.pop %v1268
        %v1271 = vmul.f32 %v1259, %v1269
        %v1272 = vmul.f32 %v1260, %v1270
        %v1274 = vsel %vm1242, %v1271, 0
        %v1277 = vsel %vm1242, %v1272, 0
        %1279 = vmatpush.msra.mxu0 0.0
        %1280 = vmatpush.msra.mxu0 0.0
        %1281 = vmatpush.msra.mxu0 0.0
        %1282 = vmatpush.msra.mxu0 0.0
        %1283 = vmatpush.msra.mxu0 0.0
        %1284 = vmatpush.msra.mxu0 0.0
        %1285 = vmatpush.msra.mxu0 0.0
        %1286 = vmatpush.msra.mxu0 0.0
        %1287 = vmatpush.msra.mxu0 0.0
        %1288 = vmatpush.msra.mxu0 0.0
        %1289 = vmatpush.msra.mxu0 0.0
        %1290 = vmatpush.msra.mxu0 0.0
        %1291 = vmatpush.msra.mxu0 0.0
        %1292 = vmatpush.msra.mxu0 0.0
        %1293 = vmatpush.msra.mxu0 %v1026
        %1294 = vmatpush.msra.mxu0 %v1025
        %1295 = vmatmul.f32.gmra.mxu0 %v1274
        %v1296 = vpop.f32.mrf.mxu0
        %v1297 = vadd.f32 0.0, %v1296
        %1298 = vmatmul.f32.gmra.mxu0 %v1277
        %v1299 = vpop.f32.mrf.mxu0
        %v1300 = vadd.f32 0.0, %v1299
        %1301 = vdwg.mxu0
        %vm1302 = vcmp.lt.f32.partialorder %v1297, 1.0
        %vm1303 = vcmp.lt.f32.partialorder %v1300, 1.0
        %v1304 = vsel %vm1302, %v1297, 1.0
        %v1305 = vsel %vm1303, %v1300, 1.0
        %s1306 = scalar_select %p1011, 1, 0
        %v1307 = vstv %s1306
        %vm1308 = vcmp.eq.s32.totalorder %v1307, 1
        %vm1309 = vmand %vm1308, %vm1031
        %vm1310 = vmand %vm1308, %vm1032
        %v1311 = vsel %vm1309, 1, 0
        %v1312 = vsel %vm1310, 1, 0
        %1313 = vset.pattern.permute.xlu0 0
        %1314 = vperm.xlu0 %1313, %v1311
        %v1315 = vpop.permute.xlu0 %1314
        %1316 = vset.pattern.permute.xlu0 0
        %1317 = vperm.xlu0 %1316, %v1312
        %v1318 = vpop.permute.xlu0 %1317
        %vm1319 = vcmp.eq.s32.totalorder %v1315, 1
        %vm1320 = vcmp.eq.s32.totalorder %v1318, 1
        %v1321 = vsel %vm1319, %v1304, %v1297
        %v1322 = vsel %vm1320, %v1305, %v1300
        %vm1323 = vcmp.gt.f32.partialorder %v1108, 1e-08
        %vm1324 = vcmp.gt.f32.partialorder %v1123, 1e-08
        %v1325 = vsel %vm1323, %v1108, 1e-08
        %v1326 = vsel %vm1324, %v1123, 1e-08
        %v1327 = vlog2.pop %v1325
        %v1328 = vmul.f32 %v1327, 0.6931472
        %v1329 = vlog2.pop %v1326
        %v1330 = vmul.f32 %v1329, 0.6931472
        %v1331 = vmul.f32 %v1108, %v1328
        %v1332 = vmul.f32 %v1123, %v1330
        %v1333 = vsel %vm1075, %v1331, 0.0
        %1334 = vadd.xlane.f32.xlu0 %v1333
        %v1335 = vpop.xlane.xlu0 %1334
        %v1336 = vsel %vm1075, %v1332, 0.0
        %1337 = vadd.xlane.f32.xlu0 %v1336
        %v1338 = vpop.xlane.xlu0 %1337
        %v1339 = vmul.f32 %v1335, 1.442695
        %v1340 = vpow.pop %v1339
        %v1341 = vmul.f32 %v1338, 1.442695
        %v1342 = vpow.pop %v1341
        %vm1343 = vcmp.gt.f32.partialorder %v1321, 1e-08
        %vm1344 = vcmp.gt.f32.partialorder %v1322, 1e-08
        %v1345 = vsel %vm1343, %v1321, 1e-08
        %v1346 = vsel %vm1344, %v1322, 1e-08
        %v1347 = vlog2.pop %v1345
        %v1348 = vmul.f32 %v1347, 0.6931472
        %v1349 = vlog2.pop %v1346
        %v1350 = vmul.f32 %v1349, 0.6931472
        %v1351 = vmul.f32 %v1321, %v1348
        %v1352 = vmul.f32 %v1322, %v1350
        %v1353 = vsel %vm1075, %v1351, 0.0
        %1354 = vadd.xlane.f32.xlu0 %v1353
        %v1355 = vpop.xlane.xlu0 %1354
        %v1356 = vsel %vm1075, %v1352, 0.0
        %1357 = vadd.xlane.f32.xlu0 %v1356
        %v1358 = vpop.xlane.xlu0 %1357
        %v1359 = vmul.f32 %v1355, 1.442695
        %v1360 = vpow.pop %v1359
        %v1361 = vmul.f32 %v1358, 1.442695
        %v1362 = vpow.pop %v1361
        %v1363 = vsel %vm1075, %v1321, 0.0
        %1364 = vadd.xlane.f32.xlu0 %v1363
        %v1365 = vpop.xlane.xlu0 %1364
        %v1366 = vsel %vm1075, %v1322, 0.0
        %1367 = vadd.xlane.f32.xlu0 %v1366
        %v1368 = vpop.xlane.xlu0 %1367
        %vm1369 = vcmp.gt.f32.partialorder %v1365, 1e-08
        %vm1370 = vcmp.gt.f32.partialorder %v1368, 1e-08
        %v1371 = vsel %vm1369, %v1360, 0.0
        %v1372 = vsel %vm1370, %v1362, 0.0
        %v1373 = vmul.f32 %v1340, %v1108
        %v1374 = vmul.f32 %v1342, %v1123
        %v1375 = vmul.f32 %v1371, %v1321
        %v1376 = vmul.f32 %v1372, %v1322
        %v1377 = vadd.f32 %v1373, %v1375
        %v1378 = vadd.f32 %v1374, %v1376
        %v1379 = vadd.f32 %v1340, %v1371
        %v1380 = vadd.f32 %v1342, %v1372
        %v1381 = vrcp.pop %v1379
        %v1382 = vrcp.pop %v1380
        %v1383 = vmul.f32 %v1377, %v1381
        %v1384 = vmul.f32 %v1378, %v1382
        %v1385 = vsel %vm1031, 1, 0
        %v1386 = vsel %vm1032, 1, 0
        %1387 = vset.pattern.permute.xlu0 0
        %1388 = vperm.xlu0 %1387, %v1385
        %v1389 = vpop.permute.xlu0 %1388
        %1390 = vset.pattern.permute.xlu0 0
        %1391 = vperm.xlu0 %1390, %v1386
        %v1392 = vpop.permute.xlu0 %1391
        %vm1393 = vcmp.eq.s32.totalorder %v1389, 1
        %vm1394 = vcmp.eq.s32.totalorder %v1392, 1
        %v1395 = vsel %vm1393, %v1025, %v1383
        %v1396 = vsel %vm1394, %v1026, %v1384
        %v1397 = vld [vmem:[%s27] sm:$0x3]
        %v1398 = vld [vmem:[%s29] sm:$0xff]
        %v1399 = vld [vmem:[%s29 + $0x8] sm:$0xff]
        %v1400 = vld [vmem:[%s29 + $0x10] sm:$0xff]
        %v1401 = vld [vmem:[%s29 + $0x18] sm:$0xff]
        %v1402 = vld [vmem:[%s31] sm:$0x1]
        %v1403 = vld [vmem:[%s11] sm:$0xff]
        %v1404 = vld [vmem:[%s11 + $0x8] sm:$0xff]
        %v1406 = vsel %vm1139, %v1397, 0
        %1408 = vmatpush.msra.mxu0 0.0
        %1409 = vmatpush.msra.mxu0 0.0
        %1410 = vmatpush.msra.mxu0 0.0
        %1411 = vmatpush.msra.mxu0 0.0
        %1412 = vmatpush.msra.mxu0 0.0
        %1413 = vmatpush.msra.mxu0 0.0
        %1414 = vmatpush.msra.mxu0 0.0
        %1415 = vmatpush.msra.mxu0 0.0
        %1416 = vmatpush.msra.mxu0 0.0
        %1417 = vmatpush.msra.mxu0 0.0
        %1418 = vmatpush.msra.mxu0 0.0
        %1419 = vmatpush.msra.mxu0 0.0
        %1420 = vmatpush.msra.mxu0 0.0
        %1421 = vmatpush.msra.mxu0 0.0
        %1422 = vmatpush.msra.mxu0 0.0
        %1423 = vmatpush.msra.mxu0 %v1406
        %1424 = vmatmul.f32.gmra.mxu0 %v1134
        %v1425 = vpop.f32.mrf.mxu0
        %v1426 = vadd.f32 0.0, %v1425
        %1427 = vmatmul.f32.gmra.mxu0 %v1137
        %v1428 = vpop.f32.mrf.mxu0
        %v1429 = vadd.f32 0.0, %v1428
        %1430 = vdwg.mxu0
        %v1432 = vsel %vm1166, %v1426, 0
        %v1435 = vsel %vm1166, %v1429, 0
        %1437 = vmatpush.msra.mxu0 0.0
        %1438 = vmatpush.msra.mxu0 0.0
        %1439 = vmatpush.msra.mxu0 0.0
        %1440 = vmatpush.msra.mxu0 0.0
        %1441 = vmatpush.msra.mxu0 0.0
        %1442 = vmatpush.msra.mxu0 0.0
        %1443 = vmatpush.msra.mxu0 0.0
        %1444 = vmatpush.msra.mxu0 0.0
        %1445 = vmatpush.msra.mxu0 0.0
        %1446 = vmatpush.msra.mxu0 0.0
        %1447 = vmatpush.msra.mxu0 0.0
        %1448 = vmatpush.msra.mxu0 0.0
        %1449 = vmatpush.msra.mxu0 %v1401
        %1450 = vmatpush.msra.mxu0 %v1400
        %1451 = vmatpush.msra.mxu0 %v1399
        %1452 = vmatpush.msra.mxu0 %v1398
        %1453 = vmatmul.f32.gmra.mxu0 %v1432
        %v1454 = vpop.f32.mrf.mxu0
        %v1455 = vadd.f32 0.0, %v1454
        %1456 = vmatmul.f32.gmra.mxu0 %v1435
        %v1457 = vpop.f32.mrf.mxu0
        %v1458 = vadd.f32 0.0, %v1457
        %1459 = vdwg.mxu0
        %v1461 = vsel %vm1166, %v1402, 0
        %1463 = vmatpush.xpose.msra.mxu0 0.0
        %1464 = vmatpush.xpose.msra.mxu0 0.0
        %1465 = vmatpush.xpose.msra.mxu0 0.0
        %1466 = vmatpush.xpose.msra.mxu0 0.0
        %1467 = vmatpush.xpose.msra.mxu0 0.0
        %1468 = vmatpush.xpose.msra.mxu0 0.0
        %1469 = vmatpush.xpose.msra.mxu0 0.0
        %1470 = vmatpush.xpose.msra.mxu0 0.0
        %1471 = vmatpush.xpose.msra.mxu0 0.0
        %1472 = vmatpush.xpose.msra.mxu0 0.0
        %1473 = vmatpush.xpose.msra.mxu0 0.0
        %1474 = vmatpush.xpose.msra.mxu0 0.0
        %1475 = vmatpush.xpose.msra.mxu0 0.0
        %1476 = vmatpush.xpose.msra.mxu0 0.0
        %1477 = vmatpush.xpose.msra.mxu0 %v1435
        %1478 = vmatpush.xpose.msra.mxu0 %v1432
        %1479 = vmatmul.f32.gmra.mxu0 %v1461
        %v1480 = vpop.f32.mrf.mxu0
        %v1481 = vadd.f32 0.0, %v1480
        %1482 = vdwg.mxu0
        %1484 = vset.pattern.permute.xlu0 0
        %1485 = vperm.xlu0 %1484, %v1455
        %v1486 = vpop.permute.xlu0 %1485
        %1489 = vset.pattern.permute.xlu0 0
        %1490 = vperm.xlu0 %1489, %v1458
        %v1491 = vpop.permute.xlu0 %1490
        %v1493 = vperm.slane %v1481, 0
        %v1494 = vadd.f32 %v1486, %v1493
        %v1495 = vadd.f32 %v1491, %v1493
        %vm1496 = vcmp.gt.f32.partialorder %v1494, 0.0
        %vm1497 = vcmp.gt.f32.partialorder %v1495, 0.0
        %v1498 = vmul.f32 %v1494, 0.2
        %v1499 = vmul.f32 %v1495, 0.2
        %v1500 = vsel %vm1496, %v1494, %v1498
        %v1501 = vsel %vm1497, %v1495, %v1499
        %vm1502 = vcmp.gt.f32.partialorder %v1403, 0.0
        %vm1503 = vcmp.gt.f32.partialorder %v1404, 0.0
        %v1504 = vsel %vm1502, %v1500, -1e+30
        %v1505 = vsel %vm1503, %v1501, -1e+30
        %v1506 = vsel %vm1242, %v1504, -inf
        %1507 = vmax.xlane.f32.xlu0 %v1506
        %v1508 = vpop.xlane.xlu0 %1507
        %v1509 = vsel %vm1242, %v1505, -inf
        %1510 = vmax.xlane.f32.xlu0 %v1509
        %v1511 = vpop.xlane.xlu0 %1510
        %v1512 = vsub.f32 %v1504, %v1508
        %v1513 = vsub.f32 %v1505, %v1511
        %v1514 = vmul.f32 %v1512, 1.442695
        %v1515 = vpow.pop %v1514
        %v1516 = vmul.f32 %v1513, 1.442695
        %v1517 = vpow.pop %v1516
        %v1518 = vsel %vm1502, 1, 0
        %v1519 = vsel %vm1503, 1, 0
        %v1520 = vcvt.s32.f32 %v1518
        %v1521 = vcvt.s32.f32 %v1519
        %v1522 = vmul.f32 %v1515, %v1520
        %v1523 = vmul.f32 %v1517, %v1521
        %v1524 = vsel %vm1242, %v1522, 0.0
        %1525 = vadd.xlane.f32.xlu0 %v1524
        %v1526 = vpop.xlane.xlu0 %1525
        %v1527 = vsel %vm1242, %v1523, 0.0
        %1528 = vadd.xlane.f32.xlu0 %v1527
        %v1529 = vpop.xlane.xlu0 %1528
        %v1530 = vmax.f32 %v1526, 1e-12
        %v1531 = vmax.f32 %v1529, 1e-12
        %v1532 = vrcp.pop %v1530
        %v1533 = vrcp.pop %v1531
        %v1534 = vmul.f32 %v1522, %v1532
        %v1535 = vmul.f32 %v1523, %v1533
        %v1537 = vsel %vm1242, %v1534, 0
        %v1540 = vsel %vm1242, %v1535, 0
        %1542 = vmatpush.msra.mxu0 0.0
        %1543 = vmatpush.msra.mxu0 0.0
        %1544 = vmatpush.msra.mxu0 0.0
        %1545 = vmatpush.msra.mxu0 0.0
        %1546 = vmatpush.msra.mxu0 0.0
        %1547 = vmatpush.msra.mxu0 0.0
        %1548 = vmatpush.msra.mxu0 0.0
        %1549 = vmatpush.msra.mxu0 0.0
        %1550 = vmatpush.msra.mxu0 0.0
        %1551 = vmatpush.msra.mxu0 0.0
        %1552 = vmatpush.msra.mxu0 0.0
        %1553 = vmatpush.msra.mxu0 0.0
        %1554 = vmatpush.msra.mxu0 0.0
        %1555 = vmatpush.msra.mxu0 0.0
        %1556 = vmatpush.msra.mxu0 %v1429
        %1557 = vmatpush.msra.mxu0 %v1426
        %1558 = vmatmul.f32.gmra.mxu0 %v1537
        %v1559 = vpop.f32.mrf.mxu0
        %v1560 = vadd.f32 0.0, %v1559
        %1561 = vmatmul.f32.gmra.mxu0 %v1540
        %v1562 = vpop.f32.mrf.mxu0
        %v1563 = vadd.f32 0.0, %v1562
        %1564 = vdwg.mxu0
        %vm1565 = vcmp.gt.f32.partialorder %v1560, 0.0
        %vm1566 = vcmp.gt.f32.partialorder %v1563, 0.0
        %v1567 = vmul.f32 %v1560, 0.2
        %v1568 = vmul.f32 %v1563, 0.2
        %v1569 = vsel %vm1565, %v1560, %v1567
        %v1570 = vsel %vm1566, %v1563, %v1568
        %v1571 = vld [vmem:[%s33] sm:$0xff]
        %v1572 = vld [vmem:[%s33 + $0x8] sm:$0xff]
        %v1573 = vld [vmem:[%s33 + $0x10] sm:$0xff]
        %v1574 = vld [vmem:[%s33 + $0x18] sm:$0xff]
        %v1575 = vld [vmem:[%s35] sm:$0xff]
        %v1576 = vld [vmem:[%s35 + $0x8] sm:$0xff]
        %v1577 = vld [vmem:[%s35 + $0x10] sm:$0xff]
        %v1578 = vld [vmem:[%s35 + $0x18] sm:$0xff]
        %v1579 = vld [vmem:[%s37] sm:$0x1]
        %v1581 = vsel %vm1166, %v1569, 0
        %v1584 = vsel %vm1166, %v1570, 0
        %1586 = vmatpush.msra.mxu0 0.0
        %1587 = vmatpush.msra.mxu0 0.0
        %1588 = vmatpush.msra.mxu0 0.0
        %1589 = vmatpush.msra.mxu0 0.0
        %1590 = vmatpush.msra.mxu0 0.0
        %1591 = vmatpush.msra.mxu0 0.0
        %1592 = vmatpush.msra.mxu0 0.0
        %1593 = vmatpush.msra.mxu0 0.0
        %1594 = vmatpush.msra.mxu0 0.0
        %1595 = vmatpush.msra.mxu0 0.0
        %1596 = vmatpush.msra.mxu0 0.0
        %1597 = vmatpush.msra.mxu0 0.0
        %1598 = vmatpush.msra.mxu0 %v1574
        %1599 = vmatpush.msra.mxu0 %v1573
        %1600 = vmatpush.msra.mxu0 %v1572
        %1601 = vmatpush.msra.mxu0 %v1571
        %1602 = vmatmul.f32.gmra.mxu0 %v1581
        %v1603 = vpop.f32.mrf.mxu0
        %v1604 = vadd.f32 0.0, %v1603
        %1605 = vmatmul.f32.gmra.mxu0 %v1584
        %v1606 = vpop.f32.mrf.mxu0
        %v1607 = vadd.f32 0.0, %v1606
        %1608 = vdwg.mxu0
        %v1610 = vsel %vm1166, %v1604, 0
        %v1613 = vsel %vm1166, %v1607, 0
        %1615 = vmatpush.msra.mxu0 0.0
        %1616 = vmatpush.msra.mxu0 0.0
        %1617 = vmatpush.msra.mxu0 0.0
        %1618 = vmatpush.msra.mxu0 0.0
        %1619 = vmatpush.msra.mxu0 0.0
        %1620 = vmatpush.msra.mxu0 0.0
        %1621 = vmatpush.msra.mxu0 0.0
        %1622 = vmatpush.msra.mxu0 0.0
        %1623 = vmatpush.msra.mxu0 0.0
        %1624 = vmatpush.msra.mxu0 0.0
        %1625 = vmatpush.msra.mxu0 0.0
        %1626 = vmatpush.msra.mxu0 0.0
        %1627 = vmatpush.msra.mxu0 %v1578
        %1628 = vmatpush.msra.mxu0 %v1577
        %1629 = vmatpush.msra.mxu0 %v1576
        %1630 = vmatpush.msra.mxu0 %v1575
        %1631 = vmatmul.f32.gmra.mxu0 %v1610
        %v1632 = vpop.f32.mrf.mxu0
        %v1633 = vadd.f32 0.0, %v1632
        %1634 = vmatmul.f32.gmra.mxu0 %v1613
        %v1635 = vpop.f32.mrf.mxu0
        %v1636 = vadd.f32 0.0, %v1635
        %1637 = vdwg.mxu0
        %v1639 = vsel %vm1166, %v1579, 0
        %1641 = vmatpush.xpose.msra.mxu0 0.0
        %1642 = vmatpush.xpose.msra.mxu0 0.0
        %1643 = vmatpush.xpose.msra.mxu0 0.0
        %1644 = vmatpush.xpose.msra.mxu0 0.0
        %1645 = vmatpush.xpose.msra.mxu0 0.0
        %1646 = vmatpush.xpose.msra.mxu0 0.0
        %1647 = vmatpush.xpose.msra.mxu0 0.0
        %1648 = vmatpush.xpose.msra.mxu0 0.0
        %1649 = vmatpush.xpose.msra.mxu0 0.0
        %1650 = vmatpush.xpose.msra.mxu0 0.0
        %1651 = vmatpush.xpose.msra.mxu0 0.0
        %1652 = vmatpush.xpose.msra.mxu0 0.0
        %1653 = vmatpush.xpose.msra.mxu0 0.0
        %1654 = vmatpush.xpose.msra.mxu0 0.0
        %1655 = vmatpush.xpose.msra.mxu0 %v1613
        %1656 = vmatpush.xpose.msra.mxu0 %v1610
        %1657 = vmatmul.f32.gmra.mxu0 %v1639
        %v1658 = vpop.f32.mrf.mxu0
        %v1659 = vadd.f32 0.0, %v1658
        %1660 = vdwg.mxu0
        %1662 = vset.pattern.permute.xlu0 0
        %1663 = vperm.xlu0 %1662, %v1633
        %v1664 = vpop.permute.xlu0 %1663
        %1667 = vset.pattern.permute.xlu0 0
        %1668 = vperm.xlu0 %1667, %v1636
        %v1669 = vpop.permute.xlu0 %1668
        %v1671 = vperm.slane %v1659, 0
        %v1672 = vadd.f32 %v1664, %v1671
        %v1673 = vadd.f32 %v1669, %v1671
        %vm1674 = vcmp.gt.f32.partialorder %v1672, 0.0
        %vm1675 = vcmp.gt.f32.partialorder %v1673, 0.0
        %v1676 = vmul.f32 %v1672, 0.2
        %v1677 = vmul.f32 %v1673, 0.2
        %v1678 = vsel %vm1674, %v1672, %v1676
        %v1679 = vsel %vm1675, %v1673, %v1677
        %v1680 = vsel %vm1502, %v1678, -1e+30
        %v1681 = vsel %vm1503, %v1679, -1e+30
        %v1682 = vsel %vm1242, %v1680, -inf
        %1683 = vmax.xlane.f32.xlu0 %v1682
        %v1684 = vpop.xlane.xlu0 %1683
        %v1685 = vsel %vm1242, %v1681, -inf
        %1686 = vmax.xlane.f32.xlu0 %v1685
        %v1687 = vpop.xlane.xlu0 %1686
        %v1688 = vsub.f32 %v1680, %v1684
        %v1689 = vsub.f32 %v1681, %v1687
        %v1690 = vmul.f32 %v1688, 1.442695
        %v1691 = vpow.pop %v1690
        %v1692 = vmul.f32 %v1689, 1.442695
        %v1693 = vpow.pop %v1692
        %v1694 = vmul.f32 %v1691, %v1520
        %v1695 = vmul.f32 %v1693, %v1521
        %v1696 = vsel %vm1242, %v1694, 0.0
        %1697 = vadd.xlane.f32.xlu0 %v1696
        %v1698 = vpop.xlane.xlu0 %1697
        %v1699 = vsel %vm1242, %v1695, 0.0
        %1700 = vadd.xlane.f32.xlu0 %v1699
        %v1701 = vpop.xlane.xlu0 %1700
        %v1702 = vmax.f32 %v1698, 1e-12
        %v1703 = vmax.f32 %v1701, 1e-12
        %v1704 = vrcp.pop %v1702
        %v1705 = vrcp.pop %v1703
        %v1706 = vmul.f32 %v1694, %v1704
        %v1707 = vmul.f32 %v1695, %v1705
        %v1709 = vsel %vm1242, %v1706, 0
        %v1712 = vsel %vm1242, %v1707, 0
        %1714 = vmatpush.msra.mxu0 0.0
        %1715 = vmatpush.msra.mxu0 0.0
        %1716 = vmatpush.msra.mxu0 0.0
        %1717 = vmatpush.msra.mxu0 0.0
        %1718 = vmatpush.msra.mxu0 0.0
        %1719 = vmatpush.msra.mxu0 0.0
        %1720 = vmatpush.msra.mxu0 0.0
        %1721 = vmatpush.msra.mxu0 0.0
        %1722 = vmatpush.msra.mxu0 0.0
        %1723 = vmatpush.msra.mxu0 0.0
        %1724 = vmatpush.msra.mxu0 0.0
        %1725 = vmatpush.msra.mxu0 0.0
        %1726 = vmatpush.msra.mxu0 0.0
        %1727 = vmatpush.msra.mxu0 0.0
        %1728 = vmatpush.msra.mxu0 %v1607
        %1729 = vmatpush.msra.mxu0 %v1604
        %1730 = vmatmul.f32.gmra.mxu0 %v1709
        %v1731 = vpop.f32.mrf.mxu0
        %v1732 = vadd.f32 0.0, %v1731
        %1733 = vmatmul.f32.gmra.mxu0 %v1712
        %v1734 = vpop.f32.mrf.mxu0
        %v1735 = vadd.f32 0.0, %v1734
        %1736 = vdwg.mxu0
        %vm1737 = vcmp.gt.f32.partialorder %v1732, 0.0
        %vm1738 = vcmp.gt.f32.partialorder %v1735, 0.0
        %v1739 = vmul.f32 %v1732, 0.2
        %v1740 = vmul.f32 %v1735, 0.2
        %v1741 = vsel %vm1737, %v1732, %v1739
        %v1742 = vsel %vm1738, %v1735, %v1740
        %v1743 = vld [vmem:[%s39] sm:$0xff]
        %v1744 = vld [vmem:[%s39 + $0x8] sm:$0xff]
        %v1745 = vld [vmem:[%s39 + $0x10] sm:$0xff]
        %v1746 = vld [vmem:[%s39 + $0x18] sm:$0xff]
        %v1747 = vld [vmem:[%s41] sm:$0xff]
        %v1748 = vld [vmem:[%s41 + $0x8] sm:$0xff]
        %v1749 = vld [vmem:[%s41 + $0x10] sm:$0xff]
        %v1750 = vld [vmem:[%s41 + $0x18] sm:$0xff]
        %v1751 = vld [vmem:[%s41 + $0x20] sm:$0xff]
        %v1752 = vld [vmem:[%s41 + $0x28] sm:$0xff]
        %v1753 = vld [vmem:[%s41 + $0x30] sm:$0x3]
        %v1755 = vsel %vm1075, %v1395, 0
        %v1758 = vsel %vm1075, %v1396, 0
        %v1761 = vsel %vm1139, %v1753, 0
        %1763 = vmatpush.msra.mxu0 0.0
        %1764 = vmatpush.msra.mxu0 0.0
        %1765 = vmatpush.msra.mxu0 0.0
        %1766 = vmatpush.msra.mxu0 0.0
        %1767 = vmatpush.msra.mxu0 0.0
        %1768 = vmatpush.msra.mxu0 0.0
        %1769 = vmatpush.msra.mxu0 0.0
        %1770 = vmatpush.msra.mxu0 0.0
        %1771 = vmatpush.msra.mxu0 0.0
        %1772 = vmatpush.msra.mxu0 %v1761
        %1773 = vmatpush.msra.mxu0 %v1752
        %1774 = vmatpush.msra.mxu0 %v1751
        %1775 = vmatpush.msra.mxu0 %v1750
        %1776 = vmatpush.msra.mxu0 %v1749
        %1777 = vmatpush.msra.mxu0 %v1748
        %1778 = vmatpush.msra.mxu0 %v1747
        %1779 = vmatmul.f32.gmra.mxu0 %v1755
        %v1780 = vpop.f32.mrf.mxu0
        %v1781 = vadd.f32 0.0, %v1780
        %1782 = vmatmul.f32.gmra.mxu0 %v1758
        %v1783 = vpop.f32.mrf.mxu0
        %v1784 = vadd.f32 0.0, %v1783
        %1785 = vdwg.mxu0
        %v1787 = vsel %vm1166, %v1741, 0
        %v1790 = vsel %vm1166, %v1742, 0
        %1792 = vmatpush.msra.mxu0 0.0
        %1793 = vmatpush.msra.mxu0 0.0
        %1794 = vmatpush.msra.mxu0 0.0
        %1795 = vmatpush.msra.mxu0 0.0
        %1796 = vmatpush.msra.mxu0 0.0
        %1797 = vmatpush.msra.mxu0 0.0
        %1798 = vmatpush.msra.mxu0 0.0
        %1799 = vmatpush.msra.mxu0 0.0
        %1800 = vmatpush.msra.mxu0 0.0
        %1801 = vmatpush.msra.mxu0 0.0
        %1802 = vmatpush.msra.mxu0 0.0
        %1803 = vmatpush.msra.mxu0 0.0
        %1804 = vmatpush.msra.mxu0 %v1746
        %1805 = vmatpush.msra.mxu0 %v1745
        %1806 = vmatpush.msra.mxu0 %v1744
        %1807 = vmatpush.msra.mxu0 %v1743
        %1808 = vmatmul.f32.gmra.mxu0 %v1787
        %v1809 = vpop.f32.mrf.mxu0
        %v1810 = vadd.f32 %v1781, %v1809
        %1811 = vmatmul.f32.gmra.mxu0 %v1790
        %v1812 = vpop.f32.mrf.mxu0
        %v1813 = vadd.f32 %v1784, %v1812
        %1814 = vdwg.mxu0
        %v1815 = vld [vmem:[%s15] sm:$0xff]
        %v1816 = vld [vmem:[%s15 + $0x8] sm:$0xff]
        %v1817 = vld [vmem:[%s43] sm:$0x1]
        %v1819 = vperm.slane %v1817, 0
        %v1822 = vsel %vm1242, %v1815, 0
        %v1825 = vsel %vm1242, %v1816, 0
        %1827 = vmatpush.msra.mxu0 0.0
        %1828 = vmatpush.msra.mxu0 0.0
        %1829 = vmatpush.msra.mxu0 0.0
        %1830 = vmatpush.msra.mxu0 0.0
        %1831 = vmatpush.msra.mxu0 0.0
        %1832 = vmatpush.msra.mxu0 0.0
        %1833 = vmatpush.msra.mxu0 0.0
        %1834 = vmatpush.msra.mxu0 0.0
        %1835 = vmatpush.msra.mxu0 0.0
        %1836 = vmatpush.msra.mxu0 0.0
        %1837 = vmatpush.msra.mxu0 0.0
        %1838 = vmatpush.msra.mxu0 0.0
        %1839 = vmatpush.msra.mxu0 0.0
        %1840 = vmatpush.msra.mxu0 0.0
        %1841 = vmatpush.msra.mxu0 %v1813
        %1842 = vmatpush.msra.mxu0 %v1810
        %1843 = vmatmul.f32.gmra.mxu0 %v1822
        %v1844 = vpop.f32.mrf.mxu0
        %v1845 = vadd.f32 %v1819, %v1844
        %1846 = vmatmul.f32.gmra.mxu0 %v1825
        %v1847 = vpop.f32.mrf.mxu0
        %v1848 = vadd.f32 %v1819, %v1847
        %1849 = vdwg.mxu0
        %vm1850 = vcmp.gt.f32.partialorder %v1845, 0.0
        %vm1851 = vcmp.gt.f32.partialorder %v1848, 0.0
        %v1852 = vmul.f32 %v1845, 0.2
        %v1853 = vmul.f32 %v1848, 0.2
        %v1854 = vsel %vm1850, %v1845, %v1852
        %v1855 = vsel %vm1851, %v1848, %v1853
        %v1856 = vld [vmem:[%s45] sm:$0xff]
        %v1857 = vld [vmem:[%s45 + $0x8] sm:$0xff]
        %v1858 = vld [vmem:[%s45 + $0x10] sm:$0xff]
        %v1859 = vld [vmem:[%s45 + $0x18] sm:$0xff]
        %v1860 = vld [vmem:[%s45 + $0x20] sm:$0xff]
        %v1861 = vld [vmem:[%s45 + $0x28] sm:$0xff]
        %v1862 = vld [vmem:[%s45 + $0x30] sm:$0xff]
        %v1863 = vld [vmem:[%s45 + $0x38] sm:$0xff]
        %v1864 = vld [vmem:[%s47] sm:$0xff]
        %v1865 = vld [vmem:[%s47 + $0x8] sm:$0xff]
        %v1866 = vld [vmem:[%s47 + $0x10] sm:$0xff]
        %v1867 = vld [vmem:[%s47 + $0x18] sm:$0xff]
        %v1868 = vld [vmem:[%s47 + $0x20] sm:$0xff]
        %v1869 = vld [vmem:[%s47 + $0x28] sm:$0xff]
        %v1870 = vld [vmem:[%s47 + $0x30] sm:$0xff]
        %v1871 = vld [vmem:[%s47 + $0x38] sm:$0xff]
        %v1872 = vld [vmem:[%s47 + $0x40] sm:$0xff]
        %v1873 = vld [vmem:[%s47 + $0x48] sm:$0xff]
        %v1874 = vld [vmem:[%s47 + $0x50] sm:$0xff]
        %v1875 = vld [vmem:[%s47 + $0x58] sm:$0xff]
        %v1876 = vld [vmem:[%s47 + $0x60] sm:$0x3]
        %v1877 = vld [vmem:[%s47 + $0x68] sm:$0x3]
        %v1879 = vsel %vm1139, %v1876, 0
        %v1882 = vsel %vm1139, %v1877, 0
        %1884 = vmatpush.msra.mxu0 0.0
        %1885 = vmatpush.msra.mxu0 0.0
        %1886 = vmatpush.msra.mxu0 0.0
        %1887 = vmatpush.msra.mxu0 0.0
        %1888 = vmatpush.msra.mxu0 0.0
        %1889 = vmatpush.msra.mxu0 0.0
        %1890 = vmatpush.msra.mxu0 0.0
        %1891 = vmatpush.msra.mxu0 0.0
        %1892 = vmatpush.msra.mxu0 0.0
        %1893 = vmatpush.msra.mxu0 %v1879
        %1894 = vmatpush.msra.mxu0 %v1874
        %1895 = vmatpush.msra.mxu0 %v1872
        %1896 = vmatpush.msra.mxu0 %v1870
        %1897 = vmatpush.msra.mxu0 %v1868
        %1898 = vmatpush.msra.mxu0 %v1866
        %1899 = vmatpush.msra.mxu0 %v1864
        %1900 = vmatmul.f32.gmra.mxu0 %v1755
        %v1901 = vpop.f32.mrf.mxu0
        %v1902 = vadd.f32 0.0, %v1901
        %1903 = vmatmul.f32.gmra.mxu0 %v1758
        %v1904 = vpop.f32.mrf.mxu0
        %v1905 = vadd.f32 0.0, %v1904
        %1906 = vdwg.mxu0
        %1907 = vmatpush.msra.mxu0 0.0
        %1908 = vmatpush.msra.mxu0 0.0
        %1909 = vmatpush.msra.mxu0 0.0
        %1910 = vmatpush.msra.mxu0 0.0
        %1911 = vmatpush.msra.mxu0 0.0
        %1912 = vmatpush.msra.mxu0 0.0
        %1913 = vmatpush.msra.mxu0 0.0
        %1914 = vmatpush.msra.mxu0 0.0
        %1915 = vmatpush.msra.mxu0 0.0
        %1916 = vmatpush.msra.mxu0 %v1882
        %1917 = vmatpush.msra.mxu0 %v1875
        %1918 = vmatpush.msra.mxu0 %v1873
        %1919 = vmatpush.msra.mxu0 %v1871
        %1920 = vmatpush.msra.mxu0 %v1869
        %1921 = vmatpush.msra.mxu0 %v1867
        %1922 = vmatpush.msra.mxu0 %v1865
        %1923 = vmatmul.f32.gmra.mxu0 %v1755
        %v1924 = vpop.f32.mrf.mxu0
        %v1925 = vadd.f32 0.0, %v1924
        %1926 = vmatmul.f32.gmra.mxu0 %v1758
        %v1927 = vpop.f32.mrf.mxu0
        %v1928 = vadd.f32 0.0, %v1927
        %1929 = vdwg.mxu0
        %1930 = vmatpush.msra.mxu0 0.0
        %1931 = vmatpush.msra.mxu0 0.0
        %1932 = vmatpush.msra.mxu0 0.0
        %1933 = vmatpush.msra.mxu0 0.0
        %1934 = vmatpush.msra.mxu0 0.0
        %1935 = vmatpush.msra.mxu0 0.0
        %1936 = vmatpush.msra.mxu0 0.0
        %1937 = vmatpush.msra.mxu0 0.0
        %1938 = vmatpush.msra.mxu0 0.0
        %1939 = vmatpush.msra.mxu0 0.0
        %1940 = vmatpush.msra.mxu0 0.0
        %1941 = vmatpush.msra.mxu0 0.0
        %1942 = vmatpush.msra.mxu0 %v1862
        %1943 = vmatpush.msra.mxu0 %v1860
        %1944 = vmatpush.msra.mxu0 %v1858
        %1945 = vmatpush.msra.mxu0 %v1856
        %1946 = vmatmul.f32.gmra.mxu0 %v1787
        %v1947 = vpop.f32.mrf.mxu0
        %v1948 = vadd.f32 %v1902, %v1947
        %1949 = vmatmul.f32.gmra.mxu0 %v1790
        %v1950 = vpop.f32.mrf.mxu0
        %v1951 = vadd.f32 %v1905, %v1950
        %1952 = vdwg.mxu0
        %1953 = vmatpush.msra.mxu0 0.0
        %1954 = vmatpush.msra.mxu0 0.0
        %1955 = vmatpush.msra.mxu0 0.0
        %1956 = vmatpush.msra.mxu0 0.0
        %1957 = vmatpush.msra.mxu0 0.0
        %1958 = vmatpush.msra.mxu0 0.0
        %1959 = vmatpush.msra.mxu0 0.0
        %1960 = vmatpush.msra.mxu0 0.0
        %1961 = vmatpush.msra.mxu0 0.0
        %1962 = vmatpush.msra.mxu0 0.0
        %1963 = vmatpush.msra.mxu0 0.0
        %1964 = vmatpush.msra.mxu0 0.0
        %1965 = vmatpush.msra.mxu0 %v1863
        %1966 = vmatpush.msra.mxu0 %v1861
        %1967 = vmatpush.msra.mxu0 %v1859
        %1968 = vmatpush.msra.mxu0 %v1857
        %1969 = vmatmul.f32.gmra.mxu0 %v1787
        %v1970 = vpop.f32.mrf.mxu0
        %v1971 = vadd.f32 %v1925, %v1970
        %1972 = vmatmul.f32.gmra.mxu0 %v1790
        %v1973 = vpop.f32.mrf.mxu0
        %v1974 = vadd.f32 %v1928, %v1973
        %1975 = vdwg.mxu0
        %v1976 = vld [vmem:[%s49] sm:$0xff]
        %v1977 = vld [vmem:[%s49 + $0x8] sm:$0xff]
        %v1978 = vld [vmem:[%s49 + $0x10] sm:$0xff]
        %v1979 = vld [vmem:[%s49 + $0x18] sm:$0xff]
        %v1980 = vld [vmem:[%s49 + $0x20] sm:$0xff]
        %v1981 = vld [vmem:[%s49 + $0x28] sm:$0xff]
        %v1982 = vld [vmem:[%s49 + $0x30] sm:$0xff]
        %v1983 = vld [vmem:[%s49 + $0x38] sm:$0xff]
        %v1985 = vsel %vm1166, %v1854, 0
        %v1988 = vsel %vm1166, %v1855, 0
        %1990 = vmatpush.msra.mxu0 0.0
        %1991 = vmatpush.msra.mxu0 0.0
        %1992 = vmatpush.msra.mxu0 0.0
        %1993 = vmatpush.msra.mxu0 0.0
        %1994 = vmatpush.msra.mxu0 0.0
        %1995 = vmatpush.msra.mxu0 0.0
        %1996 = vmatpush.msra.mxu0 0.0
        %1997 = vmatpush.msra.mxu0 0.0
        %1998 = vmatpush.msra.mxu0 0.0
        %1999 = vmatpush.msra.mxu0 0.0
        %2000 = vmatpush.msra.mxu0 0.0
        %2001 = vmatpush.msra.mxu0 0.0
        %2002 = vmatpush.msra.mxu0 %v1982
        %2003 = vmatpush.msra.mxu0 %v1980
        %2004 = vmatpush.msra.mxu0 %v1978
        %2005 = vmatpush.msra.mxu0 %v1976
        %2006 = vmatmul.f32.gmra.mxu0 %v1985
        %v2007 = vpop.f32.mrf.mxu0
        %v2008 = vadd.f32 0.0, %v2007
        %2009 = vmatmul.f32.gmra.mxu0 %v1988
        %v2010 = vpop.f32.mrf.mxu0
        %v2011 = vadd.f32 0.0, %v2010
        %2012 = vdwg.mxu0
        %2013 = vmatpush.msra.mxu0 0.0
        %2014 = vmatpush.msra.mxu0 0.0
        %2015 = vmatpush.msra.mxu0 0.0
        %2016 = vmatpush.msra.mxu0 0.0
        %2017 = vmatpush.msra.mxu0 0.0
        %2018 = vmatpush.msra.mxu0 0.0
        %2019 = vmatpush.msra.mxu0 0.0
        %2020 = vmatpush.msra.mxu0 0.0
        %2021 = vmatpush.msra.mxu0 0.0
        %2022 = vmatpush.msra.mxu0 0.0
        %2023 = vmatpush.msra.mxu0 0.0
        %2024 = vmatpush.msra.mxu0 0.0
        %2025 = vmatpush.msra.mxu0 %v1983
        %2026 = vmatpush.msra.mxu0 %v1981
        %2027 = vmatpush.msra.mxu0 %v1979
        %2028 = vmatpush.msra.mxu0 %v1977
        %2029 = vmatmul.f32.gmra.mxu0 %v1985
        %v2030 = vpop.f32.mrf.mxu0
        %v2031 = vadd.f32 0.0, %v2030
        %2032 = vmatmul.f32.gmra.mxu0 %v1988
        %v2033 = vpop.f32.mrf.mxu0
        %v2034 = vadd.f32 0.0, %v2033
        %2035 = vdwg.mxu0
        %v2036 = vadd.f32 %v1948, %v2008
        %v2037 = vadd.f32 %v1971, %v2031
        %v2038 = vadd.f32 %v1951, %v2011
        %v2039 = vadd.f32 %v1974, %v2034
        %v2040 = vld [vmem:[%s51] sm:$0xff]
        %v2041 = vld [vmem:[%s51 + $0x8] sm:$0xff]
        %v2042 = vld [vmem:[%s51 + $0x10] sm:$0xff]
        %v2043 = vld [vmem:[%s51 + $0x18] sm:$0xff]
        %v2044 = vld [vmem:[%s51 + $0x20] sm:$0xf]
        %v2045 = vld [vmem:[%s51 + $0x28] sm:$0xf]
        %vm2046 = vcmask 162816
        %v2048 = vsel %vm2046, %v1027, 0
        %v2051 = vsel %vm2046, %v1028, 0
        %vm2053 = vcmask 1043456
        %v2055 = vsel %vm2053, %v2044, 0
        %v2058 = vsel %vm2053, %v2045, 0
        %2060 = vmatpush.msra.mxu0 0.0
        %2061 = vmatpush.msra.mxu0 0.0
        %2062 = vmatpush.msra.mxu0 0.0
        %2063 = vmatpush.msra.mxu0 0.0
        %2064 = vmatpush.msra.mxu0 0.0
        %2065 = vmatpush.msra.mxu0 0.0
        %2066 = vmatpush.msra.mxu0 0.0
        %2067 = vmatpush.msra.mxu0 0.0
        %2068 = vmatpush.msra.mxu0 0.0
        %2069 = vmatpush.msra.mxu0 0.0
        %2070 = vmatpush.msra.mxu0 0.0
        %2071 = vmatpush.msra.mxu0 0.0
        %2072 = vmatpush.msra.mxu0 0.0
        %2073 = vmatpush.msra.mxu0 %v2055
        %2074 = vmatpush.msra.mxu0 %v2042
        %2075 = vmatpush.msra.mxu0 %v2040
        %2076 = vmatmul.f32.gmra.mxu0 %v2048
        %v2077 = vpop.f32.mrf.mxu0
        %v2078 = vadd.f32 0.0, %v2077
        %2079 = vmatmul.f32.gmra.mxu0 %v2051
        %v2080 = vpop.f32.mrf.mxu0
        %v2081 = vadd.f32 0.0, %v2080
        %2082 = vdwg.mxu0
        %2083 = vmatpush.msra.mxu0 0.0
        %2084 = vmatpush.msra.mxu0 0.0
        %2085 = vmatpush.msra.mxu0 0.0
        %2086 = vmatpush.msra.mxu0 0.0
        %2087 = vmatpush.msra.mxu0 0.0
        %2088 = vmatpush.msra.mxu0 0.0
        %2089 = vmatpush.msra.mxu0 0.0
        %2090 = vmatpush.msra.mxu0 0.0
        %2091 = vmatpush.msra.mxu0 0.0
        %2092 = vmatpush.msra.mxu0 0.0
        %2093 = vmatpush.msra.mxu0 0.0
        %2094 = vmatpush.msra.mxu0 0.0
        %2095 = vmatpush.msra.mxu0 0.0
        %2096 = vmatpush.msra.mxu0 %v2058
        %2097 = vmatpush.msra.mxu0 %v2043
        %2098 = vmatpush.msra.mxu0 %v2041
        %2099 = vmatmul.f32.gmra.mxu0 %v2048
        %v2100 = vpop.f32.mrf.mxu0
        %v2101 = vadd.f32 0.0, %v2100
        %2102 = vmatmul.f32.gmra.mxu0 %v2051
        %v2103 = vpop.f32.mrf.mxu0
        %v2104 = vadd.f32 0.0, %v2103
        %2105 = vdwg.mxu0
        %v2106 = vadd.f32 %v2036, %v2078
        %v2107 = vadd.f32 %v2037, %v2101
        %v2108 = vadd.f32 %v2038, %v2081
        %v2109 = vadd.f32 %v2039, %v2104
        %v2110 = vld [vmem:[%s55] sm:$0x3]
        %v2112 = vperm.slane %v2110, 0
        %v2113 = vperm.slane %v2110, 1
        %v2116 = vadd.f32 %v2106, %v2112
        %v2117 = vadd.f32 %v2107, %v2113
        %v2118 = vadd.f32 %v2108, %v2112
        %v2119 = vadd.f32 %v2109, %v2113
        %v2120 = vld [vmem:[%s53] sm:$0xff]
        %v2121 = vld [vmem:[%s53 + $0x8] sm:$0xff]
        %v2122 = vld [vmem:[%s53 + $0x10] sm:$0xff]
        %v2123 = vld [vmem:[%s53 + $0x18] sm:$0xff]
        %v2124 = vld [vmem:[%s53 + $0x20] sm:$0xff]
        %v2125 = vld [vmem:[%s53 + $0x28] sm:$0xff]
        %v2126 = vld [vmem:[%s53 + $0x30] sm:$0xff]
        %v2127 = vld [vmem:[%s53 + $0x38] sm:$0xff]
        %v2128 = vld [vmem:[%s53 + $0x40] sm:$0xff]
        %v2129 = vld [vmem:[%s53 + $0x48] sm:$0xff]
        %v2130 = vld [vmem:[%s53 + $0x50] sm:$0xff]
        %v2131 = vld [vmem:[%s53 + $0x58] sm:$0xff]
        %v2132 = vld [vmem:[%s53 + $0x60] sm:$0xff]
        %v2133 = vld [vmem:[%s53 + $0x68] sm:$0xff]
        %v2134 = vld [vmem:[%s53 + $0x70] sm:$0xff]
        %v2135 = vld [vmem:[%s53 + $0x78] sm:$0xff]
        %v2136 = vld [vmem:[%s57] sm:$0x3]
        %v2138 = vperm.slane %v2136, 0
        %v2139 = vperm.slane %v2136, 1
        %2142 = vmatpush.msra.mxu0 0.0
        %2143 = vmatpush.msra.mxu0 0.0
        %2144 = vmatpush.msra.mxu0 0.0
        %2145 = vmatpush.msra.mxu0 0.0
        %2146 = vmatpush.msra.mxu0 0.0
        %2147 = vmatpush.msra.mxu0 0.0
        %2148 = vmatpush.msra.mxu0 0.0
        %2149 = vmatpush.msra.mxu0 0.0
        %2150 = vmatpush.msra.mxu0 %v2134
        %2151 = vmatpush.msra.mxu0 %v2132
        %2152 = vmatpush.msra.mxu0 %v2130
        %2153 = vmatpush.msra.mxu0 %v2128
        %2154 = vmatpush.msra.mxu0 %v2126
        %2155 = vmatpush.msra.mxu0 %v2124
        %2156 = vmatpush.msra.mxu0 %v2122
        %2157 = vmatpush.msra.mxu0 %v2120
        %2158 = vmatmul.f32.gmra.mxu0 %v1047
        %v2159 = vpop.f32.mrf.mxu0
        %v2160 = vadd.f32 %v2138, %v2159
        %2161 = vmatmul.f32.gmra.mxu0 %v1050
        %v2162 = vpop.f32.mrf.mxu0
        %v2163 = vadd.f32 %v2138, %v2162
        %2164 = vdwg.mxu0
        %2165 = vmatpush.msra.mxu0 0.0
        %2166 = vmatpush.msra.mxu0 0.0
        %2167 = vmatpush.msra.mxu0 0.0
        %2168 = vmatpush.msra.mxu0 0.0
        %2169 = vmatpush.msra.mxu0 0.0
        %2170 = vmatpush.msra.mxu0 0.0
        %2171 = vmatpush.msra.mxu0 0.0
        %2172 = vmatpush.msra.mxu0 0.0
        %2173 = vmatpush.msra.mxu0 %v2135
        %2174 = vmatpush.msra.mxu0 %v2133
        %2175 = vmatpush.msra.mxu0 %v2131
        %2176 = vmatpush.msra.mxu0 %v2129
        %2177 = vmatpush.msra.mxu0 %v2127
        %2178 = vmatpush.msra.mxu0 %v2125
        %2179 = vmatpush.msra.mxu0 %v2123
        %2180 = vmatpush.msra.mxu0 %v2121
        %2181 = vmatmul.f32.gmra.mxu0 %v1047
        %v2182 = vpop.f32.mrf.mxu0
        %v2183 = vadd.f32 %v2139, %v2182
        %2184 = vmatmul.f32.gmra.mxu0 %v1050
        %v2185 = vpop.f32.mrf.mxu0
        %v2186 = vadd.f32 %v2139, %v2185
        %2187 = vdwg.mxu0
        %v2188 = vadd.f32 %v2116, %v2160
        %v2189 = vadd.f32 %v2118, %v2163
        %v2190 = vxor.u32 %v2188, 2147483648
        %v2191 = vxor.u32 %v2189, 2147483648
        %v2192 = vmul.f32 %v2190, 1.442695
        %v2193 = vpow.pop %v2192
        %v2194 = vmul.f32 %v2191, 1.442695
        %v2195 = vpow.pop %v2194
        %v2196 = vadd.f32 %v2193, 1.0
        %v2197 = vadd.f32 %v2195, 1.0
        %v2198 = vrcp.pop %v2196
        %v2199 = vmul.f32 %v2196, %v2198
        %v2200 = vsub.f32 1.0, %v2199
        %v2201 = vmul.f32 %v2198, %v2200
        %v2202 = vadd.f32 %v2198, %v2201
        %vm2203 = vweird.f32 %v2196
        %vm2204 = vweird.f32 %v2198
        %vm2205 = vmor %vm2203, %vm2204
        %v2206 = vsel %vm2205, %v2198, %v2202
        %v2207 = vand.u32 2147483647, %v2196
        %vm2208 = vcmp.eq.f32.partialorder %v2207, 8.507059e+37
        %v2209 = vand.u32 %v2196, 2147483648
        %v2210 = vor.u32 1.1754944e-38, %v2209
        %v2211 = vsel %vm2208, %v2210, %v2206
        %v2212 = vmul.f32 1.0, %v2211
        %v2213 = vrcp.pop %v2197
        %v2214 = vmul.f32 %v2197, %v2213
        %v2215 = vsub.f32 1.0, %v2214
        %v2216 = vmul.f32 %v2213, %v2215
        %v2217 = vadd.f32 %v2213, %v2216
        %vm2218 = vweird.f32 %v2197
        %vm2219 = vweird.f32 %v2213
        %vm2220 = vmor %vm2218, %vm2219
        %v2221 = vsel %vm2220, %v2213, %v2217
        %v2222 = vand.u32 2147483647, %v2197
        %vm2223 = vcmp.eq.f32.partialorder %v2222, 8.507059e+37
        %v2224 = vand.u32 %v2197, 2147483648
        %v2225 = vor.u32 1.1754944e-38, %v2224
        %v2226 = vsel %vm2223, %v2225, %v2221
        %v2227 = vmul.f32 1.0, %v2226
        %v2228 = vmul.f32 %v2212, %v2183
        %v2229 = vmul.f32 %v2227, %v2186
        %v2230 = vadd.f32 %v2117, %v2228
        %v2231 = vadd.f32 %v2119, %v2229
        %v2232 = vtanh.pop %v2230
        %v2233 = vtanh.pop %v2231
        %v2234 = vsub.f32 1.0, %v2212
        %v2235 = vsub.f32 1.0, %v2227
        %2238 = vrot.lane.b32.xlu0 %v2232, 64
        %v2239 = vpop.permute.xlu0 %2238
        %2240 = vrot.lane.b32.xlu0 %v2233, 64
        %v2241 = vpop.permute.xlu0 %2240
        %v2244 = vmul.f32 %v2234, %v2239
        %v2245 = vmul.f32 %v2235, %v2241
        %2246 = vrot.lane.b32.xlu0 %v1021, 64
        %v2247 = vpop.permute.xlu0 %2246
        %2248 = vrot.lane.b32.xlu0 %v1022, 64
        %v2249 = vpop.permute.xlu0 %2248
        %v2252 = vmul.f32 %v2212, %v2247
        %v2253 = vmul.f32 %v2227, %v2249
        %v2254 = vadd.f32 %v2244, %v2252
        %v2255 = vadd.f32 %v2245, %v2253
        %2258 = vrot.lane.b32.xlu0 %v2254, 64
        %v2259 = vpop.permute.xlu0 %2258
        %2260 = vrot.lane.b32.xlu0 %v2255, 64
        %v2261 = vpop.permute.xlu0 %2260
        %2264 = vst.msk [vmem:[#allocation2] sm:$0xff] %vm1045, %v2259
        %2265 = vst.msk [vmem:[#allocation2 + $0x8] sm:$0xff] %vm1045, %v2261
        // Predicated region
        $region149: #{share_forward.1} parent=143 // pred_check
          %p2266 = pneg %p1011
        $region150: #{share_forward.1} parent=143 // pred_check_branch
          %2268 = sbr.rel (%p2266) target = $region152
        $region151: #{share_forward.1} parent=143 // pred_region
          %v2269 = vld [vmem:[%s59] sm:$0xff]
          %v2270 = vld [vmem:[%s59 + $0x8] sm:$0xff]
          %v2271 = vld [vmem:[%s59 + $0x10] sm:$0xff]
          %v2272 = vld [vmem:[%s59 + $0x18] sm:$0xff]
          %v2273 = vld [vmem:[%s59 + $0x20] sm:$0xff]
          %v2274 = vld [vmem:[%s59 + $0x28] sm:$0xff]
          %v2275 = vld [vmem:[%s59 + $0x30] sm:$0xff]
          %v2276 = vld [vmem:[%s59 + $0x38] sm:$0xff]
          %v2277 = vld [vmem:[%s61] sm:$0x1]
          %v2279 = vperm.slane %v2277, 0
          %v2281 = vsel %vm1045, %v2259, 0
          %v2283 = vsel %vm1045, %v2261, 0
          %2285 = vmatpush.msra.mxu0 0.0
          %2286 = vmatpush.msra.mxu0 0.0
          %2287 = vmatpush.msra.mxu0 0.0
          %2288 = vmatpush.msra.mxu0 0.0
          %2289 = vmatpush.msra.mxu0 0.0
          %2290 = vmatpush.msra.mxu0 0.0
          %2291 = vmatpush.msra.mxu0 0.0
          %2292 = vmatpush.msra.mxu0 0.0
          %2293 = vmatpush.msra.mxu0 %v2276
          %2294 = vmatpush.msra.mxu0 %v2275
          %2295 = vmatpush.msra.mxu0 %v2274
          %2296 = vmatpush.msra.mxu0 %v2273
          %2297 = vmatpush.msra.mxu0 %v2272
          %2298 = vmatpush.msra.mxu0 %v2271
          %2299 = vmatpush.msra.mxu0 %v2270
          %2300 = vmatpush.msra.mxu0 %v2269
          %2301 = vmatmul.f32.gmra.mxu0 %v2281
          %v2302 = vpop.f32.mrf.mxu0
          %v2303 = vadd.f32 %v2279, %v2302
          %2304 = vmatmul.f32.gmra.mxu0 %v2283
          %v2305 = vpop.f32.mrf.mxu0
          %v2306 = vadd.f32 %v2279, %v2305
          %2307 = vdwg.mxu0
          %v2308 = vxor.u32 %v2303, 2147483648
          %v2309 = vxor.u32 %v2306, 2147483648
          %v2310 = vmul.f32 %v2308, 1.442695
          %v2311 = vpow.pop %v2310
          %v2312 = vmul.f32 %v2309, 1.442695
          %v2313 = vpow.pop %v2312
          %v2314 = vadd.f32 %v2311, 1.0
          %v2315 = vadd.f32 %v2313, 1.0
          %v2316 = vrcp.pop %v2314
          %v2317 = vmul.f32 %v2314, %v2316
          %v2318 = vsub.f32 1.0, %v2317
          %v2319 = vmul.f32 %v2316, %v2318
          %v2320 = vadd.f32 %v2316, %v2319
          %vm2321 = vweird.f32 %v2314
          %vm2322 = vweird.f32 %v2316
          %vm2323 = vmor %vm2321, %vm2322
          %v2324 = vsel %vm2323, %v2316, %v2320
          %v2325 = vand.u32 2147483647, %v2314
          %vm2326 = vcmp.eq.f32.partialorder %v2325, 8.507059e+37
          %v2327 = vand.u32 %v2314, 2147483648
          %v2328 = vor.u32 1.1754944e-38, %v2327
          %v2329 = vsel %vm2326, %v2328, %v2324
          %v2330 = vmul.f32 1.0, %v2329
          %v2331 = vrcp.pop %v2315
          %v2332 = vmul.f32 %v2315, %v2331
          %v2333 = vsub.f32 1.0, %v2332
          %v2334 = vmul.f32 %v2331, %v2333
          %v2335 = vadd.f32 %v2331, %v2334
          %vm2336 = vweird.f32 %v2315
          %vm2337 = vweird.f32 %v2331
          %vm2338 = vmor %vm2336, %vm2337
          %v2339 = vsel %vm2338, %v2331, %v2335
          %v2340 = vand.u32 2147483647, %v2315
          %vm2341 = vcmp.eq.f32.partialorder %v2340, 8.507059e+37
          %v2342 = vand.u32 %v2315, 2147483648
          %v2343 = vor.u32 1.1754944e-38, %v2342
          %v2344 = vsel %vm2341, %v2343, %v2339
          %v2345 = vmul.f32 1.0, %v2344
          %2346 = vst [vmem:[%s63] sm:$0xff] %v2330
          %2347 = vst [vmem:[%s63 + $0x8] sm:$0xff] %v2345
          %v2348 = vlog2.pop %v1108
          %v2349 = vmul.f32 %v2348, 0.6931472
          %v2350 = vlog2.pop %v1123
          %v2351 = vmul.f32 %v2350, 0.6931472
          %v2352 = vmax.f32 %v2349, -100.0
          %v2353 = vmax.f32 %v2351, -100.0
          %v2354 = vsub.f32 1.0, %v1108
          %v2355 = vsub.f32 1.0, %v1123
          %v2356 = vlog2.pop %v2354
          %v2357 = vmul.f32 %v2356, 0.6931472
          %v2358 = vlog2.pop %v2355
          %v2359 = vmul.f32 %v2358, 0.6931472
          %v2360 = vmax.f32 %v2357, -100.0
          %v2361 = vmax.f32 %v2359, -100.0
          %v2362 = vmul.f32 %v1025, %v2352
          %v2363 = vmul.f32 %v1026, %v2353
          %v2364 = vsub.f32 1.0, %v1025
          %v2365 = vsub.f32 1.0, %v1026
          %v2366 = vmul.f32 %v2364, %v2360
          %v2367 = vmul.f32 %v2365, %v2361
          %v2368 = vadd.f32 %v2362, %v2366
          %v2369 = vadd.f32 %v2363, %v2367
          %v2370 = vsub.f32 0.0, %v2368
          %v2371 = vsub.f32 0.0, %v2369
          %v2372 = vsel %vm1393, %v2370, 0.0
          %v2373 = vsel %vm1394, %v2371, 0.0
          %v2374 = vsel %vm1075, %v2372, 0.0
          %v2375 = vsel %vm1075, %v2373, 0.0
          %v2376 = vadd.f32 %v2374, %v2375
          %2377 = vadd.xlane.f32.xlu0 %v2376
          %v2378 = vpop.xlane.xlu0 %2377
          %v2379 = vrot.slane %v2378, 4
          %v2380 = vadd.f32 %v2378, %v2379
          %v2381 = vrot.slane %v2380, 2
          %v2382 = vadd.f32 %v2380, %v2381
          %v2383 = vrot.slane %v2382, 1
          %v2384 = vadd.f32 %v2382, %v2383
          %s2385 = vtos %v2384
          %v2386 = vrcp.pop 400.0
          %v2387 = vmul.f32 400.0, %v2386
          %v2388 = vsub.f32 1.0, %v2387
          %v2389 = vmul.f32 %v2386, %v2388
          %v2390 = vadd.f32 %v2386, %v2389
          %vm2391 = vweird.f32 %v2386
          %v2392 = vsel %vm2391, %v2386, %v2390
          %s2393 = vtos %v2392
          %s2394 = smul.f32 %s2385, %s2393
          %v2395 = vlog2.pop %v1321
          %v2396 = vmul.f32 %v2395, 0.6931472
          %v2397 = vlog2.pop %v1322
          %v2398 = vmul.f32 %v2397, 0.6931472
          %v2399 = vmax.f32 %v2396, -100.0
          %v2400 = vmax.f32 %v2398, -100.0
          %v2401 = vsub.f32 1.0, %v1321
          %v2402 = vsub.f32 1.0, %v1322
          %v2403 = vlog2.pop %v2401
          %v2404 = vmul.f32 %v2403, 0.6931472
          %v2405 = vlog2.pop %v2402
          %v2406 = vmul.f32 %v2405, 0.6931472
          %v2407 = vmax.f32 %v2404, -100.0
          %v2408 = vmax.f32 %v2406, -100.0
          %v2409 = vmul.f32 %v1025, %v2399
          %v2410 = vmul.f32 %v1026, %v2400
          %v2411 = vmul.f32 %v2364, %v2407
          %v2412 = vmul.f32 %v2365, %v2408
          %v2413 = vadd.f32 %v2409, %v2411
          %v2414 = vadd.f32 %v2410, %v2412
          %v2415 = vsub.f32 0.0, %v2413
          %v2416 = vsub.f32 0.0, %v2414
          %v2417 = vsel %vm1393, %v2415, 0.0
          %v2418 = vsel %vm1394, %v2416, 0.0
          %v2419 = vsel %vm1075, %v2417, 0.0
          %v2420 = vsel %vm1075, %v2418, 0.0
          %v2421 = vadd.f32 %v2419, %v2420
          %2422 = vadd.xlane.f32.xlu0 %v2421
          %v2423 = vpop.xlane.xlu0 %2422
          %v2424 = vrot.slane %v2423, 4
          %v2425 = vadd.f32 %v2423, %v2424
          %v2426 = vrot.slane %v2425, 2
          %v2427 = vadd.f32 %v2425, %v2426
          %v2428 = vrot.slane %v2427, 1
          %v2429 = vadd.f32 %v2427, %v2428
          %s2430 = vtos %v2429
          %v2431 = vrcp.pop 400.0
          %v2432 = vmul.f32 400.0, %v2431
          %v2433 = vsub.f32 1.0, %v2432
          %v2434 = vmul.f32 %v2431, %v2433
          %v2435 = vadd.f32 %v2431, %v2434
          %vm2436 = vweird.f32 %v2431
          %v2437 = vsel %vm2436, %v2431, %v2435
          %s2438 = vtos %v2437
          %s2439 = smul.f32 %s2430, %s2438
          %s2440 = sadd.f32 %s2394, %s2439
          %v2441 = vstv %s2440
          %2442 = vst [vmem:[#allocation3] sm:$0x1] %v2441
        $region152: #{share_forward.1} parent=143 // pred_fallthru
          _
        // Predicated region
        $region153: #{share_forward.1} parent=143 // pred_check
          %p2443 = pneg %p757
        $region154: #{share_forward.1} parent=143 // pred_check_branch
          %2445 = sbr.rel (%p2443) target = $region156
        $region155: #{share_forward.1} parent=143 // pred_region
          _
        $region156: #{share_forward.1} parent=143 // pred_fallthru
          _
        // Predicated region
        $region157: #{share_forward.1} parent=143 // pred_check
          %p2446 = pneg %p778
        $region158: #{share_forward.1} parent=143 // pred_check_branch
          %2448 = sbr.rel (%p2446) target = $region160
        $region159: #{share_forward.1} parent=143 // pred_region
          %2450 = vsyncadd [#allocation4], 0
          %s2452 = sshll.u32 [#allocation3], 4
          %s2453 = int_to_ptr.vmem [resolvable:$true] %s2452
          %s2454 = sshll.u32 %s65, 4
          %s2455 = int_to_ptr.hbm [resolvable:$true] %s2454
          %2457 = dma.vmem_to_hbm [thread:$0]  %s2453, 16, %s2455, [#allocation4]
        $region160: #{share_forward.1} parent=143 // pred_fallthru
          _
        // Predicated region
        $region161: #{share_forward.1} parent=143 // pred_check
          %p2458 = pneg %p757
        $region162: #{share_forward.1} parent=143 // pred_check_branch
          %2460 = sbr.rel (%p2458) target = $region164
        $region163: #{share_forward.1} parent=143 // pred_region
          _
        $region164: #{share_forward.1} parent=143 // pred_fallthru
          _
        // Predicated region
        $region165: #{share_forward.1} parent=143 // pred_check
          %p2461 = pneg %p778
        $region166: #{share_forward.1} parent=143 // pred_check_branch
          %2463 = sbr.rel (%p2461) target = $region168
        $region167: #{share_forward.1} parent=143 // pred_region
          %2465 = dma.done [#allocation4], 16
        $region168: #{share_forward.1} parent=143 // pred_fallthru
          _
      $region144: #{share_forward.1} parent=5 // pred_fallthru
        _
      %p2466 = scmp.le.s32.totalorder 2, %s73
      // Predicated region
      $region169: #{share_forward.1} parent=5 // pred_check
        %p2467 = pneg %p2466
      $region170: #{share_forward.1} parent=5 // pred_check_branch
        %2469 = sbr.rel (%p2467) target = $region172
      $region171: #{share_forward.1} parent=5 // pred_region
        %s2470 = ssub.s32 %s73, 2
      $region172: #{share_forward.1} parent=5 // pred_fallthru
        _
    $region6: #{share_forward.1} parent=1 // loop_footer
      %s77 = sadd.s32 1, %s73
    $region7: #{share_forward.1} parent=1 // loop_footer_branch
      %72 = sbr.rel target = $region3
    $region8: #{share_forward.1} parent=1 // loop_exit
      _
    %2471 = vsyncpa [#allocation4], 1
    %s2472 = scalar_lea.sflag [#allocation4], 1
    %2473 = vsyncpa %s2472, 1

</llo_original>
